<compile_context>
chip_gen: v6e
topology: v6e:2x2x1
jax: 0.10.0
libtpu: 0.0.40
codegen_flags: <defaults>
</compile_context>

<pallas_src>
from functools import partial

import jax
import jax.numpy as jnp
from jax.experimental import pallas as pl
from jax.experimental.pallas import tpu as pltpu


# ----------------------------------------------------------------------------- helpers
def _tpu_info():
    try:
        return pltpu.get_tpu_info()
    except Exception:
        return None


def _vmem_capacity_bytes():
    info = _tpu_info()
    if info is not None:
        for name in ("vmem_capacity_bytes", "vmem_bytes"):
            try:
                v = int(getattr(info, name))
            except (AttributeError, TypeError, ValueError):
                continue
            if v > 0:
                return v
    return 64 * 1024 * 1024           # conservative (v7x-sized) fallback


def _default_num_cores():
    info = _tpu_info()
    if info is not None:
        for name in ("num_cores", "tensorcore_count", "num_tensorcores", "cores_per_chip"):
            try:
                v = int(getattr(info, name))
            except (AttributeError, TypeError, ValueError):
                continue
            if v > 0:
                return min(v, 2)       # at most 2 TCs per chip (v7x)
    return 1                           # v5e / v6e: single TensorCore


# ----------------------------------------------------------------------------- kernel
def _graph_embed_kernel(hv_ref, wg_ref, bg_ref, ex_ref, wp_ref, bp_ref,
                        out_ref, s_acc, g_acc, *, num_rows, pack):
    """grid = (num_cores, chunks_per_core); hv_ref is a (TN, W) lane-packed node tile."""
    c = pl.program_id(0)                       # core split (parallel axis)
    i = pl.program_id(1)                       # reduction axis over node chunks
    cpc = pl.num_programs(1)
    chunk = c * cpc + i                        # logical (unclamped) chunk id
    tn = hv_ref.shape[0]

    @pl.when(i == 0)
    def _():
        s_acc[...] = jnp.zeros_like(s_acc)
        g_acc[...] = jnp.zeros_like(g_acc)

    hi = jax.lax.Precision.HIGHEST             # exact f32 matmuls (gate precision matters)

    def accumulate(hv, row_valid):
        # Gate logits for the `pack` nodes packed in each row: block-diagonal
        # (W, pack) matmul on the otherwise-idle MXU.
        logits = jnp.dot(hv, wg_ref[...], precision=hi,
                         preferred_element_type=jnp.float32) + bg_ref[...]
        gate = jax.nn.sigmoid(logits)                                   # (TN, pack)
        if row_valid is not None:
            gate = jnp.where(row_valid, gate, 0.0)
        if pack > 1:
            # Broadcast each node's gate over its H-lane segment (MXU, K=pack).
            ge = jnp.dot(gate, ex_ref[...], precision=hi,
                         preferred_element_type=jnp.float32)            # (TN, W)
        else:
            ge = gate                                                   # (TN, 1) broadcasts
        s_acc[...] += jnp.sum(ge * hv, axis=0, keepdims=True)           # (1, W)
        g_acc[...] += jnp.sum(gate, axis=0, keepdims=True)              # (1, pack)

    # Fast path for interior tiles: no iota / compare / select over the tile.
    clean = (chunk + 1) * tn <= num_rows

    @pl.when(clean)
    def _():
        accumulate(hv_ref[...], None)

    @pl.when(jnp.logical_not(clean))
    def _():
        # Partial last block or clamped duplicate block: mask BOTH the data
        # (stale VMEM tail rows may hold NaN/Inf) and the gate.
        row = chunk * tn + jax.lax.broadcasted_iota(jnp.int32, (tn, 1), 0)
        valid = row < num_rows
        accumulate(jnp.where(valid, hv_ref[...], 0.0), valid)

    @pl.when(i == cpc - 1)
    def _():
        # out = (sum_i g_i hv_i) @ Wp + (sum_i g_i) * bp     (linearity of Linear)
        gsum = jnp.sum(g_acc[...], axis=-1, keepdims=True)              # (1, 1)
        res = jnp.dot(s_acc[...], wp_ref[...], precision=hi,
                      preferred_element_type=jnp.float32) + gsum * bp_ref[...]
        out_ref[...] = res[None]                                        # (1, 1, G)


# ----------------------------------------------------------------------------- wrapper
def graph_embed(hv, w_gate, b_gate, w_proj, b_proj, *,
                tile_rows=None, num_cores=None, core_parallel=False):
    """hv: (N, H) f32. w_gate: (1, H), b_gate: (1, 1), w_proj: (H, 2H), b_proj: (1, 2H).

    Returns (1, 2H) f32, matching GraphEmbed.forward.
    """
    hv = hv.astype(jnp.float32)
    n, h = hv.shape
    g = w_proj.shape[1]
    if n == 0:
        # empty-graph branch of the PyTorch module (pure glue, no kernel needed)
        return jnp.zeros((1, g), jnp.float32)

    # Lane-pack `pack` consecutive nodes per 128-lane row when H divides 128.
    pack = 128 // h if (h < 128 and 128 % h == 0) else 1
    w = pack * h

    n_main = (n // pack) * pack          # nodes handled by the kernel
    out = jnp.zeros((1, g), jnp.float32)

    if n_main > 0:
        np_rows = n_main // pack
        # (n_main, h) -> (np_rows, w): contiguous row-major reshape (cheap bitcast).
        hv_pk = (hv if n_main == n else hv[:n_main]).reshape(np_rows, w)

        # Tiny packed weight tensors (built once per call, resident in VMEM).
        seg = jnp.arange(w, dtype=jnp.int32) // h                          # lane -> packed slot
        slots = jnp.arange(pack, dtype=jnp.int32)
        wg_rep = jnp.tile(w_gate.reshape(-1), pack)                        # (w,)
        wg_pk = jnp.where(seg[:, None] == slots[None, :],
                          wg_rep[:, None], 0.0).astype(jnp.float32)        # (w, pack) block-diag Wg
        expand = (slots[:, None] == seg[None, :]).astype(jnp.float32)      # (pack, w) gate->lane
        wp_pk = jnp.tile(w_proj, (pack, 1)).astype(jnp.float32)            # (w, g) packed Wp

        # --- tiling: multi-MiB hv tiles with a per-chip VMEM cap ------------------
        vmem_cap = _vmem_capacity_bytes()
        # ~4 MiB per hv double-buffer slot; /12 guard leaves headroom for the
        # second buffer plus the lane-padded gate / expand / product temporaries.
        buf_budget = max(512 * 1024, min(4 * 1024 * 1024, vmem_cap // 12))
        cap_rows = max(8, (buf_budget // (w * 4)) // 8 * 8)
        if tile_rows is None:
            tile_rows = cap_rows
        tile_rows = int(max(8, min(tile_rows, cap_rows, -(-np_rows // 8) * 8)))

        n_chunks = pl.cdiv(np_rows, tile_rows)
        if num_cores is None:
            num_cores = _default_num_cores()
        num_cores = int(max(1, min(num_cores, n_chunks)))
        cpc = pl.cdiv(n_chunks, num_cores)

        def hv_index(c, i):
            # Clamp so no DMA ever goes out of bounds; clamped duplicate blocks
            # are fully masked in-kernel via the logical chunk id.
            return (jnp.minimum(c * cpc + i, n_chunks - 1), 0)

        if core_parallel and num_cores > 1:
            lead_sem = pltpu.CORE_PARALLEL        # real TC sharding on 2-TC chips (v7x)
        else:
            lead_sem = pltpu.PARALLEL

        tile_bytes = tile_rows * w * 4
        vmem_limit = int(min(0.9 * vmem_cap, 8 * tile_bytes + (4 << 20)))

        cost = pl.CostEstimate(
            flops=int(6 * n_main * h + 2 * h * g),
            transcendentals=int(n_main),
            bytes_accessed=int(4 * (n_main * h + w * pack + pack * w + w * g
                                    + 2 * g + num_cores * g)),
        )

        out_partial = pl.pallas_call(
            partial(_graph_embed_kernel, num_rows=np_rows, pack=pack),
            out_shape=jax.ShapeDtypeStruct((num_cores, 1, g), jnp.float32),
            grid=(num_cores, cpc),
            in_specs=[
                pl.BlockSpec((tile_rows, w), hv_index),               # hv (streamed, lane-packed)
                pl.BlockSpec((w, pack), lambda c, i: (0, 0)),         # block-diag Wg (resident)
                pl.BlockSpec((1, 1), lambda c, i: (0, 0)),            # bg
                pl.BlockSpec((pack, w), lambda c, i: (0, 0)),         # gate -> lane-segment expand
                pl.BlockSpec((w, g), lambda c, i: (0, 0)),            # packed Wp (resident)
                pl.BlockSpec((1, g), lambda c, i: (0, 0)),            # bp
            ],
            out_specs=pl.BlockSpec((1, 1, g), lambda c, i: (c, 0, 0)),  # one partial row per core
            scratch_shapes=[
                pltpu.VMEM((1, w), jnp.float32),       # s_acc: packed gate-weighted feature sum
                pltpu.VMEM((1, pack), jnp.float32),    # g_acc: gate sum per packed slot
            ],
            compiler_params=pltpu.CompilerParams(
                dimension_semantics=(lead_sem, pltpu.ARBITRARY),
                vmem_limit_bytes=vmem_limit),
            cost_estimate=cost,
        )(hv_pk, wg_pk, b_gate, expand, wp_pk, b_proj)

        out = out + jnp.sum(out_partial[:, 0, :], axis=0, keepdims=True)

    if n_main < n:
        # Ragged tail of < pack nodes: negligible work, plain jnp (avoids any
        # wrapper-side pad/copy of the big hv slab).
        hv_t = hv[n_main:]
        gate_t = jax.nn.sigmoid(hv_t @ w_gate.T + b_gate)
        out = out + jnp.sum(gate_t * (hv_t @ w_proj + b_proj), axis=0, keepdims=True)

    return out


# ----------------------------------------------------------------------------- reference
def graph_embed_ref(hv, w_gate, b_gate, w_proj, b_proj):
    if hv.shape[0] == 0:
        return jnp.zeros((1, w_proj.shape[1]), jnp.float32)
    gate = jax.nn.sigmoid(hv @ w_gate.T + b_gate)     # (N, 1)
    proj = hv @ w_proj + b_proj                       # (N, 2H)
    return jnp.sum(gate * proj, axis=0, keepdims=True)


def init_params(key, node_hidden_size):
    """Deterministic init mirroring nn.Linear's uniform(-1/sqrt(fan_in), ...)."""
    h = node_hidden_size
    g = 2 * h
    k1, k2, k3, k4 = jax.random.split(key, 4)
    bound = 1.0 / jnp.sqrt(h)
    w_gate = jax.random.uniform(k1, (1, h), jnp.float32, -bound, bound)   # PyTorch layout
    b_gate = jax.random.uniform(k2, (1, 1), jnp.float32, -bound, bound)
    w_proj = jax.random.uniform(k3, (h, g), jnp.float32, -bound, bound)   # pre-transposed
    b_proj = jax.random.uniform(k4, (1, g), jnp.float32, -bound, bound)
    return w_gate, b_gate, w_proj, b_proj


# TODO(synk): the DGLGraph container / g.ndata['hv'] extraction stays host-side
# glue; the kernel consumes the dense (N, H) node-feature matrix directly.

if __name__ == "__main__":
    node_hidden_size = 32

    key = jax.random.PRNGKey(0)
    k1, k2, k3, kp = jax.random.split(key, 4)
    params = init_params(kp, node_hidden_size)

    # Case 1: tiny graph (13 nodes) -> one partial packed tile + ragged (<pack) tail.
    hv1 = jax.random.normal(k1, (13, node_hidden_size), jnp.float32)
    out1 = jax.block_until_ready(graph_embed(hv1, *params))
    ref1 = graph_embed_ref(hv1, *params)
    assert out1.shape == (1, 2 * node_hidden_size), out1.shape
    assert jnp.allclose(out1, ref1, atol=1e-3, rtol=1e-3), (out1, ref1)

    # Case 2: 300 nodes, small explicit tile + explicit 2-way core split:
    # exercises clean interior tiles, the masked partial tile and a fully
    # masked clamped duplicate tile on the second core.
    hv2 = jax.random.normal(k2, (300, node_hidden_size), jnp.float32)
    out2 = jax.block_until_ready(graph_embed(hv2, *params, tile_rows=16, num_cores=2))
    ref2 = graph_embed_ref(hv2, *params)
    assert jnp.allclose(out2, ref2, atol=1e-3, rtol=1e-3), (out2, ref2)

    # Case 3: same graph with default (large-tile, auto core count) settings.
    out3 = jax.block_until_ready(graph_embed(hv2, *params))
    assert jnp.allclose(out3, ref2, atol=1e-3, rtol=1e-3), (out3, ref2)

    # Case 4: fewer nodes than the pack factor -> pure-JAX tail path only.
    hv4 = jax.random.normal(k3, (2, node_hidden_size), jnp.float32)
    out4 = jax.block_until_ready(graph_embed(hv4, *params))
    assert jnp.allclose(out4, graph_embed_ref(hv4, *params), atol=1e-3, rtol=1e-3)

    # Case 5: empty graph -> zeros (module's explicit branch).
    hv5 = jnp.zeros((0, node_hidden_size), jnp.float32)
    assert jnp.allclose(graph_embed(hv5, *params),
                        jnp.zeros((1, 2 * node_hidden_size), jnp.float32))

    print("KERNEL_OK")
</pallas_src>

<mosaic_0001>
module attributes {stable_mosaic.version = 11 : i64} {
  func.func @_graph_embed_kernel(%arg0: i32, %arg1: i32, %arg2: memref<8x128xf32, #tpu.memory_space<vmem>>, %arg3: memref<128x4xf32, #tpu.memory_space<vmem>>, %arg4: memref<1x1xf32, #tpu.memory_space<vmem>>, %arg5: memref<4x128xf32, #tpu.memory_space<vmem>>, %arg6: memref<128x64xf32, #tpu.memory_space<vmem>>, %arg7: memref<1x64xf32, #tpu.memory_space<vmem>>, %arg8: memref<1x1x64xf32, #tpu.memory_space<vmem>>, %arg9: memref<1x128xf32, #tpu.memory_space<vmem>>, %arg10: memref<1x4xf32, #tpu.memory_space<vmem>>) attributes {dimension_semantics = [#tpu.dimension_semantics<parallel>, #tpu.dimension_semantics<arbitrary>], iteration_bounds = array<i64: 1, 1>, scalar_prefetch = 0 : i64, scratch_operands = 2 : i64, tpu.core_type = #tpu.core_type<tc>, window_params = [{transform_indices = @transform_0, window_bounds = array<i64: 8, 128>}, {pipeline_mode = #tpu.pipeline_mode<synchronous>, transform_indices = @transform_1, window_bounds = array<i64: 128, 4>}, {pipeline_mode = #tpu.pipeline_mode<synchronous>, transform_indices = @transform_2, window_bounds = array<i64: 1, 1>}, {pipeline_mode = #tpu.pipeline_mode<synchronous>, transform_indices = @transform_3, window_bounds = array<i64: 4, 128>}, {pipeline_mode = #tpu.pipeline_mode<synchronous>, transform_indices = @transform_4, window_bounds = array<i64: 128, 64>}, {pipeline_mode = #tpu.pipeline_mode<synchronous>, transform_indices = @transform_5, window_bounds = array<i64: 1, 64>}, {transform_indices = @transform_6, window_bounds = array<i64: 1, 1, 64>}]} {
    %c1_i32 = arith.constant 1 : i32
    %0 = arith.muli %arg0, %c1_i32 : i32
    %1 = arith.addi %0, %arg1 : i32
    %c0_i32 = arith.constant 0 : i32
    %2 = arith.cmpi eq, %arg1, %c0_i32 : i32
    %3 = arith.extui %2 : i1 to i32
    %c0_i32_0 = arith.constant 0 : i32
    %4 = arith.cmpi ne, %3, %c0_i32_0 : i32
    scf.if %4 {
      %cst = arith.constant 0.000000e+00 : f32
      %16 = vector.broadcast %cst : f32 to vector<1x128xf32>
      %c0 = arith.constant 0 : index
      %c0_6 = arith.constant 0 : index
      %17 = vector.load %arg9[%c0, %c0_6] : memref<1x128xf32, #tpu.memory_space<vmem>>, vector<1x128xf32>
      tpu.vector_store %arg9[%c0, %c0_6], %16 {strides = array<i32>} : memref<1x128xf32, #tpu.memory_space<vmem>>, vector<1x128xf32>,
      %cst_7 = arith.constant 0.000000e+00 : f32
      %18 = vector.broadcast %cst_7 : f32 to vector<1x4xf32>
      %c0_8 = arith.constant 0 : index
      %c0_9 = arith.constant 0 : index
      %19 = vector.load %arg10[%c0_8, %c0_9] : memref<1x4xf32, #tpu.memory_space<vmem>>, vector<1x4xf32>
      tpu.vector_store %arg10[%c0_8, %c0_9], %18 {strides = array<i32>} : memref<1x4xf32, #tpu.memory_space<vmem>>, vector<1x4xf32>,
    } else {
    }
    %c1_i32_1 = arith.constant 1 : i32
    %5 = arith.addi %1, %c1_i32_1 : i32
    %c8_i32 = arith.constant 8 : i32
    %6 = arith.muli %5, %c8_i32 : i32
    %c3_i32 = arith.constant 3 : i32
    %7 = arith.cmpi sle, %6, %c3_i32 : i32
    %8 = arith.extui %7 : i1 to i32
    %c0_i32_2 = arith.constant 0 : i32
    %9 = arith.cmpi ne, %8, %c0_i32_2 : i32
    scf.if %9 {
      %c0 = arith.constant 0 : index
      %c0_6 = arith.constant 0 : index
      %16 = vector.load %arg2[%c0, %c0_6] : memref<8x128xf32, #tpu.memory_space<vmem>>, vector<8x128xf32>
      %c0_7 = arith.constant 0 : index
      %c0_8 = arith.constant 0 : index
      %17 = vector.load %arg3[%c0_7, %c0_8] : memref<128x4xf32, #tpu.memory_space<vmem>>, vector<128x4xf32>
      %cst = arith.constant dense<0.000000e+00> : vector<8x4xf32>
      %18 = tpu.matmul %16, %17, %cst {dimension_numbers = #tpu.dot_dimension_numbers<[1], [0], [0], [1], [0, 0, 1, 1], [], []>, precision = #tpu.contract_precision<fp32>} : vector<8x128xf32>, vector<128x4xf32>, vector<8x4xf32> -> vector<8x4xf32>
      %c0_9 = arith.constant 0 : index
      %c0_10 = arith.constant 0 : index
      %19 = vector.load %arg4[%c0_9, %c0_10] : memref<1x1xf32, #tpu.memory_space<vmem>>, vector<1x1xf32>
      %20 = vector.broadcast %19 : vector<1x1xf32> to vector<8x4xf32>
      %21 = arith.addf %18, %20 : vector<8x4xf32>
      %22 = arith.negf %21 : vector<8x4xf32>
      %23 = math.exp %22 : vector<8x4xf32>
      %cst_11 = arith.constant 1.000000e+00 : f32
      %24 = vector.broadcast %cst_11 : f32 to vector<8x4xf32>
      %25 = arith.addf %24, %23 : vector<8x4xf32>
      %26 = arith.divf %24, %25 : vector<8x4xf32>
      %c0_12 = arith.constant 0 : index
      %c0_13 = arith.constant 0 : index
      %27 = vector.load %arg5[%c0_12, %c0_13] : memref<4x128xf32, #tpu.memory_space<vmem>>, vector<4x128xf32>
      %cst_14 = arith.constant dense<0.000000e+00> : vector<8x128xf32>
      %28 = tpu.matmul %26, %27, %cst_14 {dimension_numbers = #tpu.dot_dimension_numbers<[1], [0], [0], [1], [0, 0, 1, 1], [], []>, precision = #tpu.contract_precision<fp32>} : vector<8x4xf32>, vector<4x128xf32>, vector<8x128xf32> -> vector<8x128xf32>
      %c0_15 = arith.constant 0 : index
      %c0_16 = arith.constant 0 : index
      %29 = vector.load %arg9[%c0_15, %c0_16] : memref<1x128xf32, #tpu.memory_space<vmem>>, vector<1x128xf32>
      %30 = arith.mulf %28, %16 : vector<8x128xf32>
      %cst_17 = arith.constant dense<0.000000e+00> : vector<128xf32>
      %31 = vector.multi_reduction <add>, %30, %cst_17 [0] : vector<8x128xf32> to vector<128xf32>
      %32 = vector.shape_cast %31 : vector<128xf32> to vector<1x128xf32>
      %33 = arith.addf %29, %32 : vector<1x128xf32>
      %c0_18 = arith.constant 0 : index
      %c0_19 = arith.constant 0 : index
      %34 = vector.load %arg9[%c0_18, %c0_19] : memref<1x128xf32, #tpu.memory_space<vmem>>, vector<1x128xf32>
      tpu.vector_store %arg9[%c0_18, %c0_19], %33 {strides = array<i32>} : memref<1x128xf32, #tpu.memory_space<vmem>>, vector<1x128xf32>,
      %c0_20 = arith.constant 0 : index
      %c0_21 = arith.constant 0 : index
      %35 = vector.load %arg10[%c0_20, %c0_21] : memref<1x4xf32, #tpu.memory_space<vmem>>, vector<1x4xf32>
      %cst_22 = arith.constant dense<0.000000e+00> : vector<4xf32>
      %36 = vector.multi_reduction <add>, %26, %cst_22 [0] : vector<8x4xf32> to vector<4xf32>
      %37 = vector.shape_cast %36 : vector<4xf32> to vector<1x4xf32>
      %38 = arith.addf %35, %37 : vector<1x4xf32>
      %c0_23 = arith.constant 0 : index
      %c0_24 = arith.constant 0 : index
      %39 = vector.load %arg10[%c0_23, %c0_24] : memref<1x4xf32, #tpu.memory_space<vmem>>, vector<1x4xf32>
      tpu.vector_store %arg10[%c0_23, %c0_24], %38 {strides = array<i32>} : memref<1x4xf32, #tpu.memory_space<vmem>>, vector<1x4xf32>,
    } else {
    }
    %true = arith.constant true
    %10 = arith.xori %7, %true : i1
    %11 = arith.extui %10 : i1 to i32
    %c0_i32_3 = arith.constant 0 : i32
    %12 = arith.cmpi ne, %11, %c0_i32_3 : i32
    scf.if %12 {
      %c8_i32_6 = arith.constant 8 : i32
      %16 = arith.muli %1, %c8_i32_6 : i32
      %17 = tpu.iota {dimensions = array<i32: 0>} : vector<8x1xi32>
      %18 = vector.broadcast %16 : i32 to vector<8x1xi32>
      %19 = arith.addi %18, %17 : vector<8x1xi32>
      %c3_i32_7 = arith.constant 3 : i32
      %20 = vector.broadcast %c3_i32_7 : i32 to vector<8x1xi32>
      %21 = arith.cmpi slt, %19, %20 : vector<8x1xi32>
      %c0 = arith.constant 0 : index
      %c0_8 = arith.constant 0 : index
      %22 = vector.load %arg2[%c0, %c0_8] : memref<8x128xf32, #tpu.memory_space<vmem>>, vector<8x128xf32>
      %cst = arith.constant 0.000000e+00 : f32
      %23 = vector.shape_cast %21 : vector<8x1xi1> to vector<8x1xi1>
      %24 = vector.broadcast %23 : vector<8x1xi1> to vector<8x128xi1>
      %25 = vector.broadcast %cst : f32 to vector<8x128xf32>
      %26 = arith.select %24, %22, %25 : vector<8x128xi1>, vector<8x128xf32>
      %c0_9 = arith.constant 0 : index
      %c0_10 = arith.constant 0 : index
      %27 = vector.load %arg3[%c0_9, %c0_10] : memref<128x4xf32, #tpu.memory_space<vmem>>, vector<128x4xf32>
      %cst_11 = arith.constant dense<0.000000e+00> : vector<8x4xf32>
      %28 = tpu.matmul %26, %27, %cst_11 {dimension_numbers = #tpu.dot_dimension_numbers<[1], [0], [0], [1], [0, 0, 1, 1], [], []>, precision = #tpu.contract_precision<fp32>} : vector<8x128xf32>, vector<128x4xf32>, vector<8x4xf32> -> vector<8x4xf32>
      %c0_12 = arith.constant 0 : index
      %c0_13 = arith.constant 0 : index
      %29 = vector.load %arg4[%c0_12, %c0_13] : memref<1x1xf32, #tpu.memory_space<vmem>>, vector<1x1xf32>
      %30 = vector.broadcast %29 : vector<1x1xf32> to vector<8x4xf32>
      %31 = arith.addf %28, %30 : vector<8x4xf32>
      %32 = arith.negf %31 : vector<8x4xf32>
      %33 = math.exp %32 : vector<8x4xf32>
      %cst_14 = arith.constant 1.000000e+00 : f32
      %34 = vector.broadcast %cst_14 : f32 to vector<8x4xf32>
      %35 = arith.addf %34, %33 : vector<8x4xf32>
      %36 = arith.divf %34, %35 : vector<8x4xf32>
      %cst_15 = arith.constant 0.000000e+00 : f32
      %37 = vector.shape_cast %21 : vector<8x1xi1> to vector<8x1xi1>
      %38 = vector.broadcast %37 : vector<8x1xi1> to vector<8x4xi1>
      %39 = vector.broadcast %cst_15 : f32 to vector<8x4xf32>
      %40 = arith.select %38, %36, %39 : vector<8x4xi1>, vector<8x4xf32>
      %c0_16 = arith.constant 0 : index
      %c0_17 = arith.constant 0 : index
      %41 = vector.load %arg5[%c0_16, %c0_17] : memref<4x128xf32, #tpu.memory_space<vmem>>, vector<4x128xf32>
      %cst_18 = arith.constant dense<0.000000e+00> : vector<8x128xf32>
      %42 = tpu.matmul %40, %41, %cst_18 {dimension_numbers = #tpu.dot_dimension_numbers<[1], [0], [0], [1], [0, 0, 1, 1], [], []>, precision = #tpu.contract_precision<fp32>} : vector<8x4xf32>, vector<4x128xf32>, vector<8x128xf32> -> vector<8x128xf32>
      %c0_19 = arith.constant 0 : index
      %c0_20 = arith.constant 0 : index
      %43 = vector.load %arg9[%c0_19, %c0_20] : memref<1x128xf32, #tpu.memory_space<vmem>>, vector<1x128xf32>
      %44 = arith.mulf %42, %26 : vector<8x128xf32>
      %cst_21 = arith.constant dense<0.000000e+00> : vector<128xf32>
      %45 = vector.multi_reduction <add>, %44, %cst_21 [0] : vector<8x128xf32> to vector<128xf32>
      %46 = vector.shape_cast %45 : vector<128xf32> to vector<1x128xf32>
      %47 = arith.addf %43, %46 : vector<1x128xf32>
      %c0_22 = arith.constant 0 : index
      %c0_23 = arith.constant 0 : index
      %48 = vector.load %arg9[%c0_22, %c0_23] : memref<1x128xf32, #tpu.memory_space<vmem>>, vector<1x128xf32>
      tpu.vector_store %arg9[%c0_22, %c0_23], %47 {strides = array<i32>} : memref<1x128xf32, #tpu.memory_space<vmem>>, vector<1x128xf32>,
      %c0_24 = arith.constant 0 : index
      %c0_25 = arith.constant 0 : index
      %49 = vector.load %arg10[%c0_24, %c0_25] : memref<1x4xf32, #tpu.memory_space<vmem>>, vector<1x4xf32>
      %cst_26 = arith.constant dense<0.000000e+00> : vector<4xf32>
      %50 = vector.multi_reduction <add>, %40, %cst_26 [0] : vector<8x4xf32> to vector<4xf32>
      %51 = vector.shape_cast %50 : vector<4xf32> to vector<1x4xf32>
      %52 = arith.addf %49, %51 : vector<1x4xf32>
      %c0_27 = arith.constant 0 : index
      %c0_28 = arith.constant 0 : index
      %53 = vector.load %arg10[%c0_27, %c0_28] : memref<1x4xf32, #tpu.memory_space<vmem>>, vector<1x4xf32>
      tpu.vector_store %arg10[%c0_27, %c0_28], %52 {strides = array<i32>} : memref<1x4xf32, #tpu.memory_space<vmem>>, vector<1x4xf32>,
    } else {
    }
    %c0_i32_4 = arith.constant 0 : i32
    %13 = arith.cmpi eq, %arg1, %c0_i32_4 : i32
    %14 = arith.extui %13 : i1 to i32
    %c0_i32_5 = arith.constant 0 : i32
    %15 = arith.cmpi ne, %14, %c0_i32_5 : i32
    scf.if %15 {
      %c0 = arith.constant 0 : index
      %c0_6 = arith.constant 0 : index
      %16 = vector.load %arg10[%c0, %c0_6] : memref<1x4xf32, #tpu.memory_space<vmem>>, vector<1x4xf32>
      %cst = arith.constant dense<0.000000e+00> : vector<1xf32>
      %17 = vector.multi_reduction <add>, %16, %cst [1] : vector<1x4xf32> to vector<1xf32>
      %18 = vector.shape_cast %17 : vector<1xf32> to vector<1x1xf32>
      %c0_7 = arith.constant 0 : index
      %c0_8 = arith.constant 0 : index
      %19 = vector.load %arg9[%c0_7, %c0_8] : memref<1x128xf32, #tpu.memory_space<vmem>>, vector<1x128xf32>
      %c0_9 = arith.constant 0 : index
      %c0_10 = arith.constant 0 : index
      %20 = vector.load %arg6[%c0_9, %c0_10] : memref<128x64xf32, #tpu.memory_space<vmem>>, vector<128x64xf32>
      %cst_11 = arith.constant dense<0.000000e+00> : vector<1x64xf32>
      %21 = tpu.matmul %19, %20, %cst_11 {dimension_numbers = #tpu.dot_dimension_numbers<[1], [0], [0], [1], [0, 0, 1, 1], [], []>, precision = #tpu.contract_precision<fp32>} : vector<1x128xf32>, vector<128x64xf32>, vector<1x64xf32> -> vector<1x64xf32>
      %c0_12 = arith.constant 0 : index
      %c0_13 = arith.constant 0 : index
      %22 = vector.load %arg7[%c0_12, %c0_13] : memref<1x64xf32, #tpu.memory_space<vmem>>, vector<1x64xf32>
      %23 = vector.broadcast %18 : vector<1x1xf32> to vector<1x64xf32>
      %24 = arith.mulf %23, %22 : vector<1x64xf32>
      %25 = arith.addf %21, %24 : vector<1x64xf32>
      %26 = vector.shape_cast %25 : vector<1x64xf32> to vector<1x1x64xf32>
      %c0_14 = arith.constant 0 : index
      %c0_15 = arith.constant 0 : index
      %c0_16 = arith.constant 0 : index
      %27 = vector.load %arg8[%c0_14, %c0_15, %c0_16] : memref<1x1x64xf32, #tpu.memory_space<vmem>>, vector<1x1x64xf32>
      tpu.vector_store %arg8[%c0_14, %c0_15, %c0_16], %26 {strides = array<i32>} : memref<1x1x64xf32, #tpu.memory_space<vmem>>, vector<1x1x64xf32>,
    } else {
    }
    return
  }
  func.func @transform_0(%arg0: i32, %arg1: i32) -> (i32, i32) {
    %c1_i32 = arith.constant 1 : i32
    %0 = arith.muli %arg0, %c1_i32 : i32
    %1 = arith.addi %0, %arg1 : i32
    %c0_i32 = arith.constant 0 : i32
    %2 = arith.minsi %1, %c0_i32 : i32
    %c0_i32_0 = arith.constant 0 : i32
    %c0_i32_1 = arith.constant 0 : i32
    return %2, %c0_i32_0 : i32, i32
  }
  func.func @transform_1(%arg0: i32, %arg1: i32) -> (i32, i32) {
    %c0_i32 = arith.constant 0 : i32
    %c0_i32_0 = arith.constant 0 : i32
    %c0_i32_1 = arith.constant 0 : i32
    return %c0_i32, %c0_i32_0 : i32, i32
  }
  func.func @transform_2(%arg0: i32, %arg1: i32) -> (i32, i32) {
    %c0_i32 = arith.constant 0 : i32
    %c0_i32_0 = arith.constant 0 : i32
    %c0_i32_1 = arith.constant 0 : i32
    return %c0_i32, %c0_i32_0 : i32, i32
  }
  func.func @transform_3(%arg0: i32, %arg1: i32) -> (i32, i32) {
    %c0_i32 = arith.constant 0 : i32
    %c0_i32_0 = arith.constant 0 : i32
    %c0_i32_1 = arith.constant 0 : i32
    return %c0_i32, %c0_i32_0 : i32, i32
  }
  func.func @transform_4(%arg0: i32, %arg1: i32) -> (i32, i32) {
    %c0_i32 = arith.constant 0 : i32
    %c0_i32_0 = arith.constant 0 : i32
    %c0_i32_1 = arith.constant 0 : i32
    return %c0_i32, %c0_i32_0 : i32, i32
  }
  func.func @transform_5(%arg0: i32, %arg1: i32) -> (i32, i32) {
    %c0_i32 = arith.constant 0 : i32
    %c0_i32_0 = arith.constant 0 : i32
    %c0_i32_1 = arith.constant 0 : i32
    return %c0_i32, %c0_i32_0 : i32, i32
  }
  func.func @transform_6(%arg0: i32, %arg1: i32) -> (i32, i32, i32) {
    %c0_i32 = arith.constant 0 : i32
    %c0_i32_0 = arith.constant 0 : i32
    %c0_i32_1 = arith.constant 0 : i32
    return %arg0, %c0_i32, %c0_i32_0 : i32, i32, i32
  }
}

</mosaic_0001>

<llo_original>
// kernel: tpu_custom_call.1
$region0: #{tpu_custom_call.1}
  #allocation0 [shape = 'u32[]', space=smem, size = 0x4, offset = 0x4, fixed_abs, tag = 'smem constant byte address 0x4 - core index']
  #allocation1 [shape = 'u32[144,128]{1,0:T(1,128)}', space=vmem, size = 0x12000, scoped, tag = 'internal scratch']
  #allocation2 [shape = 'f32[1,128]{1,0:T(1,128)}', space=vmem, size = 0x200, scoped, tag = 'scratch operand']
  #allocation3 [shape = 'f32[1,4]{1,0:T(1,128)}', space=vmem, size = 0x200, scoped, tag = 'scratch operand']
  #allocation4 [shape = 'f32[1,1]{1,0:T(1,128)S(1)}', space=vmem, size = 0x200, scoped, tag = 'scoped memory for tpu_custom_call.1']
  %s0 = inlined_call_operand.vmem [shape: f32[3,128], index: 0, kind: input, shape index: {}]
  %s1 = inlined_call_operand.vmem [shape: f32[128,4], index: 1, kind: input, shape index: {}]
  %s2 = inlined_call_operand.<no memory space> [shape: f32[1,1], index: 2, kind: input, shape index: {}]
  %s3 = inlined_call_operand.vmem [shape: f32[4,128], index: 3, kind: input, shape index: {}]
  %s4 = inlined_call_operand.vmem [shape: f32[128,64], index: 4, kind: input, shape index: {}]
  %s5 = inlined_call_operand.vmem [shape: f32[1,64], index: 5, kind: input, shape index: {}]
  %s6 = inlined_call_operand.hbm [shape: f32[1,1,64], index: 6, kind: output, shape index: {}]
  %s7 = sld [smem:[#allocation0]]
  $region50: #{tpu_custom_call.1} parent=0
    _
  %s9 = ssub.s32 1, %s7
  %s10 = scalar_select 0, %s9, %s7
  %v11 = vstv %s2
  %12 = vst [vmem:[#allocation4] sm:$0x1] %v11
  $region1: #{tpu_custom_call.1} parent=0
    #allocation5 [shape = 'u8[512]{0}', space=vmem, size = 0x400, scoped, tag = 'output window, operand 0, single buffered']
    #allocation6 [shape = 's32[1]{0}', space=sflag, size = 0x4, scoped, tag = 'scoped memory for tpu_custom_call.1']
    %13 = vsyncpa [#allocation6], 0
    // Predicated region
    $region2: #{tpu_custom_call.1} parent=1 // pred_check
      _
    $region3: #{tpu_custom_call.1} parent=1 // pred_check_branch
      %15 = sbr.rel (0) target = $region5
    $region4: #{tpu_custom_call.1} parent=1 // pred_region
      %s16 = sadd.s32 0, 0
      %p17 = scmp.lt.s32.totalorder %s16, 0
      %s18 = scalar_select %p17, %s16, 0
      %s19 = smul.u32 2, %s18
      %s20 = ssub.s32 1, %s19
      %s21 = smul.u32 64, %s20
      %p22 = scmp.lt.s32.totalorder %s19, 0
      %s23 = scalar_select %p22, %s19, 0
      %s24 = smul.addr %s23, 4
      %s25 = scalar_lea.vmem %s0, %s24
      %s26 = sadd.s32 0, 0
      %p27 = scmp.lt.s32.totalorder %s26, 0
      %s28 = scalar_select %p27, %s26, 0
      %s29 = smul.u32 2, %s28
      %s30 = ssub.s32 1, %s29
      %s31 = smul.u32 64, %s30
    $region5: #{tpu_custom_call.1} parent=1 // pred_fallthru
      _
    // Predicated region
    $region6: #{tpu_custom_call.1} parent=1 // pred_check
      _
    $region7: #{tpu_custom_call.1} parent=1 // pred_check_branch
      %33 = sbr.rel (0) target = $region9
    $region8: #{tpu_custom_call.1} parent=1 // pred_region
      _
    $region9: #{tpu_custom_call.1} parent=1 // pred_fallthru
      _
    // Predicated region
    $region10: #{tpu_custom_call.1} parent=1 // pred_check
      _
    $region11: #{tpu_custom_call.1} parent=1 // pred_check_branch
      %35 = sbr.rel (0) target = $region13
    $region12: #{tpu_custom_call.1} parent=1 // pred_region
      _
    $region13: #{tpu_custom_call.1} parent=1 // pred_fallthru
      _
    // Predicated region
    $region14: #{tpu_custom_call.1} parent=1 // pred_check
      _
    $region15: #{tpu_custom_call.1} parent=1 // pred_check_branch
      %37 = sbr.rel (0) target = $region17
    $region16: #{tpu_custom_call.1} parent=1 // pred_region
      _
    $region17: #{tpu_custom_call.1} parent=1 // pred_fallthru
      _
    // Predicated region
    $region18: #{tpu_custom_call.1} parent=1 // pred_check
      _
    $region19: #{tpu_custom_call.1} parent=1 // pred_check_branch
      %39 = sbr.rel (0) target = $region21
    $region20: #{tpu_custom_call.1} parent=1 // pred_region
      _
    $region21: #{tpu_custom_call.1} parent=1 // pred_fallthru
      _
    // Predicated region
    $region22: #{tpu_custom_call.1} parent=1 // pred_check
      _
    $region23: #{tpu_custom_call.1} parent=1 // pred_check_branch
      %41 = sbr.rel (0) target = $region25
    $region24: #{tpu_custom_call.1} parent=1 // pred_region
      _
    $region25: #{tpu_custom_call.1} parent=1 // pred_fallthru
      _
    %s42 = sadd.s32 0, 0
    %p43 = scmp.lt.s32.totalorder %s42, 0
    %s44 = scalar_select %p43, %s42, 0
    %s45 = smul.u32 2, %s44
    %s46 = ssub.s32 1, %s45
    %s47 = smul.u32 64, %s46
    %p48 = scmp.lt.s32.totalorder %s45, 0
    %s49 = scalar_select %p48, %s45, 0
    %s50 = smul.addr %s49, 4
    %s51 = scalar_lea.vmem %s0, %s50
    %s52 = sadd.s32 0, 0
    %p53 = scmp.lt.s32.totalorder %s52, 0
    %s54 = scalar_select %p53, %s52, 0
    %s55 = smul.u32 2, %s54
    %s56 = ssub.s32 1, %s55
    %s57 = smul.u32 64, %s56
    %p58 = scmp.lt.s32.totalorder %s55, 0
    %s59 = scalar_select %p58, %s55, 0
    %s60 = smul.addr %s59, 4
    %s61 = scalar_lea.vmem %s0, %s60
    %s62 = sadd.s32 0, 0
    %p63 = scmp.lt.s32.totalorder %s62, 0
    %s64 = scalar_select %p63, %s62, 0
    %s65 = smul.u32 2, %s64
    %s66 = ssub.s32 1, %s65
    %s67 = smul.u32 64, %s66
    %s68 = sadd.s32 0, 0
    %p69 = scmp.eq.s32.totalorder 0, 0
    // Predicated region
    $region26: #{tpu_custom_call.1} parent=1 // pred_check
      %p70 = pneg %p69
    $region27: #{tpu_custom_call.1} parent=1 // pred_check_branch
      %72 = sbr.rel (%p70) target = $region29
    $region28: #{tpu_custom_call.1} parent=1 // pred_region
      %73 = vst [vmem:[#allocation2] sm:$0x1] 0.0
      %vm74 = vcmask 24576
      %75 = vst.msk [vmem:[#allocation3] sm:$0x1] %vm74, 0.0
    $region29: #{tpu_custom_call.1} parent=1 // pred_fallthru
      _
    %s76 = sadd.s32 %s68, 1
    %s77 = smul.u32 %s76, 8
    %p78 = scmp.le.s32.totalorder %s77, 3
    // Predicated region
    $region30: #{tpu_custom_call.1} parent=1 // pred_check
      %p79 = pneg %p78
    $region31: #{tpu_custom_call.1} parent=1 // pred_check_branch
      %81 = sbr.rel (%p79) target = $region33
    $region32: #{tpu_custom_call.1} parent=1 // pred_region
      %v82 = vld [vmem:[%s61] sm:$0xff]
      %v83 = vld [vmem:[%s1] sm:$0xff]
      %v84 = vld [vmem:[%s1 + $0x8] sm:$0xff]
      %v85 = vld [vmem:[%s1 + $0x10] sm:$0xff]
      %v86 = vld [vmem:[%s1 + $0x18] sm:$0xff]
      %v87 = vld [vmem:[%s1 + $0x20] sm:$0xff]
      %v88 = vld [vmem:[%s1 + $0x28] sm:$0xff]
      %v89 = vld [vmem:[%s1 + $0x30] sm:$0xff]
      %v90 = vld [vmem:[%s1 + $0x38] sm:$0xff]
      %v91 = vld [vmem:[%s1 + $0x40] sm:$0xff]
      %v92 = vld [vmem:[%s1 + $0x48] sm:$0xff]
      %v93 = vld [vmem:[%s1 + $0x50] sm:$0xff]
      %v94 = vld [vmem:[%s1 + $0x58] sm:$0xff]
      %v95 = vld [vmem:[%s1 + $0x60] sm:$0xff]
      %v96 = vld [vmem:[%s1 + $0x68] sm:$0xff]
      %v97 = vld [vmem:[%s1 + $0x70] sm:$0xff]
      %v98 = vld [vmem:[%s1 + $0x78] sm:$0xff]
      %v99 = vld [vmem:[#allocation4] sm:$0x1]
      %v101 = vlaneseq
      %v102 = vshrl.u32 %v101, 7
      %v103 = vsub.s32 0, %v102
      %v104 = vrot.slane %v99, %v103
      %105 = vset.pattern.permute.xlu0 0
      %106 = vperm.xlu0 %105, %v104
      %v107 = vpop.permute.xlu0 %106
      %109 = vmatprep.subr.mxu0 0.0
      %v110 = vand.u32 %v98, 4294901760
      %111 = vmatpush1.msra.mxu0 %v110
      %112 = vmatprep.subr.mxu0 0.0
      %v113 = vand.u32 %v97, 4294901760
      %114 = vmatpush1.msra.mxu0 %v113
      %115 = vmatprep.subr.mxu0 0.0
      %v116 = vand.u32 %v96, 4294901760
      %117 = vmatpush1.msra.mxu0 %v116
      %118 = vmatprep.subr.mxu0 0.0
      %v119 = vand.u32 %v95, 4294901760
      %120 = vmatpush1.msra.mxu0 %v119
      %121 = vmatprep.subr.mxu0 0.0
      %v122 = vand.u32 %v94, 4294901760
      %123 = vmatpush1.msra.mxu0 %v122
      %124 = vmatprep.subr.mxu0 0.0
      %v125 = vand.u32 %v93, 4294901760
      %126 = vmatpush1.msra.mxu0 %v125
      %127 = vmatprep.subr.mxu0 0.0
      %v128 = vand.u32 %v92, 4294901760
      %129 = vmatpush1.msra.mxu0 %v128
      %130 = vmatprep.subr.mxu0 0.0
      %v131 = vand.u32 %v91, 4294901760
      %132 = vmatpush1.msra.mxu0 %v131
      %133 = vmatprep.subr.mxu0 0.0
      %v134 = vand.u32 %v90, 4294901760
      %135 = vmatpush1.msra.mxu0 %v134
      %136 = vmatprep.subr.mxu0 0.0
      %v137 = vand.u32 %v89, 4294901760
      %138 = vmatpush1.msra.mxu0 %v137
      %139 = vmatprep.subr.mxu0 0.0
      %v140 = vand.u32 %v88, 4294901760
      %141 = vmatpush1.msra.mxu0 %v140
      %142 = vmatprep.subr.mxu0 0.0
      %v143 = vand.u32 %v87, 4294901760
      %144 = vmatpush1.msra.mxu0 %v143
      %145 = vmatprep.subr.mxu0 0.0
      %v146 = vand.u32 %v86, 4294901760
      %147 = vmatpush1.msra.mxu0 %v146
      %148 = vmatprep.subr.mxu0 0.0
      %v149 = vand.u32 %v85, 4294901760
      %150 = vmatpush1.msra.mxu0 %v149
      %151 = vmatprep.subr.mxu0 0.0
      %v152 = vand.u32 %v84, 4294901760
      %153 = vmatpush1.msra.mxu0 %v152
      %154 = vmatprep.subr.mxu0 0.0
      %v155 = vand.u32 %v83, 4294901760
      %156 = vmatpush1.msra.mxu0 %v155
      %157 = vmatprep.subr.mxu0 0.0
      %158 = vmatpush2.msra.mxu0 0.0
      %159 = vmatprep.subr.mxu0 0.0
      %160 = vmatpush2.msra.mxu0 0.0
      %161 = vmatprep.subr.mxu0 0.0
      %162 = vmatpush2.msra.mxu0 0.0
      %163 = vmatprep.subr.mxu0 0.0
      %164 = vmatpush2.msra.mxu0 0.0
      %165 = vmatprep.subr.mxu0 0.0
      %166 = vmatpush2.msra.mxu0 0.0
      %167 = vmatprep.subr.mxu0 0.0
      %168 = vmatpush2.msra.mxu0 0.0
      %169 = vmatprep.subr.mxu0 0.0
      %170 = vmatpush2.msra.mxu0 0.0
      %171 = vmatprep.subr.mxu0 0.0
      %172 = vmatpush2.msra.mxu0 0.0
      %173 = vmatprep.subr.mxu0 0.0
      %174 = vmatpush2.msra.mxu0 0.0
      %175 = vmatprep.subr.mxu0 0.0
      %176 = vmatpush2.msra.mxu0 0.0
      %177 = vmatprep.subr.mxu0 0.0
      %178 = vmatpush2.msra.mxu0 0.0
      %179 = vmatprep.subr.mxu0 0.0
      %180 = vmatpush2.msra.mxu0 0.0
      %181 = vmatprep.subr.mxu0 0.0
      %182 = vmatpush2.msra.mxu0 0.0
      %183 = vmatprep.subr.mxu0 0.0
      %184 = vmatpush2.msra.mxu0 0.0
      %185 = vmatprep.subr.mxu0 0.0
      %186 = vmatpush2.msra.mxu0 0.0
      %187 = vmatprep.subr.mxu0 0.0
      %188 = vmatpush2.msra.mxu0 0.0
      %189 = vmatprep.mubr.f32.mxu0 0.0
      %v190 = vand.u32 %v82, 4294901760
      %v191 = vsub.f32 %v82, %v190
      %v192 = vand.u32 %v191, 4294901760
      %v193 = vsub.f32 %v191, %v192
      %v194 = vand.u32 %v193, 4294901760
      %195 = vmatmul.mubr.f32.gmra.mxu0 %v194
      %v196 = vpop.f32.mrf.mxu0
      %v197 = vadd.f32 %v107, %v196
      %v198 = vpop.f32.mrf.mxu0
      %199 = vdwg.mxu0
      %200 = vmatprep.subr.mxu0 0.0
      %v201 = vand.u32 %v98, 4294901760
      %v202 = vsub.f32 %v98, %v201
      %v203 = vand.u32 %v202, 4294901760
      %v204 = vsub.f32 %v202, %v203
      %v205 = vand.u32 %v204, 4294901760
      %206 = vmatpush1.msra.mxu0 %v205
      %207 = vmatprep.subr.mxu0 0.0
      %v208 = vand.u32 %v97, 4294901760
      %v209 = vsub.f32 %v97, %v208
      %v210 = vand.u32 %v209, 4294901760
      %v211 = vsub.f32 %v209, %v210
      %v212 = vand.u32 %v211, 4294901760
      %213 = vmatpush1.msra.mxu0 %v212
      %214 = vmatprep.subr.mxu0 0.0
      %v215 = vand.u32 %v96, 4294901760
      %v216 = vsub.f32 %v96, %v215
      %v217 = vand.u32 %v216, 4294901760
      %v218 = vsub.f32 %v216, %v217
      %v219 = vand.u32 %v218, 4294901760
      %220 = vmatpush1.msra.mxu0 %v219
      %221 = vmatprep.subr.mxu0 0.0
      %v222 = vand.u32 %v95, 4294901760
      %v223 = vsub.f32 %v95, %v222
      %v224 = vand.u32 %v223, 4294901760
      %v225 = vsub.f32 %v223, %v224
      %v226 = vand.u32 %v225, 4294901760
      %227 = vmatpush1.msra.mxu0 %v226
      %228 = vmatprep.subr.mxu0 0.0
      %v229 = vand.u32 %v94, 4294901760
      %v230 = vsub.f32 %v94, %v229
      %v231 = vand.u32 %v230, 4294901760
      %v232 = vsub.f32 %v230, %v231
      %v233 = vand.u32 %v232, 4294901760
      %234 = vmatpush1.msra.mxu0 %v233
      %235 = vmatprep.subr.mxu0 0.0
      %v236 = vand.u32 %v93, 4294901760
      %v237 = vsub.f32 %v93, %v236
      %v238 = vand.u32 %v237, 4294901760
      %v239 = vsub.f32 %v237, %v238
      %v240 = vand.u32 %v239, 4294901760
      %241 = vmatpush1.msra.mxu0 %v240
      %242 = vmatprep.subr.mxu0 0.0
      %v243 = vand.u32 %v92, 4294901760
      %v244 = vsub.f32 %v92, %v243
      %v245 = vand.u32 %v244, 4294901760
      %v246 = vsub.f32 %v244, %v245
      %v247 = vand.u32 %v246, 4294901760
      %248 = vmatpush1.msra.mxu0 %v247
      %249 = vmatprep.subr.mxu0 0.0
      %v250 = vand.u32 %v91, 4294901760
      %v251 = vsub.f32 %v91, %v250
      %v252 = vand.u32 %v251, 4294901760
      %v253 = vsub.f32 %v251, %v252
      %v254 = vand.u32 %v253, 4294901760
      %255 = vmatpush1.msra.mxu0 %v254
      %256 = vmatprep.subr.mxu0 0.0
      %v257 = vand.u32 %v90, 4294901760
      %v258 = vsub.f32 %v90, %v257
      %v259 = vand.u32 %v258, 4294901760
      %v260 = vsub.f32 %v258, %v259
      %v261 = vand.u32 %v260, 4294901760
      %262 = vmatpush1.msra.mxu0 %v261
      %263 = vmatprep.subr.mxu0 0.0
      %v264 = vand.u32 %v89, 4294901760
      %v265 = vsub.f32 %v89, %v264
      %v266 = vand.u32 %v265, 4294901760
      %v267 = vsub.f32 %v265, %v266
      %v268 = vand.u32 %v267, 4294901760
      %269 = vmatpush1.msra.mxu0 %v268
      %270 = vmatprep.subr.mxu0 0.0
      %v271 = vand.u32 %v88, 4294901760
      %v272 = vsub.f32 %v88, %v271
      %v273 = vand.u32 %v272, 4294901760
      %v274 = vsub.f32 %v272, %v273
      %v275 = vand.u32 %v274, 4294901760
      %276 = vmatpush1.msra.mxu0 %v275
      %277 = vmatprep.subr.mxu0 0.0
      %v278 = vand.u32 %v87, 4294901760
      %v279 = vsub.f32 %v87, %v278
      %v280 = vand.u32 %v279, 4294901760
      %v281 = vsub.f32 %v279, %v280
      %v282 = vand.u32 %v281, 4294901760
      %283 = vmatpush1.msra.mxu0 %v282
      %284 = vmatprep.subr.mxu0 0.0
      %v285 = vand.u32 %v86, 4294901760
      %v286 = vsub.f32 %v86, %v285
      %v287 = vand.u32 %v286, 4294901760
      %v288 = vsub.f32 %v286, %v287
      %v289 = vand.u32 %v288, 4294901760
      %290 = vmatpush1.msra.mxu0 %v289
      %291 = vmatprep.subr.mxu0 0.0
      %v292 = vand.u32 %v85, 4294901760
      %v293 = vsub.f32 %v85, %v292
      %v294 = vand.u32 %v293, 4294901760
      %v295 = vsub.f32 %v293, %v294
      %v296 = vand.u32 %v295, 4294901760
      %297 = vmatpush1.msra.mxu0 %v296
      %298 = vmatprep.subr.mxu0 0.0
      %v299 = vand.u32 %v84, 4294901760
      %v300 = vsub.f32 %v84, %v299
      %v301 = vand.u32 %v300, 4294901760
      %v302 = vsub.f32 %v300, %v301
      %v303 = vand.u32 %v302, 4294901760
      %304 = vmatpush1.msra.mxu0 %v303
      %305 = vmatprep.subr.mxu0 0.0
      %v306 = vand.u32 %v83, 4294901760
      %v307 = vsub.f32 %v83, %v306
      %v308 = vand.u32 %v307, 4294901760
      %v309 = vsub.f32 %v307, %v308
      %v310 = vand.u32 %v309, 4294901760
      %311 = vmatpush1.msra.mxu0 %v310
      %312 = vmatprep.subr.mxu0 0.0
      %313 = vmatpush2.msra.mxu0 0.0
      %314 = vmatprep.subr.mxu0 0.0
      %315 = vmatpush2.msra.mxu0 0.0
      %316 = vmatprep.subr.mxu0 0.0
      %317 = vmatpush2.msra.mxu0 0.0
      %318 = vmatprep.subr.mxu0 0.0
      %319 = vmatpush2.msra.mxu0 0.0
      %320 = vmatprep.subr.mxu0 0.0
      %321 = vmatpush2.msra.mxu0 0.0
      %322 = vmatprep.subr.mxu0 0.0
      %323 = vmatpush2.msra.mxu0 0.0
      %324 = vmatprep.subr.mxu0 0.0
      %325 = vmatpush2.msra.mxu0 0.0
      %326 = vmatprep.subr.mxu0 0.0
      %327 = vmatpush2.msra.mxu0 0.0
      %328 = vmatprep.subr.mxu0 0.0
      %329 = vmatpush2.msra.mxu0 0.0
      %330 = vmatprep.subr.mxu0 0.0
      %331 = vmatpush2.msra.mxu0 0.0
      %332 = vmatprep.subr.mxu0 0.0
      %333 = vmatpush2.msra.mxu0 0.0
      %334 = vmatprep.subr.mxu0 0.0
      %335 = vmatpush2.msra.mxu0 0.0
      %336 = vmatprep.subr.mxu0 0.0
      %337 = vmatpush2.msra.mxu0 0.0
      %338 = vmatprep.subr.mxu0 0.0
      %339 = vmatpush2.msra.mxu0 0.0
      %340 = vmatprep.subr.mxu0 0.0
      %341 = vmatpush2.msra.mxu0 0.0
      %342 = vmatprep.subr.mxu0 0.0
      %343 = vmatpush2.msra.mxu0 0.0
      %344 = vmatprep.mubr.f32.mxu0 0.0
      %v345 = vand.u32 %v82, 4294901760
      %346 = vmatmul.mubr.f32.gmra.mxu0 %v345
      %v347 = vpop.f32.mrf.mxu0
      %v348 = vadd.f32 %v197, %v347
      %v349 = vpop.f32.mrf.mxu0
      %350 = vdwg.mxu0
      %351 = vmatprep.subr.mxu0 0.0
      %v352 = vand.u32 %v98, 4294901760
      %v353 = vsub.f32 %v98, %v352
      %354 = vmatpush1.msra.mxu0 %v353
      %355 = vmatprep.subr.mxu0 0.0
      %v356 = vand.u32 %v97, 4294901760
      %v357 = vsub.f32 %v97, %v356
      %358 = vmatpush1.msra.mxu0 %v357
      %359 = vmatprep.subr.mxu0 0.0
      %v360 = vand.u32 %v96, 4294901760
      %v361 = vsub.f32 %v96, %v360
      %362 = vmatpush1.msra.mxu0 %v361
      %363 = vmatprep.subr.mxu0 0.0
      %v364 = vand.u32 %v95, 4294901760
      %v365 = vsub.f32 %v95, %v364
      %366 = vmatpush1.msra.mxu0 %v365
      %367 = vmatprep.subr.mxu0 0.0
      %v368 = vand.u32 %v94, 4294901760
      %v369 = vsub.f32 %v94, %v368
      %370 = vmatpush1.msra.mxu0 %v369
      %371 = vmatprep.subr.mxu0 0.0
      %v372 = vand.u32 %v93, 4294901760
      %v373 = vsub.f32 %v93, %v372
      %374 = vmatpush1.msra.mxu0 %v373
      %375 = vmatprep.subr.mxu0 0.0
      %v376 = vand.u32 %v92, 4294901760
      %v377 = vsub.f32 %v92, %v376
      %378 = vmatpush1.msra.mxu0 %v377
      %379 = vmatprep.subr.mxu0 0.0
      %v380 = vand.u32 %v91, 4294901760
      %v381 = vsub.f32 %v91, %v380
      %382 = vmatpush1.msra.mxu0 %v381
      %383 = vmatprep.subr.mxu0 0.0
      %v384 = vand.u32 %v90, 4294901760
      %v385 = vsub.f32 %v90, %v384
      %386 = vmatpush1.msra.mxu0 %v385
      %387 = vmatprep.subr.mxu0 0.0
      %v388 = vand.u32 %v89, 4294901760
      %v389 = vsub.f32 %v89, %v388
      %390 = vmatpush1.msra.mxu0 %v389
      %391 = vmatprep.subr.mxu0 0.0
      %v392 = vand.u32 %v88, 4294901760
      %v393 = vsub.f32 %v88, %v392
      %394 = vmatpush1.msra.mxu0 %v393
      %395 = vmatprep.subr.mxu0 0.0
      %v396 = vand.u32 %v87, 4294901760
      %v397 = vsub.f32 %v87, %v396
      %398 = vmatpush1.msra.mxu0 %v397
      %399 = vmatprep.subr.mxu0 0.0
      %v400 = vand.u32 %v86, 4294901760
      %v401 = vsub.f32 %v86, %v400
      %402 = vmatpush1.msra.mxu0 %v401
      %403 = vmatprep.subr.mxu0 0.0
      %v404 = vand.u32 %v85, 4294901760
      %v405 = vsub.f32 %v85, %v404
      %406 = vmatpush1.msra.mxu0 %v405
      %407 = vmatprep.subr.mxu0 0.0
      %v408 = vand.u32 %v84, 4294901760
      %v409 = vsub.f32 %v84, %v408
      %410 = vmatpush1.msra.mxu0 %v409
      %411 = vmatprep.subr.mxu0 0.0
      %v412 = vand.u32 %v83, 4294901760
      %v413 = vsub.f32 %v83, %v412
      %414 = vmatpush1.msra.mxu0 %v413
      %415 = vmatprep.subr.mxu0 0.0
      %416 = vmatpush2.msra.mxu0 0.0
      %417 = vmatprep.subr.mxu0 0.0
      %418 = vmatpush2.msra.mxu0 0.0
      %419 = vmatprep.subr.mxu0 0.0
      %420 = vmatpush2.msra.mxu0 0.0
      %421 = vmatprep.subr.mxu0 0.0
      %422 = vmatpush2.msra.mxu0 0.0
      %423 = vmatprep.subr.mxu0 0.0
      %424 = vmatpush2.msra.mxu0 0.0
      %425 = vmatprep.subr.mxu0 0.0
      %426 = vmatpush2.msra.mxu0 0.0
      %427 = vmatprep.subr.mxu0 0.0
      %428 = vmatpush2.msra.mxu0 0.0
      %429 = vmatprep.subr.mxu0 0.0
      %430 = vmatpush2.msra.mxu0 0.0
      %431 = vmatprep.subr.mxu0 0.0
      %432 = vmatpush2.msra.mxu0 0.0
      %433 = vmatprep.subr.mxu0 0.0
      %434 = vmatpush2.msra.mxu0 0.0
      %435 = vmatprep.subr.mxu0 0.0
      %436 = vmatpush2.msra.mxu0 0.0
      %437 = vmatprep.subr.mxu0 0.0
      %438 = vmatpush2.msra.mxu0 0.0
      %439 = vmatprep.subr.mxu0 0.0
      %440 = vmatpush2.msra.mxu0 0.0
      %441 = vmatprep.subr.mxu0 0.0
      %442 = vmatpush2.msra.mxu0 0.0
      %443 = vmatprep.subr.mxu0 0.0
      %444 = vmatpush2.msra.mxu0 0.0
      %445 = vmatprep.subr.mxu0 0.0
      %446 = vmatpush2.msra.mxu0 0.0
      %447 = vmatprep.mubr.f32.mxu0 0.0
      %v448 = vand.u32 %v82, 4294901760
      %v449 = vsub.f32 %v82, %v448
      %450 = vmatmul.mubr.f32.gmra.mxu0 %v449
      %v451 = vpop.f32.mrf.mxu0
      %v452 = vadd.f32 %v348, %v451
      %v453 = vpop.f32.mrf.mxu0
      %454 = vdwg.mxu0
      %455 = vmatprep.subr.mxu0 0.0
      %v456 = vand.u32 %v98, 4294901760
      %457 = vmatpush1.msra.mxu0 %v456
      %458 = vmatprep.subr.mxu0 0.0
      %v459 = vand.u32 %v97, 4294901760
      %460 = vmatpush1.msra.mxu0 %v459
      %461 = vmatprep.subr.mxu0 0.0
      %v462 = vand.u32 %v96, 4294901760
      %463 = vmatpush1.msra.mxu0 %v462
      %464 = vmatprep.subr.mxu0 0.0
      %v465 = vand.u32 %v95, 4294901760
      %466 = vmatpush1.msra.mxu0 %v465
      %467 = vmatprep.subr.mxu0 0.0
      %v468 = vand.u32 %v94, 4294901760
      %469 = vmatpush1.msra.mxu0 %v468
      %470 = vmatprep.subr.mxu0 0.0
      %v471 = vand.u32 %v93, 4294901760
      %472 = vmatpush1.msra.mxu0 %v471
      %473 = vmatprep.subr.mxu0 0.0
      %v474 = vand.u32 %v92, 4294901760
      %475 = vmatpush1.msra.mxu0 %v474
      %476 = vmatprep.subr.mxu0 0.0
      %v477 = vand.u32 %v91, 4294901760
      %478 = vmatpush1.msra.mxu0 %v477
      %479 = vmatprep.subr.mxu0 0.0
      %v480 = vand.u32 %v90, 4294901760
      %481 = vmatpush1.msra.mxu0 %v480
      %482 = vmatprep.subr.mxu0 0.0
      %v483 = vand.u32 %v89, 4294901760
      %484 = vmatpush1.msra.mxu0 %v483
      %485 = vmatprep.subr.mxu0 0.0
      %v486 = vand.u32 %v88, 4294901760
      %487 = vmatpush1.msra.mxu0 %v486
      %488 = vmatprep.subr.mxu0 0.0
      %v489 = vand.u32 %v87, 4294901760
      %490 = vmatpush1.msra.mxu0 %v489
      %491 = vmatprep.subr.mxu0 0.0
      %v492 = vand.u32 %v86, 4294901760
      %493 = vmatpush1.msra.mxu0 %v492
      %494 = vmatprep.subr.mxu0 0.0
      %v495 = vand.u32 %v85, 4294901760
      %496 = vmatpush1.msra.mxu0 %v495
      %497 = vmatprep.subr.mxu0 0.0
      %v498 = vand.u32 %v84, 4294901760
      %499 = vmatpush1.msra.mxu0 %v498
      %500 = vmatprep.subr.mxu0 0.0
      %v501 = vand.u32 %v83, 4294901760
      %502 = vmatpush1.msra.mxu0 %v501
      %503 = vmatprep.subr.mxu0 0.0
      %504 = vmatpush2.msra.mxu0 0.0
      %505 = vmatprep.subr.mxu0 0.0
      %506 = vmatpush2.msra.mxu0 0.0
      %507 = vmatprep.subr.mxu0 0.0
      %508 = vmatpush2.msra.mxu0 0.0
      %509 = vmatprep.subr.mxu0 0.0
      %510 = vmatpush2.msra.mxu0 0.0
      %511 = vmatprep.subr.mxu0 0.0
      %512 = vmatpush2.msra.mxu0 0.0
      %513 = vmatprep.subr.mxu0 0.0
      %514 = vmatpush2.msra.mxu0 0.0
      %515 = vmatprep.subr.mxu0 0.0
      %516 = vmatpush2.msra.mxu0 0.0
      %517 = vmatprep.subr.mxu0 0.0
      %518 = vmatpush2.msra.mxu0 0.0
      %519 = vmatprep.subr.mxu0 0.0
      %520 = vmatpush2.msra.mxu0 0.0
      %521 = vmatprep.subr.mxu0 0.0
      %522 = vmatpush2.msra.mxu0 0.0
      %523 = vmatprep.subr.mxu0 0.0
      %524 = vmatpush2.msra.mxu0 0.0
      %525 = vmatprep.subr.mxu0 0.0
      %526 = vmatpush2.msra.mxu0 0.0
      %527 = vmatprep.subr.mxu0 0.0
      %528 = vmatpush2.msra.mxu0 0.0
      %529 = vmatprep.subr.mxu0 0.0
      %530 = vmatpush2.msra.mxu0 0.0
      %531 = vmatprep.subr.mxu0 0.0
      %532 = vmatpush2.msra.mxu0 0.0
      %533 = vmatprep.subr.mxu0 0.0
      %534 = vmatpush2.msra.mxu0 0.0
      %535 = vmatprep.mubr.f32.mxu0 0.0
      %v536 = vand.u32 %v82, 4294901760
      %v537 = vsub.f32 %v82, %v536
      %v538 = vand.u32 %v537, 4294901760
      %539 = vmatmul.mubr.f32.gmra.mxu0 %v538
      %v540 = vpop.f32.mrf.mxu0
      %v541 = vadd.f32 %v452, %v540
      %v542 = vpop.f32.mrf.mxu0
      %543 = vdwg.mxu0
      %544 = vmatprep.subr.mxu0 0.0
      %v545 = vand.u32 %v98, 4294901760
      %v546 = vsub.f32 %v98, %v545
      %v547 = vand.u32 %v546, 4294901760
      %548 = vmatpush1.msra.mxu0 %v547
      %549 = vmatprep.subr.mxu0 0.0
      %v550 = vand.u32 %v97, 4294901760
      %v551 = vsub.f32 %v97, %v550
      %v552 = vand.u32 %v551, 4294901760
      %553 = vmatpush1.msra.mxu0 %v552
      %554 = vmatprep.subr.mxu0 0.0
      %v555 = vand.u32 %v96, 4294901760
      %v556 = vsub.f32 %v96, %v555
      %v557 = vand.u32 %v556, 4294901760
      %558 = vmatpush1.msra.mxu0 %v557
      %559 = vmatprep.subr.mxu0 0.0
      %v560 = vand.u32 %v95, 4294901760
      %v561 = vsub.f32 %v95, %v560
      %v562 = vand.u32 %v561, 4294901760
      %563 = vmatpush1.msra.mxu0 %v562
      %564 = vmatprep.subr.mxu0 0.0
      %v565 = vand.u32 %v94, 4294901760
      %v566 = vsub.f32 %v94, %v565
      %v567 = vand.u32 %v566, 4294901760
      %568 = vmatpush1.msra.mxu0 %v567
      %569 = vmatprep.subr.mxu0 0.0
      %v570 = vand.u32 %v93, 4294901760
      %v571 = vsub.f32 %v93, %v570
      %v572 = vand.u32 %v571, 4294901760
      %573 = vmatpush1.msra.mxu0 %v572
      %574 = vmatprep.subr.mxu0 0.0
      %v575 = vand.u32 %v92, 4294901760
      %v576 = vsub.f32 %v92, %v575
      %v577 = vand.u32 %v576, 4294901760
      %578 = vmatpush1.msra.mxu0 %v577
      %579 = vmatprep.subr.mxu0 0.0
      %v580 = vand.u32 %v91, 4294901760
      %v581 = vsub.f32 %v91, %v580
      %v582 = vand.u32 %v581, 4294901760
      %583 = vmatpush1.msra.mxu0 %v582
      %584 = vmatprep.subr.mxu0 0.0
      %v585 = vand.u32 %v90, 4294901760
      %v586 = vsub.f32 %v90, %v585
      %v587 = vand.u32 %v586, 4294901760
      %588 = vmatpush1.msra.mxu0 %v587
      %589 = vmatprep.subr.mxu0 0.0
      %v590 = vand.u32 %v89, 4294901760
      %v591 = vsub.f32 %v89, %v590
      %v592 = vand.u32 %v591, 4294901760
      %593 = vmatpush1.msra.mxu0 %v592
      %594 = vmatprep.subr.mxu0 0.0
      %v595 = vand.u32 %v88, 4294901760
      %v596 = vsub.f32 %v88, %v595
      %v597 = vand.u32 %v596, 4294901760
      %598 = vmatpush1.msra.mxu0 %v597
      %599 = vmatprep.subr.mxu0 0.0
      %v600 = vand.u32 %v87, 4294901760
      %v601 = vsub.f32 %v87, %v600
      %v602 = vand.u32 %v601, 4294901760
      %603 = vmatpush1.msra.mxu0 %v602
      %604 = vmatprep.subr.mxu0 0.0
      %v605 = vand.u32 %v86, 4294901760
      %v606 = vsub.f32 %v86, %v605
      %v607 = vand.u32 %v606, 4294901760
      %608 = vmatpush1.msra.mxu0 %v607
      %609 = vmatprep.subr.mxu0 0.0
      %v610 = vand.u32 %v85, 4294901760
      %v611 = vsub.f32 %v85, %v610
      %v612 = vand.u32 %v611, 4294901760
      %613 = vmatpush1.msra.mxu0 %v612
      %614 = vmatprep.subr.mxu0 0.0
      %v615 = vand.u32 %v84, 4294901760
      %v616 = vsub.f32 %v84, %v615
      %v617 = vand.u32 %v616, 4294901760
      %618 = vmatpush1.msra.mxu0 %v617
      %619 = vmatprep.subr.mxu0 0.0
      %v620 = vand.u32 %v83, 4294901760
      %v621 = vsub.f32 %v83, %v620
      %v622 = vand.u32 %v621, 4294901760
      %623 = vmatpush1.msra.mxu0 %v622
      %624 = vmatprep.subr.mxu0 0.0
      %625 = vmatpush2.msra.mxu0 0.0
      %626 = vmatprep.subr.mxu0 0.0
      %627 = vmatpush2.msra.mxu0 0.0
      %628 = vmatprep.subr.mxu0 0.0
      %629 = vmatpush2.msra.mxu0 0.0
      %630 = vmatprep.subr.mxu0 0.0
      %631 = vmatpush2.msra.mxu0 0.0
      %632 = vmatprep.subr.mxu0 0.0
      %633 = vmatpush2.msra.mxu0 0.0
      %634 = vmatprep.subr.mxu0 0.0
      %635 = vmatpush2.msra.mxu0 0.0
      %636 = vmatprep.subr.mxu0 0.0
      %637 = vmatpush2.msra.mxu0 0.0
      %638 = vmatprep.subr.mxu0 0.0
      %639 = vmatpush2.msra.mxu0 0.0
      %640 = vmatprep.subr.mxu0 0.0
      %641 = vmatpush2.msra.mxu0 0.0
      %642 = vmatprep.subr.mxu0 0.0
      %643 = vmatpush2.msra.mxu0 0.0
      %644 = vmatprep.subr.mxu0 0.0
      %645 = vmatpush2.msra.mxu0 0.0
      %646 = vmatprep.subr.mxu0 0.0
      %647 = vmatpush2.msra.mxu0 0.0
      %648 = vmatprep.subr.mxu0 0.0
      %649 = vmatpush2.msra.mxu0 0.0
      %650 = vmatprep.subr.mxu0 0.0
      %651 = vmatpush2.msra.mxu0 0.0
      %652 = vmatprep.subr.mxu0 0.0
      %653 = vmatpush2.msra.mxu0 0.0
      %654 = vmatprep.subr.mxu0 0.0
      %655 = vmatpush2.msra.mxu0 0.0
      %656 = vmatprep.mubr.f32.mxu0 0.0
      %v657 = vand.u32 %v82, 4294901760
      %658 = vmatmul.mubr.f32.gmra.mxu0 %v657
      %v659 = vpop.f32.mrf.mxu0
      %v660 = vadd.f32 %v541, %v659
      %v661 = vpop.f32.mrf.mxu0
      %662 = vdwg.mxu0
      %663 = vmatprep.subr.mxu0 0.0
      %v664 = vand.u32 %v98, 4294901760
      %665 = vmatpush1.msra.mxu0 %v664
      %666 = vmatprep.subr.mxu0 0.0
      %v667 = vand.u32 %v97, 4294901760
      %668 = vmatpush1.msra.mxu0 %v667
      %669 = vmatprep.subr.mxu0 0.0
      %v670 = vand.u32 %v96, 4294901760
      %671 = vmatpush1.msra.mxu0 %v670
      %672 = vmatprep.subr.mxu0 0.0
      %v673 = vand.u32 %v95, 4294901760
      %674 = vmatpush1.msra.mxu0 %v673
      %675 = vmatprep.subr.mxu0 0.0
      %v676 = vand.u32 %v94, 4294901760
      %677 = vmatpush1.msra.mxu0 %v676
      %678 = vmatprep.subr.mxu0 0.0
      %v679 = vand.u32 %v93, 4294901760
      %680 = vmatpush1.msra.mxu0 %v679
      %681 = vmatprep.subr.mxu0 0.0
      %v682 = vand.u32 %v92, 4294901760
      %683 = vmatpush1.msra.mxu0 %v682
      %684 = vmatprep.subr.mxu0 0.0
      %v685 = vand.u32 %v91, 4294901760
      %686 = vmatpush1.msra.mxu0 %v685
      %687 = vmatprep.subr.mxu0 0.0
      %v688 = vand.u32 %v90, 4294901760
      %689 = vmatpush1.msra.mxu0 %v688
      %690 = vmatprep.subr.mxu0 0.0
      %v691 = vand.u32 %v89, 4294901760
      %692 = vmatpush1.msra.mxu0 %v691
      %693 = vmatprep.subr.mxu0 0.0
      %v694 = vand.u32 %v88, 4294901760
      %695 = vmatpush1.msra.mxu0 %v694
      %696 = vmatprep.subr.mxu0 0.0
      %v697 = vand.u32 %v87, 4294901760
      %698 = vmatpush1.msra.mxu0 %v697
      %699 = vmatprep.subr.mxu0 0.0
      %v700 = vand.u32 %v86, 4294901760
      %701 = vmatpush1.msra.mxu0 %v700
      %702 = vmatprep.subr.mxu0 0.0
      %v703 = vand.u32 %v85, 4294901760
      %704 = vmatpush1.msra.mxu0 %v703
      %705 = vmatprep.subr.mxu0 0.0
      %v706 = vand.u32 %v84, 4294901760
      %707 = vmatpush1.msra.mxu0 %v706
      %708 = vmatprep.subr.mxu0 0.0
      %v709 = vand.u32 %v83, 4294901760
      %710 = vmatpush1.msra.mxu0 %v709
      %711 = vmatprep.subr.mxu0 0.0
      %712 = vmatpush2.msra.mxu0 0.0
      %713 = vmatprep.subr.mxu0 0.0
      %714 = vmatpush2.msra.mxu0 0.0
      %715 = vmatprep.subr.mxu0 0.0
      %716 = vmatpush2.msra.mxu0 0.0
      %717 = vmatprep.subr.mxu0 0.0
      %718 = vmatpush2.msra.mxu0 0.0
      %719 = vmatprep.subr.mxu0 0.0
      %720 = vmatpush2.msra.mxu0 0.0
      %721 = vmatprep.subr.mxu0 0.0
      %722 = vmatpush2.msra.mxu0 0.0
      %723 = vmatprep.subr.mxu0 0.0
      %724 = vmatpush2.msra.mxu0 0.0
      %725 = vmatprep.subr.mxu0 0.0
      %726 = vmatpush2.msra.mxu0 0.0
      %727 = vmatprep.subr.mxu0 0.0
      %728 = vmatpush2.msra.mxu0 0.0
      %729 = vmatprep.subr.mxu0 0.0
      %730 = vmatpush2.msra.mxu0 0.0
      %731 = vmatprep.subr.mxu0 0.0
      %732 = vmatpush2.msra.mxu0 0.0
      %733 = vmatprep.subr.mxu0 0.0
      %734 = vmatpush2.msra.mxu0 0.0
      %735 = vmatprep.subr.mxu0 0.0
      %736 = vmatpush2.msra.mxu0 0.0
      %737 = vmatprep.subr.mxu0 0.0
      %738 = vmatpush2.msra.mxu0 0.0
      %739 = vmatprep.subr.mxu0 0.0
      %740 = vmatpush2.msra.mxu0 0.0
      %741 = vmatprep.subr.mxu0 0.0
      %742 = vmatpush2.msra.mxu0 0.0
      %743 = vmatprep.mubr.f32.mxu0 0.0
      %v744 = vand.u32 %v82, 4294901760
      %745 = vmatmul.mubr.f32.gmra.mxu0 %v744
      %v746 = vpop.f32.mrf.mxu0
      %v747 = vadd.f32 %v660, %v746
      %v748 = vpop.f32.mrf.mxu0
      %749 = vdwg.mxu0
      %v750 = vxor.u32 %v747, 2147483648
      %v751 = vmul.f32 %v750, 1.442695
      %v752 = vpow.pop %v751
      %v753 = vadd.f32 %v752, 1.0
      %v754 = vrcp.pop %v753
      %v755 = vmul.f32 1.0, %v754
      %v756 = vld [vmem:[%s3] sm:$0xf]
      %vm757 = vcmask 31744
      %v759 = vsel %vm757, %v755, 0
      %vm761 = vcmask 1043456
      %v763 = vsel %vm761, %v756, 0
      %765 = vmatprep.subr.mxu0 0.0
      %766 = vmatpush1.msra.mxu0 0.0
      %767 = vmatprep.subr.mxu0 0.0
      %768 = vmatpush1.msra.mxu0 0.0
      %769 = vmatprep.subr.mxu0 0.0
      %770 = vmatpush1.msra.mxu0 0.0
      %771 = vmatprep.subr.mxu0 0.0
      %772 = vmatpush1.msra.mxu0 0.0
      %773 = vmatprep.subr.mxu0 0.0
      %774 = vmatpush1.msra.mxu0 0.0
      %775 = vmatprep.subr.mxu0 0.0
      %776 = vmatpush1.msra.mxu0 0.0
      %777 = vmatprep.subr.mxu0 0.0
      %778 = vmatpush1.msra.mxu0 0.0
      %779 = vmatprep.subr.mxu0 0.0
      %780 = vmatpush1.msra.mxu0 0.0
      %781 = vmatprep.subr.mxu0 0.0
      %782 = vmatpush1.msra.mxu0 0.0
      %783 = vmatprep.subr.mxu0 0.0
      %784 = vmatpush1.msra.mxu0 0.0
      %785 = vmatprep.subr.mxu0 0.0
      %786 = vmatpush1.msra.mxu0 0.0
      %787 = vmatprep.subr.mxu0 0.0
      %788 = vmatpush1.msra.mxu0 0.0
      %789 = vmatprep.subr.mxu0 0.0
      %790 = vmatpush1.msra.mxu0 0.0
      %791 = vmatprep.subr.mxu0 0.0
      %792 = vmatpush1.msra.mxu0 0.0
      %793 = vmatprep.subr.mxu0 0.0
      %794 = vmatpush1.msra.mxu0 0.0
      %795 = vmatprep.subr.mxu0 0.0
      %v796 = vand.u32 %v763, 4294901760
      %797 = vmatpush1.msra.mxu0 %v796
      %798 = vmatprep.subr.mxu0 0.0
      %799 = vmatpush2.msra.mxu0 0.0
      %800 = vmatprep.subr.mxu0 0.0
      %801 = vmatpush2.msra.mxu0 0.0
      %802 = vmatprep.subr.mxu0 0.0
      %803 = vmatpush2.msra.mxu0 0.0
      %804 = vmatprep.subr.mxu0 0.0
      %805 = vmatpush2.msra.mxu0 0.0
      %806 = vmatprep.subr.mxu0 0.0
      %807 = vmatpush2.msra.mxu0 0.0
      %808 = vmatprep.subr.mxu0 0.0
      %809 = vmatpush2.msra.mxu0 0.0
      %810 = vmatprep.subr.mxu0 0.0
      %811 = vmatpush2.msra.mxu0 0.0
      %812 = vmatprep.subr.mxu0 0.0
      %813 = vmatpush2.msra.mxu0 0.0
      %814 = vmatprep.subr.mxu0 0.0
      %815 = vmatpush2.msra.mxu0 0.0
      %816 = vmatprep.subr.mxu0 0.0
      %817 = vmatpush2.msra.mxu0 0.0
      %818 = vmatprep.subr.mxu0 0.0
      %819 = vmatpush2.msra.mxu0 0.0
      %820 = vmatprep.subr.mxu0 0.0
      %821 = vmatpush2.msra.mxu0 0.0
      %822 = vmatprep.subr.mxu0 0.0
      %823 = vmatpush2.msra.mxu0 0.0
      %824 = vmatprep.subr.mxu0 0.0
      %825 = vmatpush2.msra.mxu0 0.0
      %826 = vmatprep.subr.mxu0 0.0
      %827 = vmatpush2.msra.mxu0 0.0
      %828 = vmatprep.subr.mxu0 0.0
      %829 = vmatpush2.msra.mxu0 0.0
      %830 = vmatprep.mubr.f32.mxu0 0.0
      %v831 = vand.u32 %v759, 4294901760
      %v832 = vsub.f32 %v759, %v831
      %v833 = vand.u32 %v832, 4294901760
      %v834 = vsub.f32 %v832, %v833
      %v835 = vand.u32 %v834, 4294901760
      %836 = vmatmul.mubr.f32.gmra.mxu0 %v835
      %v837 = vpop.f32.mrf.mxu0
      %v838 = vadd.f32 0.0, %v837
      %v839 = vpop.f32.mrf.mxu0
      %840 = vdwg.mxu0
      %841 = vmatprep.subr.mxu0 0.0
      %842 = vmatpush1.msra.mxu0 0.0
      %843 = vmatprep.subr.mxu0 0.0
      %844 = vmatpush1.msra.mxu0 0.0
      %845 = vmatprep.subr.mxu0 0.0
      %846 = vmatpush1.msra.mxu0 0.0
      %847 = vmatprep.subr.mxu0 0.0
      %848 = vmatpush1.msra.mxu0 0.0
      %849 = vmatprep.subr.mxu0 0.0
      %850 = vmatpush1.msra.mxu0 0.0
      %851 = vmatprep.subr.mxu0 0.0
      %852 = vmatpush1.msra.mxu0 0.0
      %853 = vmatprep.subr.mxu0 0.0
      %854 = vmatpush1.msra.mxu0 0.0
      %855 = vmatprep.subr.mxu0 0.0
      %856 = vmatpush1.msra.mxu0 0.0
      %857 = vmatprep.subr.mxu0 0.0
      %858 = vmatpush1.msra.mxu0 0.0
      %859 = vmatprep.subr.mxu0 0.0
      %860 = vmatpush1.msra.mxu0 0.0
      %861 = vmatprep.subr.mxu0 0.0
      %862 = vmatpush1.msra.mxu0 0.0
      %863 = vmatprep.subr.mxu0 0.0
      %864 = vmatpush1.msra.mxu0 0.0
      %865 = vmatprep.subr.mxu0 0.0
      %866 = vmatpush1.msra.mxu0 0.0
      %867 = vmatprep.subr.mxu0 0.0
      %868 = vmatpush1.msra.mxu0 0.0
      %869 = vmatprep.subr.mxu0 0.0
      %870 = vmatpush1.msra.mxu0 0.0
      %871 = vmatprep.subr.mxu0 0.0
      %v872 = vand.u32 %v763, 4294901760
      %v873 = vsub.f32 %v763, %v872
      %v874 = vand.u32 %v873, 4294901760
      %v875 = vsub.f32 %v873, %v874
      %v876 = vand.u32 %v875, 4294901760
      %877 = vmatpush1.msra.mxu0 %v876
      %878 = vmatprep.subr.mxu0 0.0
      %879 = vmatpush2.msra.mxu0 0.0
      %880 = vmatprep.subr.mxu0 0.0
      %881 = vmatpush2.msra.mxu0 0.0
      %882 = vmatprep.subr.mxu0 0.0
      %883 = vmatpush2.msra.mxu0 0.0
      %884 = vmatprep.subr.mxu0 0.0
      %885 = vmatpush2.msra.mxu0 0.0
      %886 = vmatprep.subr.mxu0 0.0
      %887 = vmatpush2.msra.mxu0 0.0
      %888 = vmatprep.subr.mxu0 0.0
      %889 = vmatpush2.msra.mxu0 0.0
      %890 = vmatprep.subr.mxu0 0.0
      %891 = vmatpush2.msra.mxu0 0.0
      %892 = vmatprep.subr.mxu0 0.0
      %893 = vmatpush2.msra.mxu0 0.0
      %894 = vmatprep.subr.mxu0 0.0
      %895 = vmatpush2.msra.mxu0 0.0
      %896 = vmatprep.subr.mxu0 0.0
      %897 = vmatpush2.msra.mxu0 0.0
      %898 = vmatprep.subr.mxu0 0.0
      %899 = vmatpush2.msra.mxu0 0.0
      %900 = vmatprep.subr.mxu0 0.0
      %901 = vmatpush2.msra.mxu0 0.0
      %902 = vmatprep.subr.mxu0 0.0
      %903 = vmatpush2.msra.mxu0 0.0
      %904 = vmatprep.subr.mxu0 0.0
      %905 = vmatpush2.msra.mxu0 0.0
      %906 = vmatprep.subr.mxu0 0.0
      %907 = vmatpush2.msra.mxu0 0.0
      %908 = vmatprep.subr.mxu0 0.0
      %909 = vmatpush2.msra.mxu0 0.0
      %910 = vmatprep.mubr.f32.mxu0 0.0
      %v911 = vand.u32 %v759, 4294901760
      %912 = vmatmul.mubr.f32.gmra.mxu0 %v911
      %v913 = vpop.f32.mrf.mxu0
      %v914 = vadd.f32 %v838, %v913
      %v915 = vpop.f32.mrf.mxu0
      %916 = vdwg.mxu0
      %917 = vmatprep.subr.mxu0 0.0
      %918 = vmatpush1.msra.mxu0 0.0
      %919 = vmatprep.subr.mxu0 0.0
      %920 = vmatpush1.msra.mxu0 0.0
      %921 = vmatprep.subr.mxu0 0.0
      %922 = vmatpush1.msra.mxu0 0.0
      %923 = vmatprep.subr.mxu0 0.0
      %924 = vmatpush1.msra.mxu0 0.0
      %925 = vmatprep.subr.mxu0 0.0
      %926 = vmatpush1.msra.mxu0 0.0
      %927 = vmatprep.subr.mxu0 0.0
      %928 = vmatpush1.msra.mxu0 0.0
      %929 = vmatprep.subr.mxu0 0.0
      %930 = vmatpush1.msra.mxu0 0.0
      %931 = vmatprep.subr.mxu0 0.0
      %932 = vmatpush1.msra.mxu0 0.0
      %933 = vmatprep.subr.mxu0 0.0
      %934 = vmatpush1.msra.mxu0 0.0
      %935 = vmatprep.subr.mxu0 0.0
      %936 = vmatpush1.msra.mxu0 0.0
      %937 = vmatprep.subr.mxu0 0.0
      %938 = vmatpush1.msra.mxu0 0.0
      %939 = vmatprep.subr.mxu0 0.0
      %940 = vmatpush1.msra.mxu0 0.0
      %941 = vmatprep.subr.mxu0 0.0
      %942 = vmatpush1.msra.mxu0 0.0
      %943 = vmatprep.subr.mxu0 0.0
      %944 = vmatpush1.msra.mxu0 0.0
      %945 = vmatprep.subr.mxu0 0.0
      %946 = vmatpush1.msra.mxu0 0.0
      %947 = vmatprep.subr.mxu0 0.0
      %v948 = vand.u32 %v763, 4294901760
      %v949 = vsub.f32 %v763, %v948
      %950 = vmatpush1.msra.mxu0 %v949
      %951 = vmatprep.subr.mxu0 0.0
      %952 = vmatpush2.msra.mxu0 0.0
      %953 = vmatprep.subr.mxu0 0.0
      %954 = vmatpush2.msra.mxu0 0.0
      %955 = vmatprep.subr.mxu0 0.0
      %956 = vmatpush2.msra.mxu0 0.0
      %957 = vmatprep.subr.mxu0 0.0
      %958 = vmatpush2.msra.mxu0 0.0
      %959 = vmatprep.subr.mxu0 0.0
      %960 = vmatpush2.msra.mxu0 0.0
      %961 = vmatprep.subr.mxu0 0.0
      %962 = vmatpush2.msra.mxu0 0.0
      %963 = vmatprep.subr.mxu0 0.0
      %964 = vmatpush2.msra.mxu0 0.0
      %965 = vmatprep.subr.mxu0 0.0
      %966 = vmatpush2.msra.mxu0 0.0
      %967 = vmatprep.subr.mxu0 0.0
      %968 = vmatpush2.msra.mxu0 0.0
      %969 = vmatprep.subr.mxu0 0.0
      %970 = vmatpush2.msra.mxu0 0.0
      %971 = vmatprep.subr.mxu0 0.0
      %972 = vmatpush2.msra.mxu0 0.0
      %973 = vmatprep.subr.mxu0 0.0
      %974 = vmatpush2.msra.mxu0 0.0
      %975 = vmatprep.subr.mxu0 0.0
      %976 = vmatpush2.msra.mxu0 0.0
      %977 = vmatprep.subr.mxu0 0.0
      %978 = vmatpush2.msra.mxu0 0.0
      %979 = vmatprep.subr.mxu0 0.0
      %980 = vmatpush2.msra.mxu0 0.0
      %981 = vmatprep.subr.mxu0 0.0
      %982 = vmatpush2.msra.mxu0 0.0
      %983 = vmatprep.mubr.f32.mxu0 0.0
      %v984 = vand.u32 %v759, 4294901760
      %v985 = vsub.f32 %v759, %v984
      %986 = vmatmul.mubr.f32.gmra.mxu0 %v985
      %v987 = vpop.f32.mrf.mxu0
      %v988 = vadd.f32 %v914, %v987
      %v989 = vpop.f32.mrf.mxu0
      %990 = vdwg.mxu0
      %991 = vmatprep.subr.mxu0 0.0
      %992 = vmatpush1.msra.mxu0 0.0
      %993 = vmatprep.subr.mxu0 0.0
      %994 = vmatpush1.msra.mxu0 0.0
      %995 = vmatprep.subr.mxu0 0.0
      %996 = vmatpush1.msra.mxu0 0.0
      %997 = vmatprep.subr.mxu0 0.0
      %998 = vmatpush1.msra.mxu0 0.0
      %999 = vmatprep.subr.mxu0 0.0
      %1000 = vmatpush1.msra.mxu0 0.0
      %1001 = vmatprep.subr.mxu0 0.0
      %1002 = vmatpush1.msra.mxu0 0.0
      %1003 = vmatprep.subr.mxu0 0.0
      %1004 = vmatpush1.msra.mxu0 0.0
      %1005 = vmatprep.subr.mxu0 0.0
      %1006 = vmatpush1.msra.mxu0 0.0
      %1007 = vmatprep.subr.mxu0 0.0
      %1008 = vmatpush1.msra.mxu0 0.0
      %1009 = vmatprep.subr.mxu0 0.0
      %1010 = vmatpush1.msra.mxu0 0.0
      %1011 = vmatprep.subr.mxu0 0.0
      %1012 = vmatpush1.msra.mxu0 0.0
      %1013 = vmatprep.subr.mxu0 0.0
      %1014 = vmatpush1.msra.mxu0 0.0
      %1015 = vmatprep.subr.mxu0 0.0
      %1016 = vmatpush1.msra.mxu0 0.0
      %1017 = vmatprep.subr.mxu0 0.0
      %1018 = vmatpush1.msra.mxu0 0.0
      %1019 = vmatprep.subr.mxu0 0.0
      %1020 = vmatpush1.msra.mxu0 0.0
      %1021 = vmatprep.subr.mxu0 0.0
      %v1022 = vand.u32 %v763, 4294901760
      %1023 = vmatpush1.msra.mxu0 %v1022
      %1024 = vmatprep.subr.mxu0 0.0
      %1025 = vmatpush2.msra.mxu0 0.0
      %1026 = vmatprep.subr.mxu0 0.0
      %1027 = vmatpush2.msra.mxu0 0.0
      %1028 = vmatprep.subr.mxu0 0.0
      %1029 = vmatpush2.msra.mxu0 0.0
      %1030 = vmatprep.subr.mxu0 0.0
      %1031 = vmatpush2.msra.mxu0 0.0
      %1032 = vmatprep.subr.mxu0 0.0
      %1033 = vmatpush2.msra.mxu0 0.0
      %1034 = vmatprep.subr.mxu0 0.0
      %1035 = vmatpush2.msra.mxu0 0.0
      %1036 = vmatprep.subr.mxu0 0.0
      %1037 = vmatpush2.msra.mxu0 0.0
      %1038 = vmatprep.subr.mxu0 0.0
      %1039 = vmatpush2.msra.mxu0 0.0
      %1040 = vmatprep.subr.mxu0 0.0
      %1041 = vmatpush2.msra.mxu0 0.0
      %1042 = vmatprep.subr.mxu0 0.0
      %1043 = vmatpush2.msra.mxu0 0.0
      %1044 = vmatprep.subr.mxu0 0.0
      %1045 = vmatpush2.msra.mxu0 0.0
      %1046 = vmatprep.subr.mxu0 0.0
      %1047 = vmatpush2.msra.mxu0 0.0
      %1048 = vmatprep.subr.mxu0 0.0
      %1049 = vmatpush2.msra.mxu0 0.0
      %1050 = vmatprep.subr.mxu0 0.0
      %1051 = vmatpush2.msra.mxu0 0.0
      %1052 = vmatprep.subr.mxu0 0.0
      %1053 = vmatpush2.msra.mxu0 0.0
      %1054 = vmatprep.subr.mxu0 0.0
      %1055 = vmatpush2.msra.mxu0 0.0
      %1056 = vmatprep.mubr.f32.mxu0 0.0
      %v1057 = vand.u32 %v759, 4294901760
      %v1058 = vsub.f32 %v759, %v1057
      %v1059 = vand.u32 %v1058, 4294901760
      %1060 = vmatmul.mubr.f32.gmra.mxu0 %v1059
      %v1061 = vpop.f32.mrf.mxu0
      %v1062 = vadd.f32 %v988, %v1061
      %v1063 = vpop.f32.mrf.mxu0
      %1064 = vdwg.mxu0
      %1065 = vmatprep.subr.mxu0 0.0
      %1066 = vmatpush1.msra.mxu0 0.0
      %1067 = vmatprep.subr.mxu0 0.0
      %1068 = vmatpush1.msra.mxu0 0.0
      %1069 = vmatprep.subr.mxu0 0.0
      %1070 = vmatpush1.msra.mxu0 0.0
      %1071 = vmatprep.subr.mxu0 0.0
      %1072 = vmatpush1.msra.mxu0 0.0
      %1073 = vmatprep.subr.mxu0 0.0
      %1074 = vmatpush1.msra.mxu0 0.0
      %1075 = vmatprep.subr.mxu0 0.0
      %1076 = vmatpush1.msra.mxu0 0.0
      %1077 = vmatprep.subr.mxu0 0.0
      %1078 = vmatpush1.msra.mxu0 0.0
      %1079 = vmatprep.subr.mxu0 0.0
      %1080 = vmatpush1.msra.mxu0 0.0
      %1081 = vmatprep.subr.mxu0 0.0
      %1082 = vmatpush1.msra.mxu0 0.0
      %1083 = vmatprep.subr.mxu0 0.0
      %1084 = vmatpush1.msra.mxu0 0.0
      %1085 = vmatprep.subr.mxu0 0.0
      %1086 = vmatpush1.msra.mxu0 0.0
      %1087 = vmatprep.subr.mxu0 0.0
      %1088 = vmatpush1.msra.mxu0 0.0
      %1089 = vmatprep.subr.mxu0 0.0
      %1090 = vmatpush1.msra.mxu0 0.0
      %1091 = vmatprep.subr.mxu0 0.0
      %1092 = vmatpush1.msra.mxu0 0.0
      %1093 = vmatprep.subr.mxu0 0.0
      %1094 = vmatpush1.msra.mxu0 0.0
      %1095 = vmatprep.subr.mxu0 0.0
      %v1096 = vand.u32 %v763, 4294901760
      %v1097 = vsub.f32 %v763, %v1096
      %v1098 = vand.u32 %v1097, 4294901760
      %1099 = vmatpush1.msra.mxu0 %v1098
      %1100 = vmatprep.subr.mxu0 0.0
      %1101 = vmatpush2.msra.mxu0 0.0
      %1102 = vmatprep.subr.mxu0 0.0
      %1103 = vmatpush2.msra.mxu0 0.0
      %1104 = vmatprep.subr.mxu0 0.0
      %1105 = vmatpush2.msra.mxu0 0.0
      %1106 = vmatprep.subr.mxu0 0.0
      %1107 = vmatpush2.msra.mxu0 0.0
      %1108 = vmatprep.subr.mxu0 0.0
      %1109 = vmatpush2.msra.mxu0 0.0
      %1110 = vmatprep.subr.mxu0 0.0
      %1111 = vmatpush2.msra.mxu0 0.0
      %1112 = vmatprep.subr.mxu0 0.0
      %1113 = vmatpush2.msra.mxu0 0.0
      %1114 = vmatprep.subr.mxu0 0.0
      %1115 = vmatpush2.msra.mxu0 0.0
      %1116 = vmatprep.subr.mxu0 0.0
      %1117 = vmatpush2.msra.mxu0 0.0
      %1118 = vmatprep.subr.mxu0 0.0
      %1119 = vmatpush2.msra.mxu0 0.0
      %1120 = vmatprep.subr.mxu0 0.0
      %1121 = vmatpush2.msra.mxu0 0.0
      %1122 = vmatprep.subr.mxu0 0.0
      %1123 = vmatpush2.msra.mxu0 0.0
      %1124 = vmatprep.subr.mxu0 0.0
      %1125 = vmatpush2.msra.mxu0 0.0
      %1126 = vmatprep.subr.mxu0 0.0
      %1127 = vmatpush2.msra.mxu0 0.0
      %1128 = vmatprep.subr.mxu0 0.0
      %1129 = vmatpush2.msra.mxu0 0.0
      %1130 = vmatprep.subr.mxu0 0.0
      %1131 = vmatpush2.msra.mxu0 0.0
      %1132 = vmatprep.mubr.f32.mxu0 0.0
      %v1133 = vand.u32 %v759, 4294901760
      %1134 = vmatmul.mubr.f32.gmra.mxu0 %v1133
      %v1135 = vpop.f32.mrf.mxu0
      %v1136 = vadd.f32 %v1062, %v1135
      %v1137 = vpop.f32.mrf.mxu0
      %1138 = vdwg.mxu0
      %1139 = vmatprep.subr.mxu0 0.0
      %1140 = vmatpush1.msra.mxu0 0.0
      %1141 = vmatprep.subr.mxu0 0.0
      %1142 = vmatpush1.msra.mxu0 0.0
      %1143 = vmatprep.subr.mxu0 0.0
      %1144 = vmatpush1.msra.mxu0 0.0
      %1145 = vmatprep.subr.mxu0 0.0
      %1146 = vmatpush1.msra.mxu0 0.0
      %1147 = vmatprep.subr.mxu0 0.0
      %1148 = vmatpush1.msra.mxu0 0.0
      %1149 = vmatprep.subr.mxu0 0.0
      %1150 = vmatpush1.msra.mxu0 0.0
      %1151 = vmatprep.subr.mxu0 0.0
      %1152 = vmatpush1.msra.mxu0 0.0
      %1153 = vmatprep.subr.mxu0 0.0
      %1154 = vmatpush1.msra.mxu0 0.0
      %1155 = vmatprep.subr.mxu0 0.0
      %1156 = vmatpush1.msra.mxu0 0.0
      %1157 = vmatprep.subr.mxu0 0.0
      %1158 = vmatpush1.msra.mxu0 0.0
      %1159 = vmatprep.subr.mxu0 0.0
      %1160 = vmatpush1.msra.mxu0 0.0
      %1161 = vmatprep.subr.mxu0 0.0
      %1162 = vmatpush1.msra.mxu0 0.0
      %1163 = vmatprep.subr.mxu0 0.0
      %1164 = vmatpush1.msra.mxu0 0.0
      %1165 = vmatprep.subr.mxu0 0.0
      %1166 = vmatpush1.msra.mxu0 0.0
      %1167 = vmatprep.subr.mxu0 0.0
      %1168 = vmatpush1.msra.mxu0 0.0
      %1169 = vmatprep.subr.mxu0 0.0
      %v1170 = vand.u32 %v763, 4294901760
      %1171 = vmatpush1.msra.mxu0 %v1170
      %1172 = vmatprep.subr.mxu0 0.0
      %1173 = vmatpush2.msra.mxu0 0.0
      %1174 = vmatprep.subr.mxu0 0.0
      %1175 = vmatpush2.msra.mxu0 0.0
      %1176 = vmatprep.subr.mxu0 0.0
      %1177 = vmatpush2.msra.mxu0 0.0
      %1178 = vmatprep.subr.mxu0 0.0
      %1179 = vmatpush2.msra.mxu0 0.0
      %1180 = vmatprep.subr.mxu0 0.0
      %1181 = vmatpush2.msra.mxu0 0.0
      %1182 = vmatprep.subr.mxu0 0.0
      %1183 = vmatpush2.msra.mxu0 0.0
      %1184 = vmatprep.subr.mxu0 0.0
      %1185 = vmatpush2.msra.mxu0 0.0
      %1186 = vmatprep.subr.mxu0 0.0
      %1187 = vmatpush2.msra.mxu0 0.0
      %1188 = vmatprep.subr.mxu0 0.0
      %1189 = vmatpush2.msra.mxu0 0.0
      %1190 = vmatprep.subr.mxu0 0.0
      %1191 = vmatpush2.msra.mxu0 0.0
      %1192 = vmatprep.subr.mxu0 0.0
      %1193 = vmatpush2.msra.mxu0 0.0
      %1194 = vmatprep.subr.mxu0 0.0
      %1195 = vmatpush2.msra.mxu0 0.0
      %1196 = vmatprep.subr.mxu0 0.0
      %1197 = vmatpush2.msra.mxu0 0.0
      %1198 = vmatprep.subr.mxu0 0.0
      %1199 = vmatpush2.msra.mxu0 0.0
      %1200 = vmatprep.subr.mxu0 0.0
      %1201 = vmatpush2.msra.mxu0 0.0
      %1202 = vmatprep.subr.mxu0 0.0
      %1203 = vmatpush2.msra.mxu0 0.0
      %1204 = vmatprep.mubr.f32.mxu0 0.0
      %v1205 = vand.u32 %v759, 4294901760
      %1206 = vmatmul.mubr.f32.gmra.mxu0 %v1205
      %v1207 = vpop.f32.mrf.mxu0
      %v1208 = vadd.f32 %v1136, %v1207
      %v1209 = vpop.f32.mrf.mxu0
      %1210 = vdwg.mxu0
      %v1211 = vld [vmem:[#allocation2] sm:$0x1]
      %v1212 = vmul.f32 %v1208, %v82
      %v1213 = vrot.slane %v1212, 4
      %v1214 = vadd.f32 %v1212, %v1213
      %v1215 = vrot.slane %v1214, 2
      %v1216 = vadd.f32 %v1214, %v1215
      %v1217 = vrot.slane %v1216, 1
      %v1218 = vadd.f32 %v1216, %v1217
      %v1219 = vadd.f32 %v1211, %v1218
      %1220 = vst [vmem:[#allocation2] sm:$0x1] %v1219
      %v1221 = vld [vmem:[#allocation3] sm:$0x1]
      %v1222 = vsel %vm757, %v755, 0.0
      %v1223 = vrot.slane %v1222, 4
      %v1224 = vadd.f32 %v1222, %v1223
      %v1225 = vrot.slane %v1224, 2
      %v1226 = vadd.f32 %v1224, %v1225
      %v1227 = vrot.slane %v1226, 1
      %v1228 = vadd.f32 %v1226, %v1227
      %v1229 = vadd.f32 %v1221, %v1228
      %vm1230 = vcmask 24576
      %1231 = vst.msk [vmem:[#allocation3] sm:$0x1] %vm1230, %v1229
    $region33: #{tpu_custom_call.1} parent=1 // pred_fallthru
      _
    %p1232 = scmp.gt.s32.totalorder %s77, 3
    // Predicated region
    $region34: #{tpu_custom_call.1} parent=1 // pred_check
      %p1233 = pneg %p1232
    $region35: #{tpu_custom_call.1} parent=1 // pred_check_branch
      %1235 = sbr.rel (%p1233) target = $region37
    $region36: #{tpu_custom_call.1} parent=1 // pred_region
      %s1236 = smul.u32 %s68, 8
      %v1237 = vlaneseq
      %v1238 = vshrl.u32 %v1237, 7
      %v1239 = vstv %s1236
      %v1240 = vadd.s32 %v1239, %v1238
      %vm1241 = vcmp.lt.s32.totalorder %v1240, 3
      %v1242 = vld [vmem:[%s61] sm:$0xff]
      %v1243 = vsel %vm1241, 1, 0
      %vm1244 = vcmp.eq.s32.totalorder %v1243, 1
      %v1245 = vsel %vm1244, %v1242, 0.0
      %v1246 = vld [vmem:[%s1] sm:$0xff]
      %v1247 = vld [vmem:[%s1 + $0x8] sm:$0xff]
      %v1248 = vld [vmem:[%s1 + $0x10] sm:$0xff]
      %v1249 = vld [vmem:[%s1 + $0x18] sm:$0xff]
      %v1250 = vld [vmem:[%s1 + $0x20] sm:$0xff]
      %v1251 = vld [vmem:[%s1 + $0x28] sm:$0xff]
      %v1252 = vld [vmem:[%s1 + $0x30] sm:$0xff]
      %v1253 = vld [vmem:[%s1 + $0x38] sm:$0xff]
      %v1254 = vld [vmem:[%s1 + $0x40] sm:$0xff]
      %v1255 = vld [vmem:[%s1 + $0x48] sm:$0xff]
      %v1256 = vld [vmem:[%s1 + $0x50] sm:$0xff]
      %v1257 = vld [vmem:[%s1 + $0x58] sm:$0xff]
      %v1258 = vld [vmem:[%s1 + $0x60] sm:$0xff]
      %v1259 = vld [vmem:[%s1 + $0x68] sm:$0xff]
      %v1260 = vld [vmem:[%s1 + $0x70] sm:$0xff]
      %v1261 = vld [vmem:[%s1 + $0x78] sm:$0xff]
      %v1262 = vld [vmem:[#allocation4] sm:$0x1]
      %v1264 = vlaneseq
      %v1265 = vshrl.u32 %v1264, 7
      %v1266 = vsub.s32 0, %v1265
      %v1267 = vrot.slane %v1262, %v1266
      %1268 = vset.pattern.permute.xlu0 0
      %1269 = vperm.xlu0 %1268, %v1267
      %v1270 = vpop.permute.xlu0 %1269
      %1272 = vmatprep.subr.mxu0 0.0
      %v1273 = vand.u32 %v1261, 4294901760
      %1274 = vmatpush1.msra.mxu0 %v1273
      %1275 = vmatprep.subr.mxu0 0.0
      %v1276 = vand.u32 %v1260, 4294901760
      %1277 = vmatpush1.msra.mxu0 %v1276
      %1278 = vmatprep.subr.mxu0 0.0
      %v1279 = vand.u32 %v1259, 4294901760
      %1280 = vmatpush1.msra.mxu0 %v1279
      %1281 = vmatprep.subr.mxu0 0.0
      %v1282 = vand.u32 %v1258, 4294901760
      %1283 = vmatpush1.msra.mxu0 %v1282
      %1284 = vmatprep.subr.mxu0 0.0
      %v1285 = vand.u32 %v1257, 4294901760
      %1286 = vmatpush1.msra.mxu0 %v1285
      %1287 = vmatprep.subr.mxu0 0.0
      %v1288 = vand.u32 %v1256, 4294901760
      %1289 = vmatpush1.msra.mxu0 %v1288
      %1290 = vmatprep.subr.mxu0 0.0
      %v1291 = vand.u32 %v1255, 4294901760
      %1292 = vmatpush1.msra.mxu0 %v1291
      %1293 = vmatprep.subr.mxu0 0.0
      %v1294 = vand.u32 %v1254, 4294901760
      %1295 = vmatpush1.msra.mxu0 %v1294
      %1296 = vmatprep.subr.mxu0 0.0
      %v1297 = vand.u32 %v1253, 4294901760
      %1298 = vmatpush1.msra.mxu0 %v1297
      %1299 = vmatprep.subr.mxu0 0.0
      %v1300 = vand.u32 %v1252, 4294901760
      %1301 = vmatpush1.msra.mxu0 %v1300
      %1302 = vmatprep.subr.mxu0 0.0
      %v1303 = vand.u32 %v1251, 4294901760
      %1304 = vmatpush1.msra.mxu0 %v1303
      %1305 = vmatprep.subr.mxu0 0.0
      %v1306 = vand.u32 %v1250, 4294901760
      %1307 = vmatpush1.msra.mxu0 %v1306
      %1308 = vmatprep.subr.mxu0 0.0
      %v1309 = vand.u32 %v1249, 4294901760
      %1310 = vmatpush1.msra.mxu0 %v1309
      %1311 = vmatprep.subr.mxu0 0.0
      %v1312 = vand.u32 %v1248, 4294901760
      %1313 = vmatpush1.msra.mxu0 %v1312
      %1314 = vmatprep.subr.mxu0 0.0
      %v1315 = vand.u32 %v1247, 4294901760
      %1316 = vmatpush1.msra.mxu0 %v1315
      %1317 = vmatprep.subr.mxu0 0.0
      %v1318 = vand.u32 %v1246, 4294901760
      %1319 = vmatpush1.msra.mxu0 %v1318
      %1320 = vmatprep.subr.mxu0 0.0
      %1321 = vmatpush2.msra.mxu0 0.0
      %1322 = vmatprep.subr.mxu0 0.0
      %1323 = vmatpush2.msra.mxu0 0.0
      %1324 = vmatprep.subr.mxu0 0.0
      %1325 = vmatpush2.msra.mxu0 0.0
      %1326 = vmatprep.subr.mxu0 0.0
      %1327 = vmatpush2.msra.mxu0 0.0
      %1328 = vmatprep.subr.mxu0 0.0
      %1329 = vmatpush2.msra.mxu0 0.0
      %1330 = vmatprep.subr.mxu0 0.0
      %1331 = vmatpush2.msra.mxu0 0.0
      %1332 = vmatprep.subr.mxu0 0.0
      %1333 = vmatpush2.msra.mxu0 0.0
      %1334 = vmatprep.subr.mxu0 0.0
      %1335 = vmatpush2.msra.mxu0 0.0
      %1336 = vmatprep.subr.mxu0 0.0
      %1337 = vmatpush2.msra.mxu0 0.0
      %1338 = vmatprep.subr.mxu0 0.0
      %1339 = vmatpush2.msra.mxu0 0.0
      %1340 = vmatprep.subr.mxu0 0.0
      %1341 = vmatpush2.msra.mxu0 0.0
      %1342 = vmatprep.subr.mxu0 0.0
      %1343 = vmatpush2.msra.mxu0 0.0
      %1344 = vmatprep.subr.mxu0 0.0
      %1345 = vmatpush2.msra.mxu0 0.0
      %1346 = vmatprep.subr.mxu0 0.0
      %1347 = vmatpush2.msra.mxu0 0.0
      %1348 = vmatprep.subr.mxu0 0.0
      %1349 = vmatpush2.msra.mxu0 0.0
      %1350 = vmatprep.subr.mxu0 0.0
      %1351 = vmatpush2.msra.mxu0 0.0
      %1352 = vmatprep.mubr.f32.mxu0 0.0
      %v1353 = vand.u32 %v1245, 4294901760
      %v1354 = vsub.f32 %v1245, %v1353
      %v1355 = vand.u32 %v1354, 4294901760
      %v1356 = vsub.f32 %v1354, %v1355
      %v1357 = vand.u32 %v1356, 4294901760
      %1358 = vmatmul.mubr.f32.gmra.mxu0 %v1357
      %v1359 = vpop.f32.mrf.mxu0
      %v1360 = vadd.f32 %v1270, %v1359
      %v1361 = vpop.f32.mrf.mxu0
      %1362 = vdwg.mxu0
      %1363 = vmatprep.subr.mxu0 0.0
      %v1364 = vand.u32 %v1261, 4294901760
      %v1365 = vsub.f32 %v1261, %v1364
      %v1366 = vand.u32 %v1365, 4294901760
      %v1367 = vsub.f32 %v1365, %v1366
      %v1368 = vand.u32 %v1367, 4294901760
      %1369 = vmatpush1.msra.mxu0 %v1368
      %1370 = vmatprep.subr.mxu0 0.0
      %v1371 = vand.u32 %v1260, 4294901760
      %v1372 = vsub.f32 %v1260, %v1371
      %v1373 = vand.u32 %v1372, 4294901760
      %v1374 = vsub.f32 %v1372, %v1373
      %v1375 = vand.u32 %v1374, 4294901760
      %1376 = vmatpush1.msra.mxu0 %v1375
      %1377 = vmatprep.subr.mxu0 0.0
      %v1378 = vand.u32 %v1259, 4294901760
      %v1379 = vsub.f32 %v1259, %v1378
      %v1380 = vand.u32 %v1379, 4294901760
      %v1381 = vsub.f32 %v1379, %v1380
      %v1382 = vand.u32 %v1381, 4294901760
      %1383 = vmatpush1.msra.mxu0 %v1382
      %1384 = vmatprep.subr.mxu0 0.0
      %v1385 = vand.u32 %v1258, 4294901760
      %v1386 = vsub.f32 %v1258, %v1385
      %v1387 = vand.u32 %v1386, 4294901760
      %v1388 = vsub.f32 %v1386, %v1387
      %v1389 = vand.u32 %v1388, 4294901760
      %1390 = vmatpush1.msra.mxu0 %v1389
      %1391 = vmatprep.subr.mxu0 0.0
      %v1392 = vand.u32 %v1257, 4294901760
      %v1393 = vsub.f32 %v1257, %v1392
      %v1394 = vand.u32 %v1393, 4294901760
      %v1395 = vsub.f32 %v1393, %v1394
      %v1396 = vand.u32 %v1395, 4294901760
      %1397 = vmatpush1.msra.mxu0 %v1396
      %1398 = vmatprep.subr.mxu0 0.0
      %v1399 = vand.u32 %v1256, 4294901760
      %v1400 = vsub.f32 %v1256, %v1399
      %v1401 = vand.u32 %v1400, 4294901760
      %v1402 = vsub.f32 %v1400, %v1401
      %v1403 = vand.u32 %v1402, 4294901760
      %1404 = vmatpush1.msra.mxu0 %v1403
      %1405 = vmatprep.subr.mxu0 0.0
      %v1406 = vand.u32 %v1255, 4294901760
      %v1407 = vsub.f32 %v1255, %v1406
      %v1408 = vand.u32 %v1407, 4294901760
      %v1409 = vsub.f32 %v1407, %v1408
      %v1410 = vand.u32 %v1409, 4294901760
      %1411 = vmatpush1.msra.mxu0 %v1410
      %1412 = vmatprep.subr.mxu0 0.0
      %v1413 = vand.u32 %v1254, 4294901760
      %v1414 = vsub.f32 %v1254, %v1413
      %v1415 = vand.u32 %v1414, 4294901760
      %v1416 = vsub.f32 %v1414, %v1415
      %v1417 = vand.u32 %v1416, 4294901760
      %1418 = vmatpush1.msra.mxu0 %v1417
      %1419 = vmatprep.subr.mxu0 0.0
      %v1420 = vand.u32 %v1253, 4294901760
      %v1421 = vsub.f32 %v1253, %v1420
      %v1422 = vand.u32 %v1421, 4294901760
      %v1423 = vsub.f32 %v1421, %v1422
      %v1424 = vand.u32 %v1423, 4294901760
      %1425 = vmatpush1.msra.mxu0 %v1424
      %1426 = vmatprep.subr.mxu0 0.0
      %v1427 = vand.u32 %v1252, 4294901760
      %v1428 = vsub.f32 %v1252, %v1427
      %v1429 = vand.u32 %v1428, 4294901760
      %v1430 = vsub.f32 %v1428, %v1429
      %v1431 = vand.u32 %v1430, 4294901760
      %1432 = vmatpush1.msra.mxu0 %v1431
      %1433 = vmatprep.subr.mxu0 0.0
      %v1434 = vand.u32 %v1251, 4294901760
      %v1435 = vsub.f32 %v1251, %v1434
      %v1436 = vand.u32 %v1435, 4294901760
      %v1437 = vsub.f32 %v1435, %v1436
      %v1438 = vand.u32 %v1437, 4294901760
      %1439 = vmatpush1.msra.mxu0 %v1438
      %1440 = vmatprep.subr.mxu0 0.0
      %v1441 = vand.u32 %v1250, 4294901760
      %v1442 = vsub.f32 %v1250, %v1441
      %v1443 = vand.u32 %v1442, 4294901760
      %v1444 = vsub.f32 %v1442, %v1443
      %v1445 = vand.u32 %v1444, 4294901760
      %1446 = vmatpush1.msra.mxu0 %v1445
      %1447 = vmatprep.subr.mxu0 0.0
      %v1448 = vand.u32 %v1249, 4294901760
      %v1449 = vsub.f32 %v1249, %v1448
      %v1450 = vand.u32 %v1449, 4294901760
      %v1451 = vsub.f32 %v1449, %v1450
      %v1452 = vand.u32 %v1451, 4294901760
      %1453 = vmatpush1.msra.mxu0 %v1452
      %1454 = vmatprep.subr.mxu0 0.0
      %v1455 = vand.u32 %v1248, 4294901760
      %v1456 = vsub.f32 %v1248, %v1455
      %v1457 = vand.u32 %v1456, 4294901760
      %v1458 = vsub.f32 %v1456, %v1457
      %v1459 = vand.u32 %v1458, 4294901760
      %1460 = vmatpush1.msra.mxu0 %v1459
      %1461 = vmatprep.subr.mxu0 0.0
      %v1462 = vand.u32 %v1247, 4294901760
      %v1463 = vsub.f32 %v1247, %v1462
      %v1464 = vand.u32 %v1463, 4294901760
      %v1465 = vsub.f32 %v1463, %v1464
      %v1466 = vand.u32 %v1465, 4294901760
      %1467 = vmatpush1.msra.mxu0 %v1466
      %1468 = vmatprep.subr.mxu0 0.0
      %v1469 = vand.u32 %v1246, 4294901760
      %v1470 = vsub.f32 %v1246, %v1469
      %v1471 = vand.u32 %v1470, 4294901760
      %v1472 = vsub.f32 %v1470, %v1471
      %v1473 = vand.u32 %v1472, 4294901760
      %1474 = vmatpush1.msra.mxu0 %v1473
      %1475 = vmatprep.subr.mxu0 0.0
      %1476 = vmatpush2.msra.mxu0 0.0
      %1477 = vmatprep.subr.mxu0 0.0
      %1478 = vmatpush2.msra.mxu0 0.0
      %1479 = vmatprep.subr.mxu0 0.0
      %1480 = vmatpush2.msra.mxu0 0.0
      %1481 = vmatprep.subr.mxu0 0.0
      %1482 = vmatpush2.msra.mxu0 0.0
      %1483 = vmatprep.subr.mxu0 0.0
      %1484 = vmatpush2.msra.mxu0 0.0
      %1485 = vmatprep.subr.mxu0 0.0
      %1486 = vmatpush2.msra.mxu0 0.0
      %1487 = vmatprep.subr.mxu0 0.0
      %1488 = vmatpush2.msra.mxu0 0.0
      %1489 = vmatprep.subr.mxu0 0.0
      %1490 = vmatpush2.msra.mxu0 0.0
      %1491 = vmatprep.subr.mxu0 0.0
      %1492 = vmatpush2.msra.mxu0 0.0
      %1493 = vmatprep.subr.mxu0 0.0
      %1494 = vmatpush2.msra.mxu0 0.0
      %1495 = vmatprep.subr.mxu0 0.0
      %1496 = vmatpush2.msra.mxu0 0.0
      %1497 = vmatprep.subr.mxu0 0.0
      %1498 = vmatpush2.msra.mxu0 0.0
      %1499 = vmatprep.subr.mxu0 0.0
      %1500 = vmatpush2.msra.mxu0 0.0
      %1501 = vmatprep.subr.mxu0 0.0
      %1502 = vmatpush2.msra.mxu0 0.0
      %1503 = vmatprep.subr.mxu0 0.0
      %1504 = vmatpush2.msra.mxu0 0.0
      %1505 = vmatprep.subr.mxu0 0.0
      %1506 = vmatpush2.msra.mxu0 0.0
      %1507 = vmatprep.mubr.f32.mxu0 0.0
      %v1508 = vand.u32 %v1245, 4294901760
      %1509 = vmatmul.mubr.f32.gmra.mxu0 %v1508
      %v1510 = vpop.f32.mrf.mxu0
      %v1511 = vadd.f32 %v1360, %v1510
      %v1512 = vpop.f32.mrf.mxu0
      %1513 = vdwg.mxu0
      %1514 = vmatprep.subr.mxu0 0.0
      %v1515 = vand.u32 %v1261, 4294901760
      %v1516 = vsub.f32 %v1261, %v1515
      %1517 = vmatpush1.msra.mxu0 %v1516
      %1518 = vmatprep.subr.mxu0 0.0
      %v1519 = vand.u32 %v1260, 4294901760
      %v1520 = vsub.f32 %v1260, %v1519
      %1521 = vmatpush1.msra.mxu0 %v1520
      %1522 = vmatprep.subr.mxu0 0.0
      %v1523 = vand.u32 %v1259, 4294901760
      %v1524 = vsub.f32 %v1259, %v1523
      %1525 = vmatpush1.msra.mxu0 %v1524
      %1526 = vmatprep.subr.mxu0 0.0
      %v1527 = vand.u32 %v1258, 4294901760
      %v1528 = vsub.f32 %v1258, %v1527
      %1529 = vmatpush1.msra.mxu0 %v1528
      %1530 = vmatprep.subr.mxu0 0.0
      %v1531 = vand.u32 %v1257, 4294901760
      %v1532 = vsub.f32 %v1257, %v1531
      %1533 = vmatpush1.msra.mxu0 %v1532
      %1534 = vmatprep.subr.mxu0 0.0
      %v1535 = vand.u32 %v1256, 4294901760
      %v1536 = vsub.f32 %v1256, %v1535
      %1537 = vmatpush1.msra.mxu0 %v1536
      %1538 = vmatprep.subr.mxu0 0.0
      %v1539 = vand.u32 %v1255, 4294901760
      %v1540 = vsub.f32 %v1255, %v1539
      %1541 = vmatpush1.msra.mxu0 %v1540
      %1542 = vmatprep.subr.mxu0 0.0
      %v1543 = vand.u32 %v1254, 4294901760
      %v1544 = vsub.f32 %v1254, %v1543
      %1545 = vmatpush1.msra.mxu0 %v1544
      %1546 = vmatprep.subr.mxu0 0.0
      %v1547 = vand.u32 %v1253, 4294901760
      %v1548 = vsub.f32 %v1253, %v1547
      %1549 = vmatpush1.msra.mxu0 %v1548
      %1550 = vmatprep.subr.mxu0 0.0
      %v1551 = vand.u32 %v1252, 4294901760
      %v1552 = vsub.f32 %v1252, %v1551
      %1553 = vmatpush1.msra.mxu0 %v1552
      %1554 = vmatprep.subr.mxu0 0.0
      %v1555 = vand.u32 %v1251, 4294901760
      %v1556 = vsub.f32 %v1251, %v1555
      %1557 = vmatpush1.msra.mxu0 %v1556
      %1558 = vmatprep.subr.mxu0 0.0
      %v1559 = vand.u32 %v1250, 4294901760
      %v1560 = vsub.f32 %v1250, %v1559
      %1561 = vmatpush1.msra.mxu0 %v1560
      %1562 = vmatprep.subr.mxu0 0.0
      %v1563 = vand.u32 %v1249, 4294901760
      %v1564 = vsub.f32 %v1249, %v1563
      %1565 = vmatpush1.msra.mxu0 %v1564
      %1566 = vmatprep.subr.mxu0 0.0
      %v1567 = vand.u32 %v1248, 4294901760
      %v1568 = vsub.f32 %v1248, %v1567
      %1569 = vmatpush1.msra.mxu0 %v1568
      %1570 = vmatprep.subr.mxu0 0.0
      %v1571 = vand.u32 %v1247, 4294901760
      %v1572 = vsub.f32 %v1247, %v1571
      %1573 = vmatpush1.msra.mxu0 %v1572
      %1574 = vmatprep.subr.mxu0 0.0
      %v1575 = vand.u32 %v1246, 4294901760
      %v1576 = vsub.f32 %v1246, %v1575
      %1577 = vmatpush1.msra.mxu0 %v1576
      %1578 = vmatprep.subr.mxu0 0.0
      %1579 = vmatpush2.msra.mxu0 0.0
      %1580 = vmatprep.subr.mxu0 0.0
      %1581 = vmatpush2.msra.mxu0 0.0
      %1582 = vmatprep.subr.mxu0 0.0
      %1583 = vmatpush2.msra.mxu0 0.0
      %1584 = vmatprep.subr.mxu0 0.0
      %1585 = vmatpush2.msra.mxu0 0.0
      %1586 = vmatprep.subr.mxu0 0.0
      %1587 = vmatpush2.msra.mxu0 0.0
      %1588 = vmatprep.subr.mxu0 0.0
      %1589 = vmatpush2.msra.mxu0 0.0
      %1590 = vmatprep.subr.mxu0 0.0
      %1591 = vmatpush2.msra.mxu0 0.0
      %1592 = vmatprep.subr.mxu0 0.0
      %1593 = vmatpush2.msra.mxu0 0.0
      %1594 = vmatprep.subr.mxu0 0.0
      %1595 = vmatpush2.msra.mxu0 0.0
      %1596 = vmatprep.subr.mxu0 0.0
      %1597 = vmatpush2.msra.mxu0 0.0
      %1598 = vmatprep.subr.mxu0 0.0
      %1599 = vmatpush2.msra.mxu0 0.0
      %1600 = vmatprep.subr.mxu0 0.0
      %1601 = vmatpush2.msra.mxu0 0.0
      %1602 = vmatprep.subr.mxu0 0.0
      %1603 = vmatpush2.msra.mxu0 0.0
      %1604 = vmatprep.subr.mxu0 0.0
      %1605 = vmatpush2.msra.mxu0 0.0
      %1606 = vmatprep.subr.mxu0 0.0
      %1607 = vmatpush2.msra.mxu0 0.0
      %1608 = vmatprep.subr.mxu0 0.0
      %1609 = vmatpush2.msra.mxu0 0.0
      %1610 = vmatprep.mubr.f32.mxu0 0.0
      %v1611 = vand.u32 %v1245, 4294901760
      %v1612 = vsub.f32 %v1245, %v1611
      %1613 = vmatmul.mubr.f32.gmra.mxu0 %v1612
      %v1614 = vpop.f32.mrf.mxu0
      %v1615 = vadd.f32 %v1511, %v1614
      %v1616 = vpop.f32.mrf.mxu0
      %1617 = vdwg.mxu0
      %1618 = vmatprep.subr.mxu0 0.0
      %v1619 = vand.u32 %v1261, 4294901760
      %1620 = vmatpush1.msra.mxu0 %v1619
      %1621 = vmatprep.subr.mxu0 0.0
      %v1622 = vand.u32 %v1260, 4294901760
      %1623 = vmatpush1.msra.mxu0 %v1622
      %1624 = vmatprep.subr.mxu0 0.0
      %v1625 = vand.u32 %v1259, 4294901760
      %1626 = vmatpush1.msra.mxu0 %v1625
      %1627 = vmatprep.subr.mxu0 0.0
      %v1628 = vand.u32 %v1258, 4294901760
      %1629 = vmatpush1.msra.mxu0 %v1628
      %1630 = vmatprep.subr.mxu0 0.0
      %v1631 = vand.u32 %v1257, 4294901760
      %1632 = vmatpush1.msra.mxu0 %v1631
      %1633 = vmatprep.subr.mxu0 0.0
      %v1634 = vand.u32 %v1256, 4294901760
      %1635 = vmatpush1.msra.mxu0 %v1634
      %1636 = vmatprep.subr.mxu0 0.0
      %v1637 = vand.u32 %v1255, 4294901760
      %1638 = vmatpush1.msra.mxu0 %v1637
      %1639 = vmatprep.subr.mxu0 0.0
      %v1640 = vand.u32 %v1254, 4294901760
      %1641 = vmatpush1.msra.mxu0 %v1640
      %1642 = vmatprep.subr.mxu0 0.0
      %v1643 = vand.u32 %v1253, 4294901760
      %1644 = vmatpush1.msra.mxu0 %v1643
      %1645 = vmatprep.subr.mxu0 0.0
      %v1646 = vand.u32 %v1252, 4294901760
      %1647 = vmatpush1.msra.mxu0 %v1646
      %1648 = vmatprep.subr.mxu0 0.0
      %v1649 = vand.u32 %v1251, 4294901760
      %1650 = vmatpush1.msra.mxu0 %v1649
      %1651 = vmatprep.subr.mxu0 0.0
      %v1652 = vand.u32 %v1250, 4294901760
      %1653 = vmatpush1.msra.mxu0 %v1652
      %1654 = vmatprep.subr.mxu0 0.0
      %v1655 = vand.u32 %v1249, 4294901760
      %1656 = vmatpush1.msra.mxu0 %v1655
      %1657 = vmatprep.subr.mxu0 0.0
      %v1658 = vand.u32 %v1248, 4294901760
      %1659 = vmatpush1.msra.mxu0 %v1658
      %1660 = vmatprep.subr.mxu0 0.0
      %v1661 = vand.u32 %v1247, 4294901760
      %1662 = vmatpush1.msra.mxu0 %v1661
      %1663 = vmatprep.subr.mxu0 0.0
      %v1664 = vand.u32 %v1246, 4294901760
      %1665 = vmatpush1.msra.mxu0 %v1664
      %1666 = vmatprep.subr.mxu0 0.0
      %1667 = vmatpush2.msra.mxu0 0.0
      %1668 = vmatprep.subr.mxu0 0.0
      %1669 = vmatpush2.msra.mxu0 0.0
      %1670 = vmatprep.subr.mxu0 0.0
      %1671 = vmatpush2.msra.mxu0 0.0
      %1672 = vmatprep.subr.mxu0 0.0
      %1673 = vmatpush2.msra.mxu0 0.0
      %1674 = vmatprep.subr.mxu0 0.0
      %1675 = vmatpush2.msra.mxu0 0.0
      %1676 = vmatprep.subr.mxu0 0.0
      %1677 = vmatpush2.msra.mxu0 0.0
      %1678 = vmatprep.subr.mxu0 0.0
      %1679 = vmatpush2.msra.mxu0 0.0
      %1680 = vmatprep.subr.mxu0 0.0
      %1681 = vmatpush2.msra.mxu0 0.0
      %1682 = vmatprep.subr.mxu0 0.0
      %1683 = vmatpush2.msra.mxu0 0.0
      %1684 = vmatprep.subr.mxu0 0.0
      %1685 = vmatpush2.msra.mxu0 0.0
      %1686 = vmatprep.subr.mxu0 0.0
      %1687 = vmatpush2.msra.mxu0 0.0
      %1688 = vmatprep.subr.mxu0 0.0
      %1689 = vmatpush2.msra.mxu0 0.0
      %1690 = vmatprep.subr.mxu0 0.0
      %1691 = vmatpush2.msra.mxu0 0.0
      %1692 = vmatprep.subr.mxu0 0.0
      %1693 = vmatpush2.msra.mxu0 0.0
      %1694 = vmatprep.subr.mxu0 0.0
      %1695 = vmatpush2.msra.mxu0 0.0
      %1696 = vmatprep.subr.mxu0 0.0
      %1697 = vmatpush2.msra.mxu0 0.0
      %1698 = vmatprep.mubr.f32.mxu0 0.0
      %v1699 = vand.u32 %v1245, 4294901760
      %v1700 = vsub.f32 %v1245, %v1699
      %v1701 = vand.u32 %v1700, 4294901760
      %1702 = vmatmul.mubr.f32.gmra.mxu0 %v1701
      %v1703 = vpop.f32.mrf.mxu0
      %v1704 = vadd.f32 %v1615, %v1703
      %v1705 = vpop.f32.mrf.mxu0
      %1706 = vdwg.mxu0
      %1707 = vmatprep.subr.mxu0 0.0
      %v1708 = vand.u32 %v1261, 4294901760
      %v1709 = vsub.f32 %v1261, %v1708
      %v1710 = vand.u32 %v1709, 4294901760
      %1711 = vmatpush1.msra.mxu0 %v1710
      %1712 = vmatprep.subr.mxu0 0.0
      %v1713 = vand.u32 %v1260, 4294901760
      %v1714 = vsub.f32 %v1260, %v1713
      %v1715 = vand.u32 %v1714, 4294901760
      %1716 = vmatpush1.msra.mxu0 %v1715
      %1717 = vmatprep.subr.mxu0 0.0
      %v1718 = vand.u32 %v1259, 4294901760
      %v1719 = vsub.f32 %v1259, %v1718
      %v1720 = vand.u32 %v1719, 4294901760
      %1721 = vmatpush1.msra.mxu0 %v1720
      %1722 = vmatprep.subr.mxu0 0.0
      %v1723 = vand.u32 %v1258, 4294901760
      %v1724 = vsub.f32 %v1258, %v1723
      %v1725 = vand.u32 %v1724, 4294901760
      %1726 = vmatpush1.msra.mxu0 %v1725
      %1727 = vmatprep.subr.mxu0 0.0
      %v1728 = vand.u32 %v1257, 4294901760
      %v1729 = vsub.f32 %v1257, %v1728
      %v1730 = vand.u32 %v1729, 4294901760
      %1731 = vmatpush1.msra.mxu0 %v1730
      %1732 = vmatprep.subr.mxu0 0.0
      %v1733 = vand.u32 %v1256, 4294901760
      %v1734 = vsub.f32 %v1256, %v1733
      %v1735 = vand.u32 %v1734, 4294901760
      %1736 = vmatpush1.msra.mxu0 %v1735
      %1737 = vmatprep.subr.mxu0 0.0
      %v1738 = vand.u32 %v1255, 4294901760
      %v1739 = vsub.f32 %v1255, %v1738
      %v1740 = vand.u32 %v1739, 4294901760
      %1741 = vmatpush1.msra.mxu0 %v1740
      %1742 = vmatprep.subr.mxu0 0.0
      %v1743 = vand.u32 %v1254, 4294901760
      %v1744 = vsub.f32 %v1254, %v1743
      %v1745 = vand.u32 %v1744, 4294901760
      %1746 = vmatpush1.msra.mxu0 %v1745
      %1747 = vmatprep.subr.mxu0 0.0
      %v1748 = vand.u32 %v1253, 4294901760
      %v1749 = vsub.f32 %v1253, %v1748
      %v1750 = vand.u32 %v1749, 4294901760
      %1751 = vmatpush1.msra.mxu0 %v1750
      %1752 = vmatprep.subr.mxu0 0.0
      %v1753 = vand.u32 %v1252, 4294901760
      %v1754 = vsub.f32 %v1252, %v1753
      %v1755 = vand.u32 %v1754, 4294901760
      %1756 = vmatpush1.msra.mxu0 %v1755
      %1757 = vmatprep.subr.mxu0 0.0
      %v1758 = vand.u32 %v1251, 4294901760
      %v1759 = vsub.f32 %v1251, %v1758
      %v1760 = vand.u32 %v1759, 4294901760
      %1761 = vmatpush1.msra.mxu0 %v1760
      %1762 = vmatprep.subr.mxu0 0.0
      %v1763 = vand.u32 %v1250, 4294901760
      %v1764 = vsub.f32 %v1250, %v1763
      %v1765 = vand.u32 %v1764, 4294901760
      %1766 = vmatpush1.msra.mxu0 %v1765
      %1767 = vmatprep.subr.mxu0 0.0
      %v1768 = vand.u32 %v1249, 4294901760
      %v1769 = vsub.f32 %v1249, %v1768
      %v1770 = vand.u32 %v1769, 4294901760
      %1771 = vmatpush1.msra.mxu0 %v1770
      %1772 = vmatprep.subr.mxu0 0.0
      %v1773 = vand.u32 %v1248, 4294901760
      %v1774 = vsub.f32 %v1248, %v1773
      %v1775 = vand.u32 %v1774, 4294901760
      %1776 = vmatpush1.msra.mxu0 %v1775
      %1777 = vmatprep.subr.mxu0 0.0
      %v1778 = vand.u32 %v1247, 4294901760
      %v1779 = vsub.f32 %v1247, %v1778
      %v1780 = vand.u32 %v1779, 4294901760
      %1781 = vmatpush1.msra.mxu0 %v1780
      %1782 = vmatprep.subr.mxu0 0.0
      %v1783 = vand.u32 %v1246, 4294901760
      %v1784 = vsub.f32 %v1246, %v1783
      %v1785 = vand.u32 %v1784, 4294901760
      %1786 = vmatpush1.msra.mxu0 %v1785
      %1787 = vmatprep.subr.mxu0 0.0
      %1788 = vmatpush2.msra.mxu0 0.0
      %1789 = vmatprep.subr.mxu0 0.0
      %1790 = vmatpush2.msra.mxu0 0.0
      %1791 = vmatprep.subr.mxu0 0.0
      %1792 = vmatpush2.msra.mxu0 0.0
      %1793 = vmatprep.subr.mxu0 0.0
      %1794 = vmatpush2.msra.mxu0 0.0
      %1795 = vmatprep.subr.mxu0 0.0
      %1796 = vmatpush2.msra.mxu0 0.0
      %1797 = vmatprep.subr.mxu0 0.0
      %1798 = vmatpush2.msra.mxu0 0.0
      %1799 = vmatprep.subr.mxu0 0.0
      %1800 = vmatpush2.msra.mxu0 0.0
      %1801 = vmatprep.subr.mxu0 0.0
      %1802 = vmatpush2.msra.mxu0 0.0
      %1803 = vmatprep.subr.mxu0 0.0
      %1804 = vmatpush2.msra.mxu0 0.0
      %1805 = vmatprep.subr.mxu0 0.0
      %1806 = vmatpush2.msra.mxu0 0.0
      %1807 = vmatprep.subr.mxu0 0.0
      %1808 = vmatpush2.msra.mxu0 0.0
      %1809 = vmatprep.subr.mxu0 0.0
      %1810 = vmatpush2.msra.mxu0 0.0
      %1811 = vmatprep.subr.mxu0 0.0
      %1812 = vmatpush2.msra.mxu0 0.0
      %1813 = vmatprep.subr.mxu0 0.0
      %1814 = vmatpush2.msra.mxu0 0.0
      %1815 = vmatprep.subr.mxu0 0.0
      %1816 = vmatpush2.msra.mxu0 0.0
      %1817 = vmatprep.subr.mxu0 0.0
      %1818 = vmatpush2.msra.mxu0 0.0
      %1819 = vmatprep.mubr.f32.mxu0 0.0
      %v1820 = vand.u32 %v1245, 4294901760
      %1821 = vmatmul.mubr.f32.gmra.mxu0 %v1820
      %v1822 = vpop.f32.mrf.mxu0
      %v1823 = vadd.f32 %v1704, %v1822
      %v1824 = vpop.f32.mrf.mxu0
      %1825 = vdwg.mxu0
      %1826 = vmatprep.subr.mxu0 0.0
      %v1827 = vand.u32 %v1261, 4294901760
      %1828 = vmatpush1.msra.mxu0 %v1827
      %1829 = vmatprep.subr.mxu0 0.0
      %v1830 = vand.u32 %v1260, 4294901760
      %1831 = vmatpush1.msra.mxu0 %v1830
      %1832 = vmatprep.subr.mxu0 0.0
      %v1833 = vand.u32 %v1259, 4294901760
      %1834 = vmatpush1.msra.mxu0 %v1833
      %1835 = vmatprep.subr.mxu0 0.0
      %v1836 = vand.u32 %v1258, 4294901760
      %1837 = vmatpush1.msra.mxu0 %v1836
      %1838 = vmatprep.subr.mxu0 0.0
      %v1839 = vand.u32 %v1257, 4294901760
      %1840 = vmatpush1.msra.mxu0 %v1839
      %1841 = vmatprep.subr.mxu0 0.0
      %v1842 = vand.u32 %v1256, 4294901760
      %1843 = vmatpush1.msra.mxu0 %v1842
      %1844 = vmatprep.subr.mxu0 0.0
      %v1845 = vand.u32 %v1255, 4294901760
      %1846 = vmatpush1.msra.mxu0 %v1845
      %1847 = vmatprep.subr.mxu0 0.0
      %v1848 = vand.u32 %v1254, 4294901760
      %1849 = vmatpush1.msra.mxu0 %v1848
      %1850 = vmatprep.subr.mxu0 0.0
      %v1851 = vand.u32 %v1253, 4294901760
      %1852 = vmatpush1.msra.mxu0 %v1851
      %1853 = vmatprep.subr.mxu0 0.0
      %v1854 = vand.u32 %v1252, 4294901760
      %1855 = vmatpush1.msra.mxu0 %v1854
      %1856 = vmatprep.subr.mxu0 0.0
      %v1857 = vand.u32 %v1251, 4294901760
      %1858 = vmatpush1.msra.mxu0 %v1857
      %1859 = vmatprep.subr.mxu0 0.0
      %v1860 = vand.u32 %v1250, 4294901760
      %1861 = vmatpush1.msra.mxu0 %v1860
      %1862 = vmatprep.subr.mxu0 0.0
      %v1863 = vand.u32 %v1249, 4294901760
      %1864 = vmatpush1.msra.mxu0 %v1863
      %1865 = vmatprep.subr.mxu0 0.0
      %v1866 = vand.u32 %v1248, 4294901760
      %1867 = vmatpush1.msra.mxu0 %v1866
      %1868 = vmatprep.subr.mxu0 0.0
      %v1869 = vand.u32 %v1247, 4294901760
      %1870 = vmatpush1.msra.mxu0 %v1869
      %1871 = vmatprep.subr.mxu0 0.0
      %v1872 = vand.u32 %v1246, 4294901760
      %1873 = vmatpush1.msra.mxu0 %v1872
      %1874 = vmatprep.subr.mxu0 0.0
      %1875 = vmatpush2.msra.mxu0 0.0
      %1876 = vmatprep.subr.mxu0 0.0
      %1877 = vmatpush2.msra.mxu0 0.0
      %1878 = vmatprep.subr.mxu0 0.0
      %1879 = vmatpush2.msra.mxu0 0.0
      %1880 = vmatprep.subr.mxu0 0.0
      %1881 = vmatpush2.msra.mxu0 0.0
      %1882 = vmatprep.subr.mxu0 0.0
      %1883 = vmatpush2.msra.mxu0 0.0
      %1884 = vmatprep.subr.mxu0 0.0
      %1885 = vmatpush2.msra.mxu0 0.0
      %1886 = vmatprep.subr.mxu0 0.0
      %1887 = vmatpush2.msra.mxu0 0.0
      %1888 = vmatprep.subr.mxu0 0.0
      %1889 = vmatpush2.msra.mxu0 0.0
      %1890 = vmatprep.subr.mxu0 0.0
      %1891 = vmatpush2.msra.mxu0 0.0
      %1892 = vmatprep.subr.mxu0 0.0
      %1893 = vmatpush2.msra.mxu0 0.0
      %1894 = vmatprep.subr.mxu0 0.0
      %1895 = vmatpush2.msra.mxu0 0.0
      %1896 = vmatprep.subr.mxu0 0.0
      %1897 = vmatpush2.msra.mxu0 0.0
      %1898 = vmatprep.subr.mxu0 0.0
      %1899 = vmatpush2.msra.mxu0 0.0
      %1900 = vmatprep.subr.mxu0 0.0
      %1901 = vmatpush2.msra.mxu0 0.0
      %1902 = vmatprep.subr.mxu0 0.0
      %1903 = vmatpush2.msra.mxu0 0.0
      %1904 = vmatprep.subr.mxu0 0.0
      %1905 = vmatpush2.msra.mxu0 0.0
      %1906 = vmatprep.mubr.f32.mxu0 0.0
      %v1907 = vand.u32 %v1245, 4294901760
      %1908 = vmatmul.mubr.f32.gmra.mxu0 %v1907
      %v1909 = vpop.f32.mrf.mxu0
      %v1910 = vadd.f32 %v1823, %v1909
      %v1911 = vpop.f32.mrf.mxu0
      %1912 = vdwg.mxu0
      %v1913 = vxor.u32 %v1910, 2147483648
      %v1914 = vmul.f32 %v1913, 1.442695
      %v1915 = vpow.pop %v1914
      %v1916 = vadd.f32 %v1915, 1.0
      %v1917 = vrcp.pop %v1916
      %v1918 = vmul.f32 1.0, %v1917
      %v1919 = vsel %vm1244, %v1918, 0.0
      %v1920 = vld [vmem:[%s3] sm:$0xf]
      %vm1921 = vcmask 31744
      %v1923 = vsel %vm1921, %v1919, 0
      %vm1925 = vcmask 1043456
      %v1927 = vsel %vm1925, %v1920, 0
      %1929 = vmatprep.subr.mxu0 0.0
      %1930 = vmatpush1.msra.mxu0 0.0
      %1931 = vmatprep.subr.mxu0 0.0
      %1932 = vmatpush1.msra.mxu0 0.0
      %1933 = vmatprep.subr.mxu0 0.0
      %1934 = vmatpush1.msra.mxu0 0.0
      %1935 = vmatprep.subr.mxu0 0.0
      %1936 = vmatpush1.msra.mxu0 0.0
      %1937 = vmatprep.subr.mxu0 0.0
      %1938 = vmatpush1.msra.mxu0 0.0
      %1939 = vmatprep.subr.mxu0 0.0
      %1940 = vmatpush1.msra.mxu0 0.0
      %1941 = vmatprep.subr.mxu0 0.0
      %1942 = vmatpush1.msra.mxu0 0.0
      %1943 = vmatprep.subr.mxu0 0.0
      %1944 = vmatpush1.msra.mxu0 0.0
      %1945 = vmatprep.subr.mxu0 0.0
      %1946 = vmatpush1.msra.mxu0 0.0
      %1947 = vmatprep.subr.mxu0 0.0
      %1948 = vmatpush1.msra.mxu0 0.0
      %1949 = vmatprep.subr.mxu0 0.0
      %1950 = vmatpush1.msra.mxu0 0.0
      %1951 = vmatprep.subr.mxu0 0.0
      %1952 = vmatpush1.msra.mxu0 0.0
      %1953 = vmatprep.subr.mxu0 0.0
      %1954 = vmatpush1.msra.mxu0 0.0
      %1955 = vmatprep.subr.mxu0 0.0
      %1956 = vmatpush1.msra.mxu0 0.0
      %1957 = vmatprep.subr.mxu0 0.0
      %1958 = vmatpush1.msra.mxu0 0.0
      %1959 = vmatprep.subr.mxu0 0.0
      %v1960 = vand.u32 %v1927, 4294901760
      %1961 = vmatpush1.msra.mxu0 %v1960
      %1962 = vmatprep.subr.mxu0 0.0
      %1963 = vmatpush2.msra.mxu0 0.0
      %1964 = vmatprep.subr.mxu0 0.0
      %1965 = vmatpush2.msra.mxu0 0.0
      %1966 = vmatprep.subr.mxu0 0.0
      %1967 = vmatpush2.msra.mxu0 0.0
      %1968 = vmatprep.subr.mxu0 0.0
      %1969 = vmatpush2.msra.mxu0 0.0
      %1970 = vmatprep.subr.mxu0 0.0
      %1971 = vmatpush2.msra.mxu0 0.0
      %1972 = vmatprep.subr.mxu0 0.0
      %1973 = vmatpush2.msra.mxu0 0.0
      %1974 = vmatprep.subr.mxu0 0.0
      %1975 = vmatpush2.msra.mxu0 0.0
      %1976 = vmatprep.subr.mxu0 0.0
      %1977 = vmatpush2.msra.mxu0 0.0
      %1978 = vmatprep.subr.mxu0 0.0
      %1979 = vmatpush2.msra.mxu0 0.0
      %1980 = vmatprep.subr.mxu0 0.0
      %1981 = vmatpush2.msra.mxu0 0.0
      %1982 = vmatprep.subr.mxu0 0.0
      %1983 = vmatpush2.msra.mxu0 0.0
      %1984 = vmatprep.subr.mxu0 0.0
      %1985 = vmatpush2.msra.mxu0 0.0
      %1986 = vmatprep.subr.mxu0 0.0
      %1987 = vmatpush2.msra.mxu0 0.0
      %1988 = vmatprep.subr.mxu0 0.0
      %1989 = vmatpush2.msra.mxu0 0.0
      %1990 = vmatprep.subr.mxu0 0.0
      %1991 = vmatpush2.msra.mxu0 0.0
      %1992 = vmatprep.subr.mxu0 0.0
      %1993 = vmatpush2.msra.mxu0 0.0
      %1994 = vmatprep.mubr.f32.mxu0 0.0
      %v1995 = vand.u32 %v1923, 4294901760
      %v1996 = vsub.f32 %v1923, %v1995
      %v1997 = vand.u32 %v1996, 4294901760
      %v1998 = vsub.f32 %v1996, %v1997
      %v1999 = vand.u32 %v1998, 4294901760
      %2000 = vmatmul.mubr.f32.gmra.mxu0 %v1999
      %v2001 = vpop.f32.mrf.mxu0
      %v2002 = vadd.f32 0.0, %v2001
      %v2003 = vpop.f32.mrf.mxu0
      %2004 = vdwg.mxu0
      %2005 = vmatprep.subr.mxu0 0.0
      %2006 = vmatpush1.msra.mxu0 0.0
      %2007 = vmatprep.subr.mxu0 0.0
      %2008 = vmatpush1.msra.mxu0 0.0
      %2009 = vmatprep.subr.mxu0 0.0
      %2010 = vmatpush1.msra.mxu0 0.0
      %2011 = vmatprep.subr.mxu0 0.0
      %2012 = vmatpush1.msra.mxu0 0.0
      %2013 = vmatprep.subr.mxu0 0.0
      %2014 = vmatpush1.msra.mxu0 0.0
      %2015 = vmatprep.subr.mxu0 0.0
      %2016 = vmatpush1.msra.mxu0 0.0
      %2017 = vmatprep.subr.mxu0 0.0
      %2018 = vmatpush1.msra.mxu0 0.0
      %2019 = vmatprep.subr.mxu0 0.0
      %2020 = vmatpush1.msra.mxu0 0.0
      %2021 = vmatprep.subr.mxu0 0.0
      %2022 = vmatpush1.msra.mxu0 0.0
      %2023 = vmatprep.subr.mxu0 0.0
      %2024 = vmatpush1.msra.mxu0 0.0
      %2025 = vmatprep.subr.mxu0 0.0
      %2026 = vmatpush1.msra.mxu0 0.0
      %2027 = vmatprep.subr.mxu0 0.0
      %2028 = vmatpush1.msra.mxu0 0.0
      %2029 = vmatprep.subr.mxu0 0.0
      %2030 = vmatpush1.msra.mxu0 0.0
      %2031 = vmatprep.subr.mxu0 0.0
      %2032 = vmatpush1.msra.mxu0 0.0
      %2033 = vmatprep.subr.mxu0 0.0
      %2034 = vmatpush1.msra.mxu0 0.0
      %2035 = vmatprep.subr.mxu0 0.0
      %v2036 = vand.u32 %v1927, 4294901760
      %v2037 = vsub.f32 %v1927, %v2036
      %v2038 = vand.u32 %v2037, 4294901760
      %v2039 = vsub.f32 %v2037, %v2038
      %v2040 = vand.u32 %v2039, 4294901760
      %2041 = vmatpush1.msra.mxu0 %v2040
      %2042 = vmatprep.subr.mxu0 0.0
      %2043 = vmatpush2.msra.mxu0 0.0
      %2044 = vmatprep.subr.mxu0 0.0
      %2045 = vmatpush2.msra.mxu0 0.0
      %2046 = vmatprep.subr.mxu0 0.0
      %2047 = vmatpush2.msra.mxu0 0.0
      %2048 = vmatprep.subr.mxu0 0.0
      %2049 = vmatpush2.msra.mxu0 0.0
      %2050 = vmatprep.subr.mxu0 0.0
      %2051 = vmatpush2.msra.mxu0 0.0
      %2052 = vmatprep.subr.mxu0 0.0
      %2053 = vmatpush2.msra.mxu0 0.0
      %2054 = vmatprep.subr.mxu0 0.0
      %2055 = vmatpush2.msra.mxu0 0.0
      %2056 = vmatprep.subr.mxu0 0.0
      %2057 = vmatpush2.msra.mxu0 0.0
      %2058 = vmatprep.subr.mxu0 0.0
      %2059 = vmatpush2.msra.mxu0 0.0
      %2060 = vmatprep.subr.mxu0 0.0
      %2061 = vmatpush2.msra.mxu0 0.0
      %2062 = vmatprep.subr.mxu0 0.0
      %2063 = vmatpush2.msra.mxu0 0.0
      %2064 = vmatprep.subr.mxu0 0.0
      %2065 = vmatpush2.msra.mxu0 0.0
      %2066 = vmatprep.subr.mxu0 0.0
      %2067 = vmatpush2.msra.mxu0 0.0
      %2068 = vmatprep.subr.mxu0 0.0
      %2069 = vmatpush2.msra.mxu0 0.0
      %2070 = vmatprep.subr.mxu0 0.0
      %2071 = vmatpush2.msra.mxu0 0.0
      %2072 = vmatprep.subr.mxu0 0.0
      %2073 = vmatpush2.msra.mxu0 0.0
      %2074 = vmatprep.mubr.f32.mxu0 0.0
      %v2075 = vand.u32 %v1923, 4294901760
      %2076 = vmatmul.mubr.f32.gmra.mxu0 %v2075
      %v2077 = vpop.f32.mrf.mxu0
      %v2078 = vadd.f32 %v2002, %v2077
      %v2079 = vpop.f32.mrf.mxu0
      %2080 = vdwg.mxu0
      %2081 = vmatprep.subr.mxu0 0.0
      %2082 = vmatpush1.msra.mxu0 0.0
      %2083 = vmatprep.subr.mxu0 0.0
      %2084 = vmatpush1.msra.mxu0 0.0
      %2085 = vmatprep.subr.mxu0 0.0
      %2086 = vmatpush1.msra.mxu0 0.0
      %2087 = vmatprep.subr.mxu0 0.0
      %2088 = vmatpush1.msra.mxu0 0.0
      %2089 = vmatprep.subr.mxu0 0.0
      %2090 = vmatpush1.msra.mxu0 0.0
      %2091 = vmatprep.subr.mxu0 0.0
      %2092 = vmatpush1.msra.mxu0 0.0
      %2093 = vmatprep.subr.mxu0 0.0
      %2094 = vmatpush1.msra.mxu0 0.0
      %2095 = vmatprep.subr.mxu0 0.0
      %2096 = vmatpush1.msra.mxu0 0.0
      %2097 = vmatprep.subr.mxu0 0.0
      %2098 = vmatpush1.msra.mxu0 0.0
      %2099 = vmatprep.subr.mxu0 0.0
      %2100 = vmatpush1.msra.mxu0 0.0
      %2101 = vmatprep.subr.mxu0 0.0
      %2102 = vmatpush1.msra.mxu0 0.0
      %2103 = vmatprep.subr.mxu0 0.0
      %2104 = vmatpush1.msra.mxu0 0.0
      %2105 = vmatprep.subr.mxu0 0.0
      %2106 = vmatpush1.msra.mxu0 0.0
      %2107 = vmatprep.subr.mxu0 0.0
      %2108 = vmatpush1.msra.mxu0 0.0
      %2109 = vmatprep.subr.mxu0 0.0
      %2110 = vmatpush1.msra.mxu0 0.0
      %2111 = vmatprep.subr.mxu0 0.0
      %v2112 = vand.u32 %v1927, 4294901760
      %v2113 = vsub.f32 %v1927, %v2112
      %2114 = vmatpush1.msra.mxu0 %v2113
      %2115 = vmatprep.subr.mxu0 0.0
      %2116 = vmatpush2.msra.mxu0 0.0
      %2117 = vmatprep.subr.mxu0 0.0
      %2118 = vmatpush2.msra.mxu0 0.0
      %2119 = vmatprep.subr.mxu0 0.0
      %2120 = vmatpush2.msra.mxu0 0.0
      %2121 = vmatprep.subr.mxu0 0.0
      %2122 = vmatpush2.msra.mxu0 0.0
      %2123 = vmatprep.subr.mxu0 0.0
      %2124 = vmatpush2.msra.mxu0 0.0
      %2125 = vmatprep.subr.mxu0 0.0
      %2126 = vmatpush2.msra.mxu0 0.0
      %2127 = vmatprep.subr.mxu0 0.0
      %2128 = vmatpush2.msra.mxu0 0.0
      %2129 = vmatprep.subr.mxu0 0.0
      %2130 = vmatpush2.msra.mxu0 0.0
      %2131 = vmatprep.subr.mxu0 0.0
      %2132 = vmatpush2.msra.mxu0 0.0
      %2133 = vmatprep.subr.mxu0 0.0
      %2134 = vmatpush2.msra.mxu0 0.0
      %2135 = vmatprep.subr.mxu0 0.0
      %2136 = vmatpush2.msra.mxu0 0.0
      %2137 = vmatprep.subr.mxu0 0.0
      %2138 = vmatpush2.msra.mxu0 0.0
      %2139 = vmatprep.subr.mxu0 0.0
      %2140 = vmatpush2.msra.mxu0 0.0
      %2141 = vmatprep.subr.mxu0 0.0
      %2142 = vmatpush2.msra.mxu0 0.0
      %2143 = vmatprep.subr.mxu0 0.0
      %2144 = vmatpush2.msra.mxu0 0.0
      %2145 = vmatprep.subr.mxu0 0.0
      %2146 = vmatpush2.msra.mxu0 0.0
      %2147 = vmatprep.mubr.f32.mxu0 0.0
      %v2148 = vand.u32 %v1923, 4294901760
      %v2149 = vsub.f32 %v1923, %v2148
      %2150 = vmatmul.mubr.f32.gmra.mxu0 %v2149
      %v2151 = vpop.f32.mrf.mxu0
      %v2152 = vadd.f32 %v2078, %v2151
      %v2153 = vpop.f32.mrf.mxu0
      %2154 = vdwg.mxu0
      %2155 = vmatprep.subr.mxu0 0.0
      %2156 = vmatpush1.msra.mxu0 0.0
      %2157 = vmatprep.subr.mxu0 0.0
      %2158 = vmatpush1.msra.mxu0 0.0
      %2159 = vmatprep.subr.mxu0 0.0
      %2160 = vmatpush1.msra.mxu0 0.0
      %2161 = vmatprep.subr.mxu0 0.0
      %2162 = vmatpush1.msra.mxu0 0.0
      %2163 = vmatprep.subr.mxu0 0.0
      %2164 = vmatpush1.msra.mxu0 0.0
      %2165 = vmatprep.subr.mxu0 0.0
      %2166 = vmatpush1.msra.mxu0 0.0
      %2167 = vmatprep.subr.mxu0 0.0
      %2168 = vmatpush1.msra.mxu0 0.0
      %2169 = vmatprep.subr.mxu0 0.0
      %2170 = vmatpush1.msra.mxu0 0.0
      %2171 = vmatprep.subr.mxu0 0.0
      %2172 = vmatpush1.msra.mxu0 0.0
      %2173 = vmatprep.subr.mxu0 0.0
      %2174 = vmatpush1.msra.mxu0 0.0
      %2175 = vmatprep.subr.mxu0 0.0
      %2176 = vmatpush1.msra.mxu0 0.0
      %2177 = vmatprep.subr.mxu0 0.0
      %2178 = vmatpush1.msra.mxu0 0.0
      %2179 = vmatprep.subr.mxu0 0.0
      %2180 = vmatpush1.msra.mxu0 0.0
      %2181 = vmatprep.subr.mxu0 0.0
      %2182 = vmatpush1.msra.mxu0 0.0
      %2183 = vmatprep.subr.mxu0 0.0
      %2184 = vmatpush1.msra.mxu0 0.0
      %2185 = vmatprep.subr.mxu0 0.0
      %v2186 = vand.u32 %v1927, 4294901760
      %2187 = vmatpush1.msra.mxu0 %v2186
      %2188 = vmatprep.subr.mxu0 0.0
      %2189 = vmatpush2.msra.mxu0 0.0
      %2190 = vmatprep.subr.mxu0 0.0
      %2191 = vmatpush2.msra.mxu0 0.0
      %2192 = vmatprep.subr.mxu0 0.0
      %2193 = vmatpush2.msra.mxu0 0.0
      %2194 = vmatprep.subr.mxu0 0.0
      %2195 = vmatpush2.msra.mxu0 0.0
      %2196 = vmatprep.subr.mxu0 0.0
      %2197 = vmatpush2.msra.mxu0 0.0
      %2198 = vmatprep.subr.mxu0 0.0
      %2199 = vmatpush2.msra.mxu0 0.0
      %2200 = vmatprep.subr.mxu0 0.0
      %2201 = vmatpush2.msra.mxu0 0.0
      %2202 = vmatprep.subr.mxu0 0.0
      %2203 = vmatpush2.msra.mxu0 0.0
      %2204 = vmatprep.subr.mxu0 0.0
      %2205 = vmatpush2.msra.mxu0 0.0
      %2206 = vmatprep.subr.mxu0 0.0
      %2207 = vmatpush2.msra.mxu0 0.0
      %2208 = vmatprep.subr.mxu0 0.0
      %2209 = vmatpush2.msra.mxu0 0.0
      %2210 = vmatprep.subr.mxu0 0.0
      %2211 = vmatpush2.msra.mxu0 0.0
      %2212 = vmatprep.subr.mxu0 0.0
      %2213 = vmatpush2.msra.mxu0 0.0
      %2214 = vmatprep.subr.mxu0 0.0
      %2215 = vmatpush2.msra.mxu0 0.0
      %2216 = vmatprep.subr.mxu0 0.0
      %2217 = vmatpush2.msra.mxu0 0.0
      %2218 = vmatprep.subr.mxu0 0.0
      %2219 = vmatpush2.msra.mxu0 0.0
      %2220 = vmatprep.mubr.f32.mxu0 0.0
      %v2221 = vand.u32 %v1923, 4294901760
      %v2222 = vsub.f32 %v1923, %v2221
      %v2223 = vand.u32 %v2222, 4294901760
      %2224 = vmatmul.mubr.f32.gmra.mxu0 %v2223
      %v2225 = vpop.f32.mrf.mxu0
      %v2226 = vadd.f32 %v2152, %v2225
      %v2227 = vpop.f32.mrf.mxu0
      %2228 = vdwg.mxu0
      %2229 = vmatprep.subr.mxu0 0.0
      %2230 = vmatpush1.msra.mxu0 0.0
      %2231 = vmatprep.subr.mxu0 0.0
      %2232 = vmatpush1.msra.mxu0 0.0
      %2233 = vmatprep.subr.mxu0 0.0
      %2234 = vmatpush1.msra.mxu0 0.0
      %2235 = vmatprep.subr.mxu0 0.0
      %2236 = vmatpush1.msra.mxu0 0.0
      %2237 = vmatprep.subr.mxu0 0.0
      %2238 = vmatpush1.msra.mxu0 0.0
      %2239 = vmatprep.subr.mxu0 0.0
      %2240 = vmatpush1.msra.mxu0 0.0
      %2241 = vmatprep.subr.mxu0 0.0
      %2242 = vmatpush1.msra.mxu0 0.0
      %2243 = vmatprep.subr.mxu0 0.0
      %2244 = vmatpush1.msra.mxu0 0.0
      %2245 = vmatprep.subr.mxu0 0.0
      %2246 = vmatpush1.msra.mxu0 0.0
      %2247 = vmatprep.subr.mxu0 0.0
      %2248 = vmatpush1.msra.mxu0 0.0
      %2249 = vmatprep.subr.mxu0 0.0
      %2250 = vmatpush1.msra.mxu0 0.0
      %2251 = vmatprep.subr.mxu0 0.0
      %2252 = vmatpush1.msra.mxu0 0.0
      %2253 = vmatprep.subr.mxu0 0.0
      %2254 = vmatpush1.msra.mxu0 0.0
      %2255 = vmatprep.subr.mxu0 0.0
      %2256 = vmatpush1.msra.mxu0 0.0
      %2257 = vmatprep.subr.mxu0 0.0
      %2258 = vmatpush1.msra.mxu0 0.0
      %2259 = vmatprep.subr.mxu0 0.0
      %v2260 = vand.u32 %v1927, 4294901760
      %v2261 = vsub.f32 %v1927, %v2260
      %v2262 = vand.u32 %v2261, 4294901760
      %2263 = vmatpush1.msra.mxu0 %v2262
      %2264 = vmatprep.subr.mxu0 0.0
      %2265 = vmatpush2.msra.mxu0 0.0
      %2266 = vmatprep.subr.mxu0 0.0
      %2267 = vmatpush2.msra.mxu0 0.0
      %2268 = vmatprep.subr.mxu0 0.0
      %2269 = vmatpush2.msra.mxu0 0.0
      %2270 = vmatprep.subr.mxu0 0.0
      %2271 = vmatpush2.msra.mxu0 0.0
      %2272 = vmatprep.subr.mxu0 0.0
      %2273 = vmatpush2.msra.mxu0 0.0
      %2274 = vmatprep.subr.mxu0 0.0
      %2275 = vmatpush2.msra.mxu0 0.0
      %2276 = vmatprep.subr.mxu0 0.0
      %2277 = vmatpush2.msra.mxu0 0.0
      %2278 = vmatprep.subr.mxu0 0.0
      %2279 = vmatpush2.msra.mxu0 0.0
      %2280 = vmatprep.subr.mxu0 0.0
      %2281 = vmatpush2.msra.mxu0 0.0
      %2282 = vmatprep.subr.mxu0 0.0
      %2283 = vmatpush2.msra.mxu0 0.0
      %2284 = vmatprep.subr.mxu0 0.0
      %2285 = vmatpush2.msra.mxu0 0.0
      %2286 = vmatprep.subr.mxu0 0.0
      %2287 = vmatpush2.msra.mxu0 0.0
      %2288 = vmatprep.subr.mxu0 0.0
      %2289 = vmatpush2.msra.mxu0 0.0
      %2290 = vmatprep.subr.mxu0 0.0
      %2291 = vmatpush2.msra.mxu0 0.0
      %2292 = vmatprep.subr.mxu0 0.0
      %2293 = vmatpush2.msra.mxu0 0.0
      %2294 = vmatprep.subr.mxu0 0.0
      %2295 = vmatpush2.msra.mxu0 0.0
      %2296 = vmatprep.mubr.f32.mxu0 0.0
      %v2297 = vand.u32 %v1923, 4294901760
      %2298 = vmatmul.mubr.f32.gmra.mxu0 %v2297
      %v2299 = vpop.f32.mrf.mxu0
      %v2300 = vadd.f32 %v2226, %v2299
      %v2301 = vpop.f32.mrf.mxu0
      %2302 = vdwg.mxu0
      %2303 = vmatprep.subr.mxu0 0.0
      %2304 = vmatpush1.msra.mxu0 0.0
      %2305 = vmatprep.subr.mxu0 0.0
      %2306 = vmatpush1.msra.mxu0 0.0
      %2307 = vmatprep.subr.mxu0 0.0
      %2308 = vmatpush1.msra.mxu0 0.0
      %2309 = vmatprep.subr.mxu0 0.0
      %2310 = vmatpush1.msra.mxu0 0.0
      %2311 = vmatprep.subr.mxu0 0.0
      %2312 = vmatpush1.msra.mxu0 0.0
      %2313 = vmatprep.subr.mxu0 0.0
      %2314 = vmatpush1.msra.mxu0 0.0
      %2315 = vmatprep.subr.mxu0 0.0
      %2316 = vmatpush1.msra.mxu0 0.0
      %2317 = vmatprep.subr.mxu0 0.0
      %2318 = vmatpush1.msra.mxu0 0.0
      %2319 = vmatprep.subr.mxu0 0.0
      %2320 = vmatpush1.msra.mxu0 0.0
      %2321 = vmatprep.subr.mxu0 0.0
      %2322 = vmatpush1.msra.mxu0 0.0
      %2323 = vmatprep.subr.mxu0 0.0
      %2324 = vmatpush1.msra.mxu0 0.0
      %2325 = vmatprep.subr.mxu0 0.0
      %2326 = vmatpush1.msra.mxu0 0.0
      %2327 = vmatprep.subr.mxu0 0.0
      %2328 = vmatpush1.msra.mxu0 0.0
      %2329 = vmatprep.subr.mxu0 0.0
      %2330 = vmatpush1.msra.mxu0 0.0
      %2331 = vmatprep.subr.mxu0 0.0
      %2332 = vmatpush1.msra.mxu0 0.0
      %2333 = vmatprep.subr.mxu0 0.0
      %v2334 = vand.u32 %v1927, 4294901760
      %2335 = vmatpush1.msra.mxu0 %v2334
      %2336 = vmatprep.subr.mxu0 0.0
      %2337 = vmatpush2.msra.mxu0 0.0
      %2338 = vmatprep.subr.mxu0 0.0
      %2339 = vmatpush2.msra.mxu0 0.0
      %2340 = vmatprep.subr.mxu0 0.0
      %2341 = vmatpush2.msra.mxu0 0.0
      %2342 = vmatprep.subr.mxu0 0.0
      %2343 = vmatpush2.msra.mxu0 0.0
      %2344 = vmatprep.subr.mxu0 0.0
      %2345 = vmatpush2.msra.mxu0 0.0
      %2346 = vmatprep.subr.mxu0 0.0
      %2347 = vmatpush2.msra.mxu0 0.0
      %2348 = vmatprep.subr.mxu0 0.0
      %2349 = vmatpush2.msra.mxu0 0.0
      %2350 = vmatprep.subr.mxu0 0.0
      %2351 = vmatpush2.msra.mxu0 0.0
      %2352 = vmatprep.subr.mxu0 0.0
      %2353 = vmatpush2.msra.mxu0 0.0
      %2354 = vmatprep.subr.mxu0 0.0
      %2355 = vmatpush2.msra.mxu0 0.0
      %2356 = vmatprep.subr.mxu0 0.0
      %2357 = vmatpush2.msra.mxu0 0.0
      %2358 = vmatprep.subr.mxu0 0.0
      %2359 = vmatpush2.msra.mxu0 0.0
      %2360 = vmatprep.subr.mxu0 0.0
      %2361 = vmatpush2.msra.mxu0 0.0
      %2362 = vmatprep.subr.mxu0 0.0
      %2363 = vmatpush2.msra.mxu0 0.0
      %2364 = vmatprep.subr.mxu0 0.0
      %2365 = vmatpush2.msra.mxu0 0.0
      %2366 = vmatprep.subr.mxu0 0.0
      %2367 = vmatpush2.msra.mxu0 0.0
      %2368 = vmatprep.mubr.f32.mxu0 0.0
      %v2369 = vand.u32 %v1923, 4294901760
      %2370 = vmatmul.mubr.f32.gmra.mxu0 %v2369
      %v2371 = vpop.f32.mrf.mxu0
      %v2372 = vadd.f32 %v2300, %v2371
      %v2373 = vpop.f32.mrf.mxu0
      %2374 = vdwg.mxu0
      %v2375 = vld [vmem:[#allocation2] sm:$0x1]
      %v2376 = vmul.f32 %v2372, %v1245
      %v2377 = vrot.slane %v2376, 4
      %v2378 = vadd.f32 %v2376, %v2377
      %v2379 = vrot.slane %v2378, 2
      %v2380 = vadd.f32 %v2378, %v2379
      %v2381 = vrot.slane %v2380, 1
      %v2382 = vadd.f32 %v2380, %v2381
      %v2383 = vadd.f32 %v2375, %v2382
      %2384 = vst [vmem:[#allocation2] sm:$0x1] %v2383
      %v2385 = vld [vmem:[#allocation3] sm:$0x1]
      %v2386 = vsel %vm1921, %v1919, 0.0
      %v2387 = vrot.slane %v2386, 4
      %v2388 = vadd.f32 %v2386, %v2387
      %v2389 = vrot.slane %v2388, 2
      %v2390 = vadd.f32 %v2388, %v2389
      %v2391 = vrot.slane %v2390, 1
      %v2392 = vadd.f32 %v2390, %v2391
      %v2393 = vadd.f32 %v2385, %v2392
      %vm2394 = vcmask 24576
      %2395 = vst.msk [vmem:[#allocation3] sm:$0x1] %vm2394, %v2393
    $region37: #{tpu_custom_call.1} parent=1 // pred_fallthru
      _
    // Predicated region
    $region38: #{tpu_custom_call.1} parent=1 // pred_check
      %p2396 = pneg %p69
    $region39: #{tpu_custom_call.1} parent=1 // pred_check_branch
      %2398 = sbr.rel (%p2396) target = $region41
    $region40: #{tpu_custom_call.1} parent=1 // pred_region
      %v2399 = vld [vmem:[#allocation3] sm:$0x1]
      %vm2400 = vcmask 24576
      %v2401 = vsel %vm2400, %v2399, 0.0
      %2402 = vadd.xlane.f32.xlu0 %v2401
      %v2403 = vpop.xlane.xlu0 %2402
      %v2404 = vld [vmem:[#allocation2] sm:$0x1]
      %v2405 = vld [vmem:[%s4] sm:$0xff]
      %v2406 = vld [vmem:[%s4 + $0x8] sm:$0xff]
      %v2407 = vld [vmem:[%s4 + $0x10] sm:$0xff]
      %v2408 = vld [vmem:[%s4 + $0x18] sm:$0xff]
      %v2409 = vld [vmem:[%s4 + $0x20] sm:$0xff]
      %v2410 = vld [vmem:[%s4 + $0x28] sm:$0xff]
      %v2411 = vld [vmem:[%s4 + $0x30] sm:$0xff]
      %v2412 = vld [vmem:[%s4 + $0x38] sm:$0xff]
      %v2413 = vld [vmem:[%s4 + $0x40] sm:$0xff]
      %v2414 = vld [vmem:[%s4 + $0x48] sm:$0xff]
      %v2415 = vld [vmem:[%s4 + $0x50] sm:$0xff]
      %v2416 = vld [vmem:[%s4 + $0x58] sm:$0xff]
      %v2417 = vld [vmem:[%s4 + $0x60] sm:$0xff]
      %v2418 = vld [vmem:[%s4 + $0x68] sm:$0xff]
      %v2419 = vld [vmem:[%s4 + $0x70] sm:$0xff]
      %v2420 = vld [vmem:[%s4 + $0x78] sm:$0xff]
      %v2421 = vld [vmem:[%s5] sm:$0x1]
      %v2422 = vmul.f32 %v2403, %v2421
      %2423 = vmatprep.subr.mxu0 0.0
      %v2424 = vand.u32 %v2420, 4294901760
      %2425 = vmatpush1.msra.mxu0 %v2424
      %2426 = vmatprep.subr.mxu0 0.0
      %v2427 = vand.u32 %v2419, 4294901760
      %2428 = vmatpush1.msra.mxu0 %v2427
      %2429 = vmatprep.subr.mxu0 0.0
      %v2430 = vand.u32 %v2418, 4294901760
      %2431 = vmatpush1.msra.mxu0 %v2430
      %2432 = vmatprep.subr.mxu0 0.0
      %v2433 = vand.u32 %v2417, 4294901760
      %2434 = vmatpush1.msra.mxu0 %v2433
      %2435 = vmatprep.subr.mxu0 0.0
      %v2436 = vand.u32 %v2416, 4294901760
      %2437 = vmatpush1.msra.mxu0 %v2436
      %2438 = vmatprep.subr.mxu0 0.0
      %v2439 = vand.u32 %v2415, 4294901760
      %2440 = vmatpush1.msra.mxu0 %v2439
      %2441 = vmatprep.subr.mxu0 0.0
      %v2442 = vand.u32 %v2414, 4294901760
      %2443 = vmatpush1.msra.mxu0 %v2442
      %2444 = vmatprep.subr.mxu0 0.0
      %v2445 = vand.u32 %v2413, 4294901760
      %2446 = vmatpush1.msra.mxu0 %v2445
      %2447 = vmatprep.subr.mxu0 0.0
      %v2448 = vand.u32 %v2412, 4294901760
      %2449 = vmatpush1.msra.mxu0 %v2448
      %2450 = vmatprep.subr.mxu0 0.0
      %v2451 = vand.u32 %v2411, 4294901760
      %2452 = vmatpush1.msra.mxu0 %v2451
      %2453 = vmatprep.subr.mxu0 0.0
      %v2454 = vand.u32 %v2410, 4294901760
      %2455 = vmatpush1.msra.mxu0 %v2454
      %2456 = vmatprep.subr.mxu0 0.0
      %v2457 = vand.u32 %v2409, 4294901760
      %2458 = vmatpush1.msra.mxu0 %v2457
      %2459 = vmatprep.subr.mxu0 0.0
      %v2460 = vand.u32 %v2408, 4294901760
      %2461 = vmatpush1.msra.mxu0 %v2460
      %2462 = vmatprep.subr.mxu0 0.0
      %v2463 = vand.u32 %v2407, 4294901760
      %2464 = vmatpush1.msra.mxu0 %v2463
      %2465 = vmatprep.subr.mxu0 0.0
      %v2466 = vand.u32 %v2406, 4294901760
      %2467 = vmatpush1.msra.mxu0 %v2466
      %2468 = vmatprep.subr.mxu0 0.0
      %v2469 = vand.u32 %v2405, 4294901760
      %2470 = vmatpush1.msra.mxu0 %v2469
      %2471 = vmatprep.subr.mxu0 0.0
      %2472 = vmatpush2.msra.mxu0 0.0
      %2473 = vmatprep.subr.mxu0 0.0
      %2474 = vmatpush2.msra.mxu0 0.0
      %2475 = vmatprep.subr.mxu0 0.0
      %2476 = vmatpush2.msra.mxu0 0.0
      %2477 = vmatprep.subr.mxu0 0.0
      %2478 = vmatpush2.msra.mxu0 0.0
      %2479 = vmatprep.subr.mxu0 0.0
      %2480 = vmatpush2.msra.mxu0 0.0
      %2481 = vmatprep.subr.mxu0 0.0
      %2482 = vmatpush2.msra.mxu0 0.0
      %2483 = vmatprep.subr.mxu0 0.0
      %2484 = vmatpush2.msra.mxu0 0.0
      %2485 = vmatprep.subr.mxu0 0.0
      %2486 = vmatpush2.msra.mxu0 0.0
      %2487 = vmatprep.subr.mxu0 0.0
      %2488 = vmatpush2.msra.mxu0 0.0
      %2489 = vmatprep.subr.mxu0 0.0
      %2490 = vmatpush2.msra.mxu0 0.0
      %2491 = vmatprep.subr.mxu0 0.0
      %2492 = vmatpush2.msra.mxu0 0.0
      %2493 = vmatprep.subr.mxu0 0.0
      %2494 = vmatpush2.msra.mxu0 0.0
      %2495 = vmatprep.subr.mxu0 0.0
      %2496 = vmatpush2.msra.mxu0 0.0
      %2497 = vmatprep.subr.mxu0 0.0
      %2498 = vmatpush2.msra.mxu0 0.0
      %2499 = vmatprep.subr.mxu0 0.0
      %2500 = vmatpush2.msra.mxu0 0.0
      %2501 = vmatprep.subr.mxu0 0.0
      %2502 = vmatpush2.msra.mxu0 0.0
      %2503 = vmatprep.mubr.f32.mxu0 0.0
      %v2504 = vand.u32 %v2404, 4294901760
      %v2505 = vsub.f32 %v2404, %v2504
      %v2506 = vand.u32 %v2505, 4294901760
      %v2507 = vsub.f32 %v2505, %v2506
      %v2508 = vand.u32 %v2507, 4294901760
      %2509 = vmatmul.mubr.f32.gmra.mxu0 %v2508
      %v2510 = vpop.f32.mrf.mxu0
      %v2511 = vadd.f32 %v2422, %v2510
      %v2512 = vpop.f32.mrf.mxu0
      %2513 = vdwg.mxu0
      %2514 = vmatprep.subr.mxu0 0.0
      %v2515 = vand.u32 %v2420, 4294901760
      %v2516 = vsub.f32 %v2420, %v2515
      %v2517 = vand.u32 %v2516, 4294901760
      %v2518 = vsub.f32 %v2516, %v2517
      %v2519 = vand.u32 %v2518, 4294901760
      %2520 = vmatpush1.msra.mxu0 %v2519
      %2521 = vmatprep.subr.mxu0 0.0
      %v2522 = vand.u32 %v2419, 4294901760
      %v2523 = vsub.f32 %v2419, %v2522
      %v2524 = vand.u32 %v2523, 4294901760
      %v2525 = vsub.f32 %v2523, %v2524
      %v2526 = vand.u32 %v2525, 4294901760
      %2527 = vmatpush1.msra.mxu0 %v2526
      %2528 = vmatprep.subr.mxu0 0.0
      %v2529 = vand.u32 %v2418, 4294901760
      %v2530 = vsub.f32 %v2418, %v2529
      %v2531 = vand.u32 %v2530, 4294901760
      %v2532 = vsub.f32 %v2530, %v2531
      %v2533 = vand.u32 %v2532, 4294901760
      %2534 = vmatpush1.msra.mxu0 %v2533
      %2535 = vmatprep.subr.mxu0 0.0
      %v2536 = vand.u32 %v2417, 4294901760
      %v2537 = vsub.f32 %v2417, %v2536
      %v2538 = vand.u32 %v2537, 4294901760
      %v2539 = vsub.f32 %v2537, %v2538
      %v2540 = vand.u32 %v2539, 4294901760
      %2541 = vmatpush1.msra.mxu0 %v2540
      %2542 = vmatprep.subr.mxu0 0.0
      %v2543 = vand.u32 %v2416, 4294901760
      %v2544 = vsub.f32 %v2416, %v2543
      %v2545 = vand.u32 %v2544, 4294901760
      %v2546 = vsub.f32 %v2544, %v2545
      %v2547 = vand.u32 %v2546, 4294901760
      %2548 = vmatpush1.msra.mxu0 %v2547
      %2549 = vmatprep.subr.mxu0 0.0
      %v2550 = vand.u32 %v2415, 4294901760
      %v2551 = vsub.f32 %v2415, %v2550
      %v2552 = vand.u32 %v2551, 4294901760
      %v2553 = vsub.f32 %v2551, %v2552
      %v2554 = vand.u32 %v2553, 4294901760
      %2555 = vmatpush1.msra.mxu0 %v2554
      %2556 = vmatprep.subr.mxu0 0.0
      %v2557 = vand.u32 %v2414, 4294901760
      %v2558 = vsub.f32 %v2414, %v2557
      %v2559 = vand.u32 %v2558, 4294901760
      %v2560 = vsub.f32 %v2558, %v2559
      %v2561 = vand.u32 %v2560, 4294901760
      %2562 = vmatpush1.msra.mxu0 %v2561
      %2563 = vmatprep.subr.mxu0 0.0
      %v2564 = vand.u32 %v2413, 4294901760
      %v2565 = vsub.f32 %v2413, %v2564
      %v2566 = vand.u32 %v2565, 4294901760
      %v2567 = vsub.f32 %v2565, %v2566
      %v2568 = vand.u32 %v2567, 4294901760
      %2569 = vmatpush1.msra.mxu0 %v2568
      %2570 = vmatprep.subr.mxu0 0.0
      %v2571 = vand.u32 %v2412, 4294901760
      %v2572 = vsub.f32 %v2412, %v2571
      %v2573 = vand.u32 %v2572, 4294901760
      %v2574 = vsub.f32 %v2572, %v2573
      %v2575 = vand.u32 %v2574, 4294901760
      %2576 = vmatpush1.msra.mxu0 %v2575
      %2577 = vmatprep.subr.mxu0 0.0
      %v2578 = vand.u32 %v2411, 4294901760
      %v2579 = vsub.f32 %v2411, %v2578
      %v2580 = vand.u32 %v2579, 4294901760
      %v2581 = vsub.f32 %v2579, %v2580
      %v2582 = vand.u32 %v2581, 4294901760
      %2583 = vmatpush1.msra.mxu0 %v2582
      %2584 = vmatprep.subr.mxu0 0.0
      %v2585 = vand.u32 %v2410, 4294901760
      %v2586 = vsub.f32 %v2410, %v2585
      %v2587 = vand.u32 %v2586, 4294901760
      %v2588 = vsub.f32 %v2586, %v2587
      %v2589 = vand.u32 %v2588, 4294901760
      %2590 = vmatpush1.msra.mxu0 %v2589
      %2591 = vmatprep.subr.mxu0 0.0
      %v2592 = vand.u32 %v2409, 4294901760
      %v2593 = vsub.f32 %v2409, %v2592
      %v2594 = vand.u32 %v2593, 4294901760
      %v2595 = vsub.f32 %v2593, %v2594
      %v2596 = vand.u32 %v2595, 4294901760
      %2597 = vmatpush1.msra.mxu0 %v2596
      %2598 = vmatprep.subr.mxu0 0.0
      %v2599 = vand.u32 %v2408, 4294901760
      %v2600 = vsub.f32 %v2408, %v2599
      %v2601 = vand.u32 %v2600, 4294901760
      %v2602 = vsub.f32 %v2600, %v2601
      %v2603 = vand.u32 %v2602, 4294901760
      %2604 = vmatpush1.msra.mxu0 %v2603
      %2605 = vmatprep.subr.mxu0 0.0
      %v2606 = vand.u32 %v2407, 4294901760
      %v2607 = vsub.f32 %v2407, %v2606
      %v2608 = vand.u32 %v2607, 4294901760
      %v2609 = vsub.f32 %v2607, %v2608
      %v2610 = vand.u32 %v2609, 4294901760
      %2611 = vmatpush1.msra.mxu0 %v2610
      %2612 = vmatprep.subr.mxu0 0.0
      %v2613 = vand.u32 %v2406, 4294901760
      %v2614 = vsub.f32 %v2406, %v2613
      %v2615 = vand.u32 %v2614, 4294901760
      %v2616 = vsub.f32 %v2614, %v2615
      %v2617 = vand.u32 %v2616, 4294901760
      %2618 = vmatpush1.msra.mxu0 %v2617
      %2619 = vmatprep.subr.mxu0 0.0
      %v2620 = vand.u32 %v2405, 4294901760
      %v2621 = vsub.f32 %v2405, %v2620
      %v2622 = vand.u32 %v2621, 4294901760
      %v2623 = vsub.f32 %v2621, %v2622
      %v2624 = vand.u32 %v2623, 4294901760
      %2625 = vmatpush1.msra.mxu0 %v2624
      %2626 = vmatprep.subr.mxu0 0.0
      %2627 = vmatpush2.msra.mxu0 0.0
      %2628 = vmatprep.subr.mxu0 0.0
      %2629 = vmatpush2.msra.mxu0 0.0
      %2630 = vmatprep.subr.mxu0 0.0
      %2631 = vmatpush2.msra.mxu0 0.0
      %2632 = vmatprep.subr.mxu0 0.0
      %2633 = vmatpush2.msra.mxu0 0.0
      %2634 = vmatprep.subr.mxu0 0.0
      %2635 = vmatpush2.msra.mxu0 0.0
      %2636 = vmatprep.subr.mxu0 0.0
      %2637 = vmatpush2.msra.mxu0 0.0
      %2638 = vmatprep.subr.mxu0 0.0
      %2639 = vmatpush2.msra.mxu0 0.0
      %2640 = vmatprep.subr.mxu0 0.0
      %2641 = vmatpush2.msra.mxu0 0.0
      %2642 = vmatprep.subr.mxu0 0.0
      %2643 = vmatpush2.msra.mxu0 0.0
      %2644 = vmatprep.subr.mxu0 0.0
      %2645 = vmatpush2.msra.mxu0 0.0
      %2646 = vmatprep.subr.mxu0 0.0
      %2647 = vmatpush2.msra.mxu0 0.0
      %2648 = vmatprep.subr.mxu0 0.0
      %2649 = vmatpush2.msra.mxu0 0.0
      %2650 = vmatprep.subr.mxu0 0.0
      %2651 = vmatpush2.msra.mxu0 0.0
      %2652 = vmatprep.subr.mxu0 0.0
      %2653 = vmatpush2.msra.mxu0 0.0
      %2654 = vmatprep.subr.mxu0 0.0
      %2655 = vmatpush2.msra.mxu0 0.0
      %2656 = vmatprep.subr.mxu0 0.0
      %2657 = vmatpush2.msra.mxu0 0.0
      %2658 = vmatprep.mubr.f32.mxu0 0.0
      %v2659 = vand.u32 %v2404, 4294901760
      %2660 = vmatmul.mubr.f32.gmra.mxu0 %v2659
      %v2661 = vpop.f32.mrf.mxu0
      %v2662 = vadd.f32 %v2511, %v2661
      %v2663 = vpop.f32.mrf.mxu0
      %2664 = vdwg.mxu0
      %2665 = vmatprep.subr.mxu0 0.0
      %v2666 = vand.u32 %v2420, 4294901760
      %v2667 = vsub.f32 %v2420, %v2666
      %2668 = vmatpush1.msra.mxu0 %v2667
      %2669 = vmatprep.subr.mxu0 0.0
      %v2670 = vand.u32 %v2419, 4294901760
      %v2671 = vsub.f32 %v2419, %v2670
      %2672 = vmatpush1.msra.mxu0 %v2671
      %2673 = vmatprep.subr.mxu0 0.0
      %v2674 = vand.u32 %v2418, 4294901760
      %v2675 = vsub.f32 %v2418, %v2674
      %2676 = vmatpush1.msra.mxu0 %v2675
      %2677 = vmatprep.subr.mxu0 0.0
      %v2678 = vand.u32 %v2417, 4294901760
      %v2679 = vsub.f32 %v2417, %v2678
      %2680 = vmatpush1.msra.mxu0 %v2679
      %2681 = vmatprep.subr.mxu0 0.0
      %v2682 = vand.u32 %v2416, 4294901760
      %v2683 = vsub.f32 %v2416, %v2682
      %2684 = vmatpush1.msra.mxu0 %v2683
      %2685 = vmatprep.subr.mxu0 0.0
      %v2686 = vand.u32 %v2415, 4294901760
      %v2687 = vsub.f32 %v2415, %v2686
      %2688 = vmatpush1.msra.mxu0 %v2687
      %2689 = vmatprep.subr.mxu0 0.0
      %v2690 = vand.u32 %v2414, 4294901760
      %v2691 = vsub.f32 %v2414, %v2690
      %2692 = vmatpush1.msra.mxu0 %v2691
      %2693 = vmatprep.subr.mxu0 0.0
      %v2694 = vand.u32 %v2413, 4294901760
      %v2695 = vsub.f32 %v2413, %v2694
      %2696 = vmatpush1.msra.mxu0 %v2695
      %2697 = vmatprep.subr.mxu0 0.0
      %v2698 = vand.u32 %v2412, 4294901760
      %v2699 = vsub.f32 %v2412, %v2698
      %2700 = vmatpush1.msra.mxu0 %v2699
      %2701 = vmatprep.subr.mxu0 0.0
      %v2702 = vand.u32 %v2411, 4294901760
      %v2703 = vsub.f32 %v2411, %v2702
      %2704 = vmatpush1.msra.mxu0 %v2703
      %2705 = vmatprep.subr.mxu0 0.0
      %v2706 = vand.u32 %v2410, 4294901760
      %v2707 = vsub.f32 %v2410, %v2706
      %2708 = vmatpush1.msra.mxu0 %v2707
      %2709 = vmatprep.subr.mxu0 0.0
      %v2710 = vand.u32 %v2409, 4294901760
      %v2711 = vsub.f32 %v2409, %v2710
      %2712 = vmatpush1.msra.mxu0 %v2711
      %2713 = vmatprep.subr.mxu0 0.0
      %v2714 = vand.u32 %v2408, 4294901760
      %v2715 = vsub.f32 %v2408, %v2714
      %2716 = vmatpush1.msra.mxu0 %v2715
      %2717 = vmatprep.subr.mxu0 0.0
      %v2718 = vand.u32 %v2407, 4294901760
      %v2719 = vsub.f32 %v2407, %v2718
      %2720 = vmatpush1.msra.mxu0 %v2719
      %2721 = vmatprep.subr.mxu0 0.0
      %v2722 = vand.u32 %v2406, 4294901760
      %v2723 = vsub.f32 %v2406, %v2722
      %2724 = vmatpush1.msra.mxu0 %v2723
      %2725 = vmatprep.subr.mxu0 0.0
      %v2726 = vand.u32 %v2405, 4294901760
      %v2727 = vsub.f32 %v2405, %v2726
      %2728 = vmatpush1.msra.mxu0 %v2727
      %2729 = vmatprep.subr.mxu0 0.0
      %2730 = vmatpush2.msra.mxu0 0.0
      %2731 = vmatprep.subr.mxu0 0.0
      %2732 = vmatpush2.msra.mxu0 0.0
      %2733 = vmatprep.subr.mxu0 0.0
      %2734 = vmatpush2.msra.mxu0 0.0
      %2735 = vmatprep.subr.mxu0 0.0
      %2736 = vmatpush2.msra.mxu0 0.0
      %2737 = vmatprep.subr.mxu0 0.0
      %2738 = vmatpush2.msra.mxu0 0.0
      %2739 = vmatprep.subr.mxu0 0.0
      %2740 = vmatpush2.msra.mxu0 0.0
      %2741 = vmatprep.subr.mxu0 0.0
      %2742 = vmatpush2.msra.mxu0 0.0
      %2743 = vmatprep.subr.mxu0 0.0
      %2744 = vmatpush2.msra.mxu0 0.0
      %2745 = vmatprep.subr.mxu0 0.0
      %2746 = vmatpush2.msra.mxu0 0.0
      %2747 = vmatprep.subr.mxu0 0.0
      %2748 = vmatpush2.msra.mxu0 0.0
      %2749 = vmatprep.subr.mxu0 0.0
      %2750 = vmatpush2.msra.mxu0 0.0
      %2751 = vmatprep.subr.mxu0 0.0
      %2752 = vmatpush2.msra.mxu0 0.0
      %2753 = vmatprep.subr.mxu0 0.0
      %2754 = vmatpush2.msra.mxu0 0.0
      %2755 = vmatprep.subr.mxu0 0.0
      %2756 = vmatpush2.msra.mxu0 0.0
      %2757 = vmatprep.subr.mxu0 0.0
      %2758 = vmatpush2.msra.mxu0 0.0
      %2759 = vmatprep.subr.mxu0 0.0
      %2760 = vmatpush2.msra.mxu0 0.0
      %2761 = vmatprep.mubr.f32.mxu0 0.0
      %v2762 = vand.u32 %v2404, 4294901760
      %v2763 = vsub.f32 %v2404, %v2762
      %2764 = vmatmul.mubr.f32.gmra.mxu0 %v2763
      %v2765 = vpop.f32.mrf.mxu0
      %v2766 = vadd.f32 %v2662, %v2765
      %v2767 = vpop.f32.mrf.mxu0
      %2768 = vdwg.mxu0
      %2769 = vmatprep.subr.mxu0 0.0
      %v2770 = vand.u32 %v2420, 4294901760
      %2771 = vmatpush1.msra.mxu0 %v2770
      %2772 = vmatprep.subr.mxu0 0.0
      %v2773 = vand.u32 %v2419, 4294901760
      %2774 = vmatpush1.msra.mxu0 %v2773
      %2775 = vmatprep.subr.mxu0 0.0
      %v2776 = vand.u32 %v2418, 4294901760
      %2777 = vmatpush1.msra.mxu0 %v2776
      %2778 = vmatprep.subr.mxu0 0.0
      %v2779 = vand.u32 %v2417, 4294901760
      %2780 = vmatpush1.msra.mxu0 %v2779
      %2781 = vmatprep.subr.mxu0 0.0
      %v2782 = vand.u32 %v2416, 4294901760
      %2783 = vmatpush1.msra.mxu0 %v2782
      %2784 = vmatprep.subr.mxu0 0.0
      %v2785 = vand.u32 %v2415, 4294901760
      %2786 = vmatpush1.msra.mxu0 %v2785
      %2787 = vmatprep.subr.mxu0 0.0
      %v2788 = vand.u32 %v2414, 4294901760
      %2789 = vmatpush1.msra.mxu0 %v2788
      %2790 = vmatprep.subr.mxu0 0.0
      %v2791 = vand.u32 %v2413, 4294901760
      %2792 = vmatpush1.msra.mxu0 %v2791
      %2793 = vmatprep.subr.mxu0 0.0
      %v2794 = vand.u32 %v2412, 4294901760
      %2795 = vmatpush1.msra.mxu0 %v2794
      %2796 = vmatprep.subr.mxu0 0.0
      %v2797 = vand.u32 %v2411, 4294901760
      %2798 = vmatpush1.msra.mxu0 %v2797
      %2799 = vmatprep.subr.mxu0 0.0
      %v2800 = vand.u32 %v2410, 4294901760
      %2801 = vmatpush1.msra.mxu0 %v2800
      %2802 = vmatprep.subr.mxu0 0.0
      %v2803 = vand.u32 %v2409, 4294901760
      %2804 = vmatpush1.msra.mxu0 %v2803
      %2805 = vmatprep.subr.mxu0 0.0
      %v2806 = vand.u32 %v2408, 4294901760
      %2807 = vmatpush1.msra.mxu0 %v2806
      %2808 = vmatprep.subr.mxu0 0.0
      %v2809 = vand.u32 %v2407, 4294901760
      %2810 = vmatpush1.msra.mxu0 %v2809
      %2811 = vmatprep.subr.mxu0 0.0
      %v2812 = vand.u32 %v2406, 4294901760
      %2813 = vmatpush1.msra.mxu0 %v2812
      %2814 = vmatprep.subr.mxu0 0.0
      %v2815 = vand.u32 %v2405, 4294901760
      %2816 = vmatpush1.msra.mxu0 %v2815
      %2817 = vmatprep.subr.mxu0 0.0
      %2818 = vmatpush2.msra.mxu0 0.0
      %2819 = vmatprep.subr.mxu0 0.0
      %2820 = vmatpush2.msra.mxu0 0.0
      %2821 = vmatprep.subr.mxu0 0.0
      %2822 = vmatpush2.msra.mxu0 0.0
      %2823 = vmatprep.subr.mxu0 0.0
      %2824 = vmatpush2.msra.mxu0 0.0
      %2825 = vmatprep.subr.mxu0 0.0
      %2826 = vmatpush2.msra.mxu0 0.0
      %2827 = vmatprep.subr.mxu0 0.0
      %2828 = vmatpush2.msra.mxu0 0.0
      %2829 = vmatprep.subr.mxu0 0.0
      %2830 = vmatpush2.msra.mxu0 0.0
      %2831 = vmatprep.subr.mxu0 0.0
      %2832 = vmatpush2.msra.mxu0 0.0
      %2833 = vmatprep.subr.mxu0 0.0
      %2834 = vmatpush2.msra.mxu0 0.0
      %2835 = vmatprep.subr.mxu0 0.0
      %2836 = vmatpush2.msra.mxu0 0.0
      %2837 = vmatprep.subr.mxu0 0.0
      %2838 = vmatpush2.msra.mxu0 0.0
      %2839 = vmatprep.subr.mxu0 0.0
      %2840 = vmatpush2.msra.mxu0 0.0
      %2841 = vmatprep.subr.mxu0 0.0
      %2842 = vmatpush2.msra.mxu0 0.0
      %2843 = vmatprep.subr.mxu0 0.0
      %2844 = vmatpush2.msra.mxu0 0.0
      %2845 = vmatprep.subr.mxu0 0.0
      %2846 = vmatpush2.msra.mxu0 0.0
      %2847 = vmatprep.subr.mxu0 0.0
      %2848 = vmatpush2.msra.mxu0 0.0
      %2849 = vmatprep.mubr.f32.mxu0 0.0
      %v2850 = vand.u32 %v2404, 4294901760
      %v2851 = vsub.f32 %v2404, %v2850
      %v2852 = vand.u32 %v2851, 4294901760
      %2853 = vmatmul.mubr.f32.gmra.mxu0 %v2852
      %v2854 = vpop.f32.mrf.mxu0
      %v2855 = vadd.f32 %v2766, %v2854
      %v2856 = vpop.f32.mrf.mxu0
      %2857 = vdwg.mxu0
      %2858 = vmatprep.subr.mxu0 0.0
      %v2859 = vand.u32 %v2420, 4294901760
      %v2860 = vsub.f32 %v2420, %v2859
      %v2861 = vand.u32 %v2860, 4294901760
      %2862 = vmatpush1.msra.mxu0 %v2861
      %2863 = vmatprep.subr.mxu0 0.0
      %v2864 = vand.u32 %v2419, 4294901760
      %v2865 = vsub.f32 %v2419, %v2864
      %v2866 = vand.u32 %v2865, 4294901760
      %2867 = vmatpush1.msra.mxu0 %v2866
      %2868 = vmatprep.subr.mxu0 0.0
      %v2869 = vand.u32 %v2418, 4294901760
      %v2870 = vsub.f32 %v2418, %v2869
      %v2871 = vand.u32 %v2870, 4294901760
      %2872 = vmatpush1.msra.mxu0 %v2871
      %2873 = vmatprep.subr.mxu0 0.0
      %v2874 = vand.u32 %v2417, 4294901760
      %v2875 = vsub.f32 %v2417, %v2874
      %v2876 = vand.u32 %v2875, 4294901760
      %2877 = vmatpush1.msra.mxu0 %v2876
      %2878 = vmatprep.subr.mxu0 0.0
      %v2879 = vand.u32 %v2416, 4294901760
      %v2880 = vsub.f32 %v2416, %v2879
      %v2881 = vand.u32 %v2880, 4294901760
      %2882 = vmatpush1.msra.mxu0 %v2881
      %2883 = vmatprep.subr.mxu0 0.0
      %v2884 = vand.u32 %v2415, 4294901760
      %v2885 = vsub.f32 %v2415, %v2884
      %v2886 = vand.u32 %v2885, 4294901760
      %2887 = vmatpush1.msra.mxu0 %v2886
      %2888 = vmatprep.subr.mxu0 0.0
      %v2889 = vand.u32 %v2414, 4294901760
      %v2890 = vsub.f32 %v2414, %v2889
      %v2891 = vand.u32 %v2890, 4294901760
      %2892 = vmatpush1.msra.mxu0 %v2891
      %2893 = vmatprep.subr.mxu0 0.0
      %v2894 = vand.u32 %v2413, 4294901760
      %v2895 = vsub.f32 %v2413, %v2894
      %v2896 = vand.u32 %v2895, 4294901760
      %2897 = vmatpush1.msra.mxu0 %v2896
      %2898 = vmatprep.subr.mxu0 0.0
      %v2899 = vand.u32 %v2412, 4294901760
      %v2900 = vsub.f32 %v2412, %v2899
      %v2901 = vand.u32 %v2900, 4294901760
      %2902 = vmatpush1.msra.mxu0 %v2901
      %2903 = vmatprep.subr.mxu0 0.0
      %v2904 = vand.u32 %v2411, 4294901760
      %v2905 = vsub.f32 %v2411, %v2904
      %v2906 = vand.u32 %v2905, 4294901760
      %2907 = vmatpush1.msra.mxu0 %v2906
      %2908 = vmatprep.subr.mxu0 0.0
      %v2909 = vand.u32 %v2410, 4294901760
      %v2910 = vsub.f32 %v2410, %v2909
      %v2911 = vand.u32 %v2910, 4294901760
      %2912 = vmatpush1.msra.mxu0 %v2911
      %2913 = vmatprep.subr.mxu0 0.0
      %v2914 = vand.u32 %v2409, 4294901760
      %v2915 = vsub.f32 %v2409, %v2914
      %v2916 = vand.u32 %v2915, 4294901760
      %2917 = vmatpush1.msra.mxu0 %v2916
      %2918 = vmatprep.subr.mxu0 0.0
      %v2919 = vand.u32 %v2408, 4294901760
      %v2920 = vsub.f32 %v2408, %v2919
      %v2921 = vand.u32 %v2920, 4294901760
      %2922 = vmatpush1.msra.mxu0 %v2921
      %2923 = vmatprep.subr.mxu0 0.0
      %v2924 = vand.u32 %v2407, 4294901760
      %v2925 = vsub.f32 %v2407, %v2924
      %v2926 = vand.u32 %v2925, 4294901760
      %2927 = vmatpush1.msra.mxu0 %v2926
      %2928 = vmatprep.subr.mxu0 0.0
      %v2929 = vand.u32 %v2406, 4294901760
      %v2930 = vsub.f32 %v2406, %v2929
      %v2931 = vand.u32 %v2930, 4294901760
      %2932 = vmatpush1.msra.mxu0 %v2931
      %2933 = vmatprep.subr.mxu0 0.0
      %v2934 = vand.u32 %v2405, 4294901760
      %v2935 = vsub.f32 %v2405, %v2934
      %v2936 = vand.u32 %v2935, 4294901760
      %2937 = vmatpush1.msra.mxu0 %v2936
      %2938 = vmatprep.subr.mxu0 0.0
      %2939 = vmatpush2.msra.mxu0 0.0
      %2940 = vmatprep.subr.mxu0 0.0
      %2941 = vmatpush2.msra.mxu0 0.0
      %2942 = vmatprep.subr.mxu0 0.0
      %2943 = vmatpush2.msra.mxu0 0.0
      %2944 = vmatprep.subr.mxu0 0.0
      %2945 = vmatpush2.msra.mxu0 0.0
      %2946 = vmatprep.subr.mxu0 0.0
      %2947 = vmatpush2.msra.mxu0 0.0
      %2948 = vmatprep.subr.mxu0 0.0
      %2949 = vmatpush2.msra.mxu0 0.0
      %2950 = vmatprep.subr.mxu0 0.0
      %2951 = vmatpush2.msra.mxu0 0.0
      %2952 = vmatprep.subr.mxu0 0.0
      %2953 = vmatpush2.msra.mxu0 0.0
      %2954 = vmatprep.subr.mxu0 0.0
      %2955 = vmatpush2.msra.mxu0 0.0
      %2956 = vmatprep.subr.mxu0 0.0
      %2957 = vmatpush2.msra.mxu0 0.0
      %2958 = vmatprep.subr.mxu0 0.0
      %2959 = vmatpush2.msra.mxu0 0.0
      %2960 = vmatprep.subr.mxu0 0.0
      %2961 = vmatpush2.msra.mxu0 0.0
      %2962 = vmatprep.subr.mxu0 0.0
      %2963 = vmatpush2.msra.mxu0 0.0
      %2964 = vmatprep.subr.mxu0 0.0
      %2965 = vmatpush2.msra.mxu0 0.0
      %2966 = vmatprep.subr.mxu0 0.0
      %2967 = vmatpush2.msra.mxu0 0.0
      %2968 = vmatprep.subr.mxu0 0.0
      %2969 = vmatpush2.msra.mxu0 0.0
      %2970 = vmatprep.mubr.f32.mxu0 0.0
      %v2971 = vand.u32 %v2404, 4294901760
      %2972 = vmatmul.mubr.f32.gmra.mxu0 %v2971
      %v2973 = vpop.f32.mrf.mxu0
      %v2974 = vadd.f32 %v2855, %v2973
      %v2975 = vpop.f32.mrf.mxu0
      %2976 = vdwg.mxu0
      %2977 = vmatprep.subr.mxu0 0.0
      %v2978 = vand.u32 %v2420, 4294901760
      %2979 = vmatpush1.msra.mxu0 %v2978
      %2980 = vmatprep.subr.mxu0 0.0
      %v2981 = vand.u32 %v2419, 4294901760
      %2982 = vmatpush1.msra.mxu0 %v2981
      %2983 = vmatprep.subr.mxu0 0.0
      %v2984 = vand.u32 %v2418, 4294901760
      %2985 = vmatpush1.msra.mxu0 %v2984
      %2986 = vmatprep.subr.mxu0 0.0
      %v2987 = vand.u32 %v2417, 4294901760
      %2988 = vmatpush1.msra.mxu0 %v2987
      %2989 = vmatprep.subr.mxu0 0.0
      %v2990 = vand.u32 %v2416, 4294901760
      %2991 = vmatpush1.msra.mxu0 %v2990
      %2992 = vmatprep.subr.mxu0 0.0
      %v2993 = vand.u32 %v2415, 4294901760
      %2994 = vmatpush1.msra.mxu0 %v2993
      %2995 = vmatprep.subr.mxu0 0.0
      %v2996 = vand.u32 %v2414, 4294901760
      %2997 = vmatpush1.msra.mxu0 %v2996
      %2998 = vmatprep.subr.mxu0 0.0
      %v2999 = vand.u32 %v2413, 4294901760
      %3000 = vmatpush1.msra.mxu0 %v2999
      %3001 = vmatprep.subr.mxu0 0.0
      %v3002 = vand.u32 %v2412, 4294901760
      %3003 = vmatpush1.msra.mxu0 %v3002
      %3004 = vmatprep.subr.mxu0 0.0
      %v3005 = vand.u32 %v2411, 4294901760
      %3006 = vmatpush1.msra.mxu0 %v3005
      %3007 = vmatprep.subr.mxu0 0.0
      %v3008 = vand.u32 %v2410, 4294901760
      %3009 = vmatpush1.msra.mxu0 %v3008
      %3010 = vmatprep.subr.mxu0 0.0
      %v3011 = vand.u32 %v2409, 4294901760
      %3012 = vmatpush1.msra.mxu0 %v3011
      %3013 = vmatprep.subr.mxu0 0.0
      %v3014 = vand.u32 %v2408, 4294901760
      %3015 = vmatpush1.msra.mxu0 %v3014
      %3016 = vmatprep.subr.mxu0 0.0
      %v3017 = vand.u32 %v2407, 4294901760
      %3018 = vmatpush1.msra.mxu0 %v3017
      %3019 = vmatprep.subr.mxu0 0.0
      %v3020 = vand.u32 %v2406, 4294901760
      %3021 = vmatpush1.msra.mxu0 %v3020
      %3022 = vmatprep.subr.mxu0 0.0
      %v3023 = vand.u32 %v2405, 4294901760
      %3024 = vmatpush1.msra.mxu0 %v3023
      %3025 = vmatprep.subr.mxu0 0.0
      %3026 = vmatpush2.msra.mxu0 0.0
      %3027 = vmatprep.subr.mxu0 0.0
      %3028 = vmatpush2.msra.mxu0 0.0
      %3029 = vmatprep.subr.mxu0 0.0
      %3030 = vmatpush2.msra.mxu0 0.0
      %3031 = vmatprep.subr.mxu0 0.0
      %3032 = vmatpush2.msra.mxu0 0.0
      %3033 = vmatprep.subr.mxu0 0.0
      %3034 = vmatpush2.msra.mxu0 0.0
      %3035 = vmatprep.subr.mxu0 0.0
      %3036 = vmatpush2.msra.mxu0 0.0
      %3037 = vmatprep.subr.mxu0 0.0
      %3038 = vmatpush2.msra.mxu0 0.0
      %3039 = vmatprep.subr.mxu0 0.0
      %3040 = vmatpush2.msra.mxu0 0.0
      %3041 = vmatprep.subr.mxu0 0.0
      %3042 = vmatpush2.msra.mxu0 0.0
      %3043 = vmatprep.subr.mxu0 0.0
      %3044 = vmatpush2.msra.mxu0 0.0
      %3045 = vmatprep.subr.mxu0 0.0
      %3046 = vmatpush2.msra.mxu0 0.0
      %3047 = vmatprep.subr.mxu0 0.0
      %3048 = vmatpush2.msra.mxu0 0.0
      %3049 = vmatprep.subr.mxu0 0.0
      %3050 = vmatpush2.msra.mxu0 0.0
      %3051 = vmatprep.subr.mxu0 0.0
      %3052 = vmatpush2.msra.mxu0 0.0
      %3053 = vmatprep.subr.mxu0 0.0
      %3054 = vmatpush2.msra.mxu0 0.0
      %3055 = vmatprep.subr.mxu0 0.0
      %3056 = vmatpush2.msra.mxu0 0.0
      %3057 = vmatprep.mubr.f32.mxu0 0.0
      %v3058 = vand.u32 %v2404, 4294901760
      %3059 = vmatmul.mubr.f32.gmra.mxu0 %v3058
      %v3060 = vpop.f32.mrf.mxu0
      %v3061 = vadd.f32 %v2974, %v3060
      %v3062 = vpop.f32.mrf.mxu0
      %3063 = vdwg.mxu0
      %vm3064 = vcmask 516096
      %3065 = vst.msk [vmem:[#allocation5] sm:$0x1] %vm3064, %v3061
    $region41: #{tpu_custom_call.1} parent=1 // pred_fallthru
      _
    // Predicated region
    $region42: #{tpu_custom_call.1} parent=1 // pred_check
      _
    $region43: #{tpu_custom_call.1} parent=1 // pred_check_branch
      %3067 = sbr.rel (0) target = $region45
    $region44: #{tpu_custom_call.1} parent=1 // pred_region
      %s3069 = ssub.s32 16, 16
      %3070 = vsyncadd [#allocation6], %s3069
      %s3072 = sshll.u32 [#allocation5], 4
      %s3073 = int_to_ptr.vmem [resolvable:$true] %s3072
      %3075 = dma.vmem_to_hbm [thread:$0]  %s3073, 16, %s6, [#allocation6]
    $region45: #{tpu_custom_call.1} parent=1 // pred_fallthru
      _
    // Predicated region
    $region46: #{tpu_custom_call.1} parent=1 // pred_check
      _
    $region47: #{tpu_custom_call.1} parent=1 // pred_check_branch
      %3077 = sbr.rel (0) target = $region49
    $region48: #{tpu_custom_call.1} parent=1 // pred_region
      %3078 = dma.done [#allocation6], 16
    $region49: #{tpu_custom_call.1} parent=1 // pred_fallthru
      _
    %3079 = vsyncpa [#allocation6], 1

</llo_original>
